<compile_context>
chip_gen: v5e
topology: v5e:2x2
jax: 0.10.0
libtpu: 0.0.40
codegen_flags: <defaults>
</compile_context>

<pallas_src>
import jax
import jax.numpy as jnp
from jax.experimental import pallas as pl
from jax.experimental.pallas import tpu as pltpu

B = 2              # batch
T_CONF = 8         # padded confidence-sequence length
HID = 128          # LSTM hidden size
LSTM_OUT = 64      # LSTM fc output size
ENC_DIM = 512      # conformer encoder feature dim
ENC_T = 151        # encoder time frames (in_features = 1152*151)
CONCAT_DIM = 2 * (LSTM_OUT + ENC_DIM)        # 1152
FLAT = CONCAT_DIM * ENC_T                    # 173952 = 1359 * 128
B2 = 2 * B                                   # fused left+right LSTM batch


def _predictor_config():
    """Per-generation tiling for the HBM-bound predictor layer-1 kernel."""
    try:
        kind = jax.devices()[0].device_kind.lower()
    except Exception:
        kind = ""
    if any(t in kind for t in ("v7", "tpu7", "7x")):
        # v7x: 2 TCs, 64 MiB VMEM each -> keep the parallel N split so each
        # core streams one half of W1; ~15 MB tiles stay inside per-core VMEM.
        return dict(tn=128, nj=2, nk=3, vmem=48 * 1024 * 1024, fuse_tail=False)
    if any(t in kind for t in ("v5e", "v5 lite", "v5lite",
                               "v6e", "v6 lite", "v6lite", "v6")):
        # single TC, 128 MiB VMEM: no N split, big K tiles (3 steps), tail fused.
        return dict(tn=256, nj=1, nk=3, vmem=80 * 1024 * 1024, fuse_tail=True)
    # unknown chip: conservative tiles that fit the default-ish 32 MiB budget.
    return dict(tn=256, nj=1, nk=9, vmem=32 * 1024 * 1024, fuse_tail=True)


_CFG = _predictor_config()
TN = _CFG["tn"]
NJ = _CFG["nj"]
NK = _CFG["nk"]
TK = FLAT // NK            # 57984 (NK=3) or 19328 (NK=9); both multiples of 128
_VMEM_LIMIT = _CFG["vmem"]
_FUSE_TAIL = _CFG["fuse_tail"]
assert TK * NK == FLAT and TK % 128 == 0


def _sig(z):
    return 1.0 / (1.0 + jnp.exp(-z))


# ----------------------------- LSTM kernel ----------------------------------
def lstm_kernel(x_ref, sel_ref,
                wih0_ref, b0_ref, whh0T_ref,
                w1stk_ref, b1_ref,
                wfcT_ref, bfc_ref,
                o_ref,
                xg_ref):
    # x_ref / sel_ref: (T, B2, 1) f32; sel is one-hot at t == len-1
    T = x_ref.shape[0]
    Bq = x_ref.shape[1]

    # Hoist the trailing-dim-1 input broadcast out of the serial time loop:
    # one vectorized op for all T steps, with b0 folded in.
    xg_ref[...] = (x_ref[...] * wih0_ref[...][None, :, :]
                   + b0_ref[...][None, :, :])           # (T, B2, 4*HID)

    zeros = jnp.zeros((Bq, HID), jnp.float32)

    def step(t, carry):
        h0, c0, h1, c1, last = carry

        # layer 0 (input size 1): input contribution precomputed in xg_ref
        g0 = xg_ref[t] + jnp.dot(h0, whh0T_ref[...],
                                 preferred_element_type=jnp.float32)
        i0 = _sig(g0[:, 0:HID])
        f0 = _sig(g0[:, HID:2 * HID])
        gg0 = jnp.tanh(g0[:, 2 * HID:3 * HID])
        o0 = _sig(g0[:, 3 * HID:4 * HID])
        c0 = f0 * c0 + i0 * gg0
        h0 = o0 * jnp.tanh(c0)

        # layer 1: merged input+recurrent matmul (one MXU push instead of two)
        g1 = (jnp.dot(jnp.concatenate([h0, h1], axis=1), w1stk_ref[...],
                      preferred_element_type=jnp.float32)
              + b1_ref[...])
        i1 = _sig(g1[:, 0:HID])
        f1 = _sig(g1[:, HID:2 * HID])
        gg1 = jnp.tanh(g1[:, 2 * HID:3 * HID])
        o1 = _sig(g1[:, 3 * HID:4 * HID])
        c1 = f1 * c1 + i1 * gg1
        h1 = o1 * jnp.tanh(c1)

        # capture hidden state at the last valid timestep (one-hot mask)
        last = last + sel_ref[t] * h1
        return (h0, c0, h1, c1, last)

    carry = jax.lax.fori_loop(0, T, step,
                              (zeros, zeros, zeros, zeros, zeros),
                              unroll=True)
    last = carry[4]

    # fc: Linear(128, 64) + ReLU
    o_ref[...] = jnp.maximum(
        jnp.dot(last, wfcT_ref[...], preferred_element_type=jnp.float32)
        + bfc_ref[...], 0.0)


def lstm_forward_fused(x_pad, lengths, p):
    # x_pad: (B2, T) f32 zero-padded; lengths: (B2,) int32
    Bq, T = x_pad.shape
    x_tb1 = jnp.transpose(x_pad)[:, :, None]                      # (T, B2, 1)
    t_idx = jnp.arange(T, dtype=jnp.int32)[:, None]               # (T, 1)
    sel = (t_idx == (lengths.astype(jnp.int32)[None, :] - 1))
    sel = sel.astype(jnp.float32)[:, :, None]                     # (T, B2, 1)
    vmem = pl.BlockSpec(memory_space=pltpu.MemorySpace.VMEM)
    return pl.pallas_call(
        lstm_kernel,
        out_shape=jax.ShapeDtypeStruct((Bq, LSTM_OUT), jnp.float32),
        in_specs=[vmem] * 9,
        out_specs=vmem,
        scratch_shapes=[pltpu.VMEM((T, Bq, 4 * HID), jnp.float32)],
    )(x_tb1, sel,
      p['wih0'], p['b0'], p['whh0T'],
      p['w1stk'], p['b1'],
      p['wfcT'], p['bfc'])


# ------------- Predictor: fused layer-1 + tail (single-TensorCore) -----------
def pred_fused_kernel(x_ref, w1_ref, b1_ref, w2_ref, b2_ref,
                      w3_ref, b3_ref, map_ref, o_ref, acc_ref):
    k = pl.program_id(0)

    @pl.when(k == 0)
    def _():
        acc_ref[...] = jnp.zeros_like(acc_ref)

    # bf16 x bf16 -> f32 accumulate on the MXU; W1 streamed from HBM in bf16.
    acc_ref[...] += jnp.dot(x_ref[...], w1_ref[...],
                            preferred_element_type=jnp.float32)

    @pl.when(k == pl.num_programs(0) - 1)
    def _():
        h1 = jnp.maximum(acc_ref[...] + b1_ref[...], 0.0)
        h2 = jnp.maximum(
            jnp.dot(h1, w2_ref[...], preferred_element_type=jnp.float32)
            + b2_ref[...], 0.0)
        h3 = (jnp.dot(h2, w3_ref[...], preferred_element_type=jnp.float32)
              + b3_ref[...])
        a = map_ref[...][:, 0:1]
        b = map_ref[...][:, 1:2]
        o_ref[...] = 1.0 / (1.0 + jnp.exp(a * h3 + b))       # MappingLayer


def predictor_fused(flat_bf16, p):
    full = lambda k: (0, 0)
    return pl.pallas_call(
        pred_fused_kernel,
        out_shape=jax.ShapeDtypeStruct((B, 1), jnp.float32),
        grid_spec=pltpu.PrefetchScalarGridSpec(
            num_scalar_prefetch=0,
            grid=(NK,),
            in_specs=[
                pl.BlockSpec((B, TK), lambda k: (0, k)),
                pl.BlockSpec((TK, 256), lambda k: (k, 0)),
                pl.BlockSpec((1, 256), full),
                pl.BlockSpec((256, 128), full),
                pl.BlockSpec((1, 128), full),
                pl.BlockSpec((128, 1), full),
                pl.BlockSpec((1, 1), full),
                pl.BlockSpec((1, 2), full),
            ],
            out_specs=pl.BlockSpec((B, 1), full),
            scratch_shapes=[pltpu.VMEM((B, 256), jnp.float32)],
        ),
        compiler_params=pltpu.CompilerParams(
            dimension_semantics=("arbitrary",),
            vmem_limit_bytes=_VMEM_LIMIT),
    )(flat_bf16, p['W1'], p['b1'], p['W2'], p['b2'],
      p['W3'], p['b3'], p['map_ab'])


# --------- Predictor: split layer-1 (megacore N split) + tiny tail -----------
def pred_l1_kernel(x_ref, w1_ref, b1_ref, o_ref, acc_ref):
    k = pl.program_id(1)

    @pl.when(k == 0)
    def _():
        acc_ref[...] = jnp.zeros_like(acc_ref)

    acc_ref[...] += jnp.dot(x_ref[...], w1_ref[...],
                            preferred_element_type=jnp.float32)

    @pl.when(k == pl.num_programs(1) - 1)
    def _():
        o_ref[...] = jnp.maximum(acc_ref[...] + b1_ref[...], 0.0)


def predictor_layer1_split(flat_bf16, p):
    return pl.pallas_call(
        pred_l1_kernel,
        out_shape=jax.ShapeDtypeStruct((B, 256), jnp.float32),
        grid_spec=pltpu.PrefetchScalarGridSpec(
            num_scalar_prefetch=0,
            grid=(NJ, NK),                       # (N-halves, K-blocks)
            in_specs=[
                pl.BlockSpec((B, TK), lambda j, k: (0, k)),
                pl.BlockSpec((TK, TN), lambda j, k: (k, j)),
                pl.BlockSpec((1, TN), lambda j, k: (0, j)),
            ],
            out_specs=pl.BlockSpec((B, TN), lambda j, k: (0, j)),
            scratch_shapes=[pltpu.VMEM((B, TN), jnp.float32)],
        ),
        compiler_params=pltpu.CompilerParams(
            dimension_semantics=("parallel", "arbitrary"),
            vmem_limit_bytes=_VMEM_LIMIT),
    )(flat_bf16, p['W1'], p['b1'])


def pred_tail_kernel(h1_ref, w2_ref, b2_ref, w3_ref, b3_ref, map_ref, o_ref):
    h2 = jnp.maximum(
        jnp.dot(h1_ref[...], w2_ref[...], preferred_element_type=jnp.float32)
        + b2_ref[...], 0.0)
    h3 = (jnp.dot(h2, w3_ref[...], preferred_element_type=jnp.float32)
          + b3_ref[...])
    a = map_ref[...][:, 0:1]
    b = map_ref[...][:, 1:2]
    o_ref[...] = 1.0 / (1.0 + jnp.exp(a * h3 + b))           # MappingLayer


def predictor_tail(h1, p):
    vmem = pl.BlockSpec(memory_space=pltpu.MemorySpace.VMEM)
    return pl.pallas_call(
        pred_tail_kernel,
        out_shape=jax.ShapeDtypeStruct((B, 1), jnp.float32),
        in_specs=[vmem] * 6,
        out_specs=vmem,
    )(h1, p['W2'], p['b2'], p['W3'], p['b3'], p['map_ab'])


def predictor(flat_bf16, p):
    if _FUSE_TAIL:
        return predictor_fused(flat_bf16, p)
    h1 = predictor_layer1_split(flat_bf16, p)
    return predictor_tail(h1, p)


# ------------------------------ JointModel glue ------------------------------
def joint_forward(conf_l, len_l, conf_r, len_r, enc_l, enc_r, params):
    # one fused LSTM call for both channels (halves launch/pipeline overhead)
    conf = jnp.concatenate([conf_l, conf_r], axis=0)               # (2B, T)
    lens = jnp.concatenate([len_l, len_r], axis=0)                 # (2B,)
    lstm_out = lstm_forward_fused(conf, lens, params['lstm'])      # (2B, 64)
    lstm_l, lstm_r = lstm_out[:B], lstm_out[B:]

    lstm_feat_l = jnp.broadcast_to(lstm_l[:, :, None], (B, LSTM_OUT, ENC_T))
    lstm_feat_r = jnp.broadcast_to(lstm_r[:, :, None], (B, LSTM_OUT, ENC_T))
    concat = jnp.concatenate([lstm_feat_l, enc_l, lstm_feat_r, enc_r], axis=1)
    # == torch .view(-1, 1152*151); bf16 activations halve the HBM stream.
    flat = concat.reshape(B, FLAT).astype(jnp.bfloat16)
    return predictor(flat, params['pred'])                         # (B, 1)


# -------------------------- deterministic parameters -------------------------
def init_params(key):
    ks = jax.random.split(key, 16)

    def rn(k, shape, scale):
        return jax.random.normal(k, shape, jnp.float32) * scale

    s_h = 1.0 / jnp.sqrt(float(HID))
    wih1T = rn(ks[3], (HID, 4 * HID), s_h)     # torch W_ih_l1.T
    whh1T = rn(ks[4], (HID, 4 * HID), s_h)     # torch W_hh_l1.T
    lstm = dict(
        wih0=rn(ks[0], (1, 4 * HID), s_h),     # torch W_ih_l0 (4H,1) -> (1,4H)
        whh0T=rn(ks[1], (HID, 4 * HID), s_h),  # torch W_hh_l0.T
        b0=rn(ks[2], (1, 4 * HID), s_h),       # b_ih_l0 + b_hh_l0
        wih1T=wih1T, whh1T=whh1T,
        w1stk=jnp.concatenate([wih1T, whh1T], axis=0),   # (2H,4H) merged layer-1
        b1=rn(ks[5], (1, 4 * HID), s_h),       # b_ih_l1 + b_hh_l1
        wfcT=rn(ks[6], (HID, LSTM_OUT), s_h),  # fc Linear(128,64) weight.T
        bfc=rn(ks[7], (1, LSTM_OUT), s_h),
    )
    pred = dict(
        # bf16 storage halves the ~178 MB HBM stream of the dominant matmul.
        W1=rn(ks[8], (FLAT, 256), 1.0 / jnp.sqrt(float(FLAT))).astype(jnp.bfloat16),
        b1=rn(ks[9], (1, 256), 0.01),
        W2=rn(ks[10], (256, 128), 1.0 / jnp.sqrt(256.0)),
        b2=rn(ks[11], (1, 128), 0.01),
        W3=rn(ks[12], (128, 1), 1.0 / jnp.sqrt(128.0)),
        b3=rn(ks[13], (1, 1), 0.01),
        map_ab=jnp.array([[0.5, 0.5]], jnp.float32),   # MappingLayer a, b
    )
    return dict(lstm=lstm, pred=pred)


# ------------------------------ pure-JAX reference ---------------------------
def lstm_ref(x, lens, p):
    n = x.shape[0]
    h0 = jnp.zeros((n, HID)); c0 = jnp.zeros((n, HID))
    h1 = jnp.zeros((n, HID)); c1 = jnp.zeros((n, HID))
    last = jnp.zeros((n, HID))
    for t in range(x.shape[1]):
        x_t = x[:, t:t + 1]
        g0 = x_t * p['wih0'] + h0 @ p['whh0T'] + p['b0']
        i0 = jax.nn.sigmoid(g0[:, :HID]); f0 = jax.nn.sigmoid(g0[:, HID:2 * HID])
        gg0 = jnp.tanh(g0[:, 2 * HID:3 * HID]); o0 = jax.nn.sigmoid(g0[:, 3 * HID:])
        c0 = f0 * c0 + i0 * gg0; h0 = o0 * jnp.tanh(c0)
        g1 = h0 @ p['wih1T'] + h1 @ p['whh1T'] + p['b1']
        i1 = jax.nn.sigmoid(g1[:, :HID]); f1 = jax.nn.sigmoid(g1[:, HID:2 * HID])
        gg1 = jnp.tanh(g1[:, 2 * HID:3 * HID]); o1 = jax.nn.sigmoid(g1[:, 3 * HID:])
        c1 = f1 * c1 + i1 * gg1; h1 = o1 * jnp.tanh(c1)
        last = jnp.where(lens.reshape(-1, 1) == (t + 1), h1, last)
    return jnp.maximum(last @ p['wfcT'] + p['bfc'], 0.0)


def joint_ref(conf_l, len_l, conf_r, len_r, enc_l, enc_r, params):
    lp, pp = params['lstm'], params['pred']
    ll = lstm_ref(conf_l, len_l, lp)
    lr = lstm_ref(conf_r, len_r, lp)
    fl = jnp.broadcast_to(ll[:, :, None], (B, LSTM_OUT, ENC_T))
    fr = jnp.broadcast_to(lr[:, :, None], (B, LSTM_OUT, ENC_T))
    cat = jnp.concatenate([fl, enc_l, fr, enc_r], axis=1).reshape(B, FLAT)
    # model the same bf16 storage / bf16 MXU operands with f32 accumulation
    catq = cat.astype(jnp.bfloat16).astype(jnp.float32)
    w1f = pp['W1'].astype(jnp.float32)
    h1 = jnp.maximum(catq @ w1f + pp['b1'], 0.0)
    h2 = jnp.maximum(h1 @ pp['W2'] + pp['b2'], 0.0)
    h3 = h2 @ pp['W3'] + pp['b3']
    a = pp['map_ab'][0, 0]; b_ = pp['map_ab'][0, 1]
    return 1.0 / (1.0 + jnp.exp(a * h3 + b_))


# ----------------------------------- main ------------------------------------
if __name__ == "__main__":
    key = jax.random.PRNGKey(0)
    kp, k1, k2, k3, k4 = jax.random.split(key, 5)
    params = init_params(kp)

    # synthetic "word confidence" sequences (ASR transcribe output stand-in)
    conf_l = jax.random.uniform(k1, (B, T_CONF), jnp.float32)
    conf_r = jax.random.uniform(k2, (B, T_CONF), jnp.float32)
    len_l = jnp.array([5, 8], jnp.int32)
    len_r = jnp.array([3, 7], jnp.int32)
    t_idx = jnp.arange(T_CONF)[None, :]
    conf_l = jnp.where(t_idx < len_l[:, None], conf_l, 0.0)   # torch pad_sequence zeros
    conf_r = jnp.where(t_idx < len_r[:, None], conf_r, 0.0)

    # synthetic conformer-encoder outputs (B, 512, 151)
    enc_l = jax.random.normal(k3, (B, ENC_DIM, ENC_T), jnp.float32) * 0.5
    enc_r = jax.random.normal(k4, (B, ENC_DIM, ENC_T), jnp.float32) * 0.5

    out = joint_forward(conf_l, len_l, conf_r, len_r, enc_l, enc_r, params)
    out = jax.block_until_ready(out)

    ref = joint_ref(conf_l, len_l, conf_r, len_r, enc_l, enc_r, params)
    assert out.shape == (B, 1)
    assert bool(jnp.all(jnp.isfinite(out)))
    err = float(jnp.max(jnp.abs(out - ref)))
    assert err < 5e-3, f"mismatch vs reference: {err}"
    print("KERNEL_OK")
</pallas_src>

<mosaic_0001>
module attributes {stable_mosaic.version = 11 : i64} {
  func.func @lstm_kernel(%arg0: memref<8x4x1xf32, #tpu.memory_space<vmem>>, %arg1: memref<8x4x1xf32, #tpu.memory_space<vmem>>, %arg2: memref<1x512xf32, #tpu.memory_space<vmem>>, %arg3: memref<1x512xf32, #tpu.memory_space<vmem>>, %arg4: memref<128x512xf32, #tpu.memory_space<vmem>>, %arg5: memref<256x512xf32, #tpu.memory_space<vmem>>, %arg6: memref<1x512xf32, #tpu.memory_space<vmem>>, %arg7: memref<128x64xf32, #tpu.memory_space<vmem>>, %arg8: memref<1x64xf32, #tpu.memory_space<vmem>>, %arg9: memref<4x64xf32, #tpu.memory_space<vmem>>, %arg10: memref<8x4x512xf32, #tpu.memory_space<vmem>>) attributes {dimension_semantics = [], scalar_prefetch = 0 : i64, scratch_operands = 1 : i64, tpu.core_type = #tpu.core_type<tc>} {
    %c0 = arith.constant 0 : index
    %c0_0 = arith.constant 0 : index
    %c0_1 = arith.constant 0 : index
    %0 = vector.load %arg0[%c0, %c0_0, %c0_1] : memref<8x4x1xf32, #tpu.memory_space<vmem>>, vector<8x4x1xf32>
    %c0_2 = arith.constant 0 : index
    %c0_3 = arith.constant 0 : index
    %1 = vector.load %arg2[%c0_2, %c0_3] : memref<1x512xf32, #tpu.memory_space<vmem>>, vector<1x512xf32>
    %2 = vector.shape_cast %1 : vector<1x512xf32> to vector<1x1x512xf32>
    %3 = vector.broadcast %0 : vector<8x4x1xf32> to vector<8x4x512xf32>
    %4 = vector.broadcast %2 : vector<1x1x512xf32> to vector<8x4x512xf32>
    %5 = arith.mulf %3, %4 : vector<8x4x512xf32>
    %c0_4 = arith.constant 0 : index
    %c0_5 = arith.constant 0 : index
    %6 = vector.load %arg3[%c0_4, %c0_5] : memref<1x512xf32, #tpu.memory_space<vmem>>, vector<1x512xf32>
    %7 = vector.shape_cast %6 : vector<1x512xf32> to vector<1x1x512xf32>
    %8 = vector.broadcast %7 : vector<1x1x512xf32> to vector<8x4x512xf32>
    %9 = arith.addf %5, %8 : vector<8x4x512xf32>
    %c0_6 = arith.constant 0 : index
    %c0_7 = arith.constant 0 : index
    %c0_8 = arith.constant 0 : index
    %10 = vector.load %arg10[%c0_6, %c0_7, %c0_8] : memref<8x4x512xf32, #tpu.memory_space<vmem>>, vector<8x4x512xf32>
    tpu.vector_store %arg10[%c0_6, %c0_7, %c0_8], %9 {strides = array<i32>} : memref<8x4x512xf32, #tpu.memory_space<vmem>>, vector<8x4x512xf32>,
    %cst = arith.constant 0.000000e+00 : f32
    %11 = vector.broadcast %cst : f32 to vector<4x128xf32>
    %c0_i32 = arith.constant 0 : i32
    %12 = arith.index_cast %c0_i32 : i32 to index
    %c0_9 = arith.constant 0 : index
    %c0_10 = arith.constant 0 : index
    %13 = vector.load %arg10[%12, %c0_9, %c0_10] : memref<8x4x512xf32, #tpu.memory_space<vmem>>, vector<1x4x512xf32>
    %14 = vector.shape_cast %13 : vector<1x4x512xf32> to vector<4x512xf32>
    %c0_11 = arith.constant 0 : index
    %c0_12 = arith.constant 0 : index
    %15 = vector.load %arg4[%c0_11, %c0_12] : memref<128x512xf32, #tpu.memory_space<vmem>>, vector<128x512xf32>
    %cst_13 = arith.constant dense<0.000000e+00> : vector<4x512xf32>
    %16 = tpu.matmul %11, %15, %cst_13 {dimension_numbers = #tpu.dot_dimension_numbers<[1], [0], [0], [1], [0, 0, 1, 1], [], []>} : vector<4x128xf32>, vector<128x512xf32>, vector<4x512xf32> -> vector<4x512xf32>
    %17 = arith.addf %14, %16 : vector<4x512xf32>
    %18 = vector.extract_strided_slice %17 {offsets = [0, 0], sizes = [4, 128], strides = [1, 1]} : vector<4x512xf32> to vector<4x128xf32>
    %cst_14 = arith.constant 0.000000e+00 : f32
    %19 = vector.broadcast %cst_14 : f32 to vector<4x128xf32>
    %20 = arith.subf %19, %18 : vector<4x128xf32>
    %21 = math.exp %20 : vector<4x128xf32>
    %cst_15 = arith.constant 1.000000e+00 : f32
    %22 = vector.broadcast %cst_15 : f32 to vector<4x128xf32>
    %23 = arith.addf %22, %21 : vector<4x128xf32>
    %cst_16 = arith.constant 1.000000e+00 : f32
    %24 = vector.broadcast %cst_16 : f32 to vector<4x128xf32>
    %25 = arith.divf %24, %23 : vector<4x128xf32>
    %26 = vector.extract_strided_slice %17 {offsets = [0, 128], sizes = [4, 128], strides = [1, 1]} : vector<4x512xf32> to vector<4x128xf32>
    %cst_17 = arith.constant 0.000000e+00 : f32
    %27 = vector.broadcast %cst_17 : f32 to vector<4x128xf32>
    %28 = arith.subf %27, %26 : vector<4x128xf32>
    %29 = math.exp %28 : vector<4x128xf32>
    %cst_18 = arith.constant 1.000000e+00 : f32
    %30 = vector.broadcast %cst_18 : f32 to vector<4x128xf32>
    %31 = arith.addf %30, %29 : vector<4x128xf32>
    %cst_19 = arith.constant 1.000000e+00 : f32
    %32 = vector.broadcast %cst_19 : f32 to vector<4x128xf32>
    %33 = arith.divf %32, %31 : vector<4x128xf32>
    %34 = vector.extract_strided_slice %17 {offsets = [0, 256], sizes = [4, 128], strides = [1, 1]} : vector<4x512xf32> to vector<4x128xf32>
    %35 = math.tanh %34 : vector<4x128xf32>
    %36 = vector.extract_strided_slice %17 {offsets = [0, 384], sizes = [4, 128], strides = [1, 1]} : vector<4x512xf32> to vector<4x128xf32>
    %cst_20 = arith.constant 0.000000e+00 : f32
    %37 = vector.broadcast %cst_20 : f32 to vector<4x128xf32>
    %38 = arith.subf %37, %36 : vector<4x128xf32>
    %39 = math.exp %38 : vector<4x128xf32>
    %cst_21 = arith.constant 1.000000e+00 : f32
    %40 = vector.broadcast %cst_21 : f32 to vector<4x128xf32>
    %41 = arith.addf %40, %39 : vector<4x128xf32>
    %cst_22 = arith.constant 1.000000e+00 : f32
    %42 = vector.broadcast %cst_22 : f32 to vector<4x128xf32>
    %43 = arith.divf %42, %41 : vector<4x128xf32>
    %44 = arith.mulf %33, %11 : vector<4x128xf32>
    %45 = arith.mulf %25, %35 : vector<4x128xf32>
    %46 = arith.addf %44, %45 : vector<4x128xf32>
    %47 = math.tanh %46 : vector<4x128xf32>
    %48 = arith.mulf %43, %47 : vector<4x128xf32>
    %49 = tpu.concatenate %48, %11 in 1 : vector<4x128xf32>, vector<4x128xf32> -> vector<4x256xf32>
    %c0_23 = arith.constant 0 : index
    %c0_24 = arith.constant 0 : index
    %50 = vector.load %arg5[%c0_23, %c0_24] : memref<256x512xf32, #tpu.memory_space<vmem>>, vector<256x512xf32>
    %cst_25 = arith.constant dense<0.000000e+00> : vector<4x512xf32>
    %51 = tpu.matmul %49, %50, %cst_25 {dimension_numbers = #tpu.dot_dimension_numbers<[1], [0], [0], [1], [0, 0, 1, 1], [], []>} : vector<4x256xf32>, vector<256x512xf32>, vector<4x512xf32> -> vector<4x512xf32>
    %c0_26 = arith.constant 0 : index
    %c0_27 = arith.constant 0 : index
    %52 = vector.load %arg6[%c0_26, %c0_27] : memref<1x512xf32, #tpu.memory_space<vmem>>, vector<1x512xf32>
    %53 = vector.broadcast %52 : vector<1x512xf32> to vector<4x512xf32>
    %54 = arith.addf %51, %53 : vector<4x512xf32>
    %55 = vector.extract_strided_slice %54 {offsets = [0, 0], sizes = [4, 128], strides = [1, 1]} : vector<4x512xf32> to vector<4x128xf32>
    %cst_28 = arith.constant 0.000000e+00 : f32
    %56 = vector.broadcast %cst_28 : f32 to vector<4x128xf32>
    %57 = arith.subf %56, %55 : vector<4x128xf32>
    %58 = math.exp %57 : vector<4x128xf32>
    %cst_29 = arith.constant 1.000000e+00 : f32
    %59 = vector.broadcast %cst_29 : f32 to vector<4x128xf32>
    %60 = arith.addf %59, %58 : vector<4x128xf32>
    %cst_30 = arith.constant 1.000000e+00 : f32
    %61 = vector.broadcast %cst_30 : f32 to vector<4x128xf32>
    %62 = arith.divf %61, %60 : vector<4x128xf32>
    %63 = vector.extract_strided_slice %54 {offsets = [0, 128], sizes = [4, 128], strides = [1, 1]} : vector<4x512xf32> to vector<4x128xf32>
    %cst_31 = arith.constant 0.000000e+00 : f32
    %64 = vector.broadcast %cst_31 : f32 to vector<4x128xf32>
    %65 = arith.subf %64, %63 : vector<4x128xf32>
    %66 = math.exp %65 : vector<4x128xf32>
    %cst_32 = arith.constant 1.000000e+00 : f32
    %67 = vector.broadcast %cst_32 : f32 to vector<4x128xf32>
    %68 = arith.addf %67, %66 : vector<4x128xf32>
    %cst_33 = arith.constant 1.000000e+00 : f32
    %69 = vector.broadcast %cst_33 : f32 to vector<4x128xf32>
    %70 = arith.divf %69, %68 : vector<4x128xf32>
    %71 = vector.extract_strided_slice %54 {offsets = [0, 256], sizes = [4, 128], strides = [1, 1]} : vector<4x512xf32> to vector<4x128xf32>
    %72 = math.tanh %71 : vector<4x128xf32>
    %73 = vector.extract_strided_slice %54 {offsets = [0, 384], sizes = [4, 128], strides = [1, 1]} : vector<4x512xf32> to vector<4x128xf32>
    %cst_34 = arith.constant 0.000000e+00 : f32
    %74 = vector.broadcast %cst_34 : f32 to vector<4x128xf32>
    %75 = arith.subf %74, %73 : vector<4x128xf32>
    %76 = math.exp %75 : vector<4x128xf32>
    %cst_35 = arith.constant 1.000000e+00 : f32
    %77 = vector.broadcast %cst_35 : f32 to vector<4x128xf32>
    %78 = arith.addf %77, %76 : vector<4x128xf32>
    %cst_36 = arith.constant 1.000000e+00 : f32
    %79 = vector.broadcast %cst_36 : f32 to vector<4x128xf32>
    %80 = arith.divf %79, %78 : vector<4x128xf32>
    %81 = arith.mulf %70, %11 : vector<4x128xf32>
    %82 = arith.mulf %62, %72 : vector<4x128xf32>
    %83 = arith.addf %81, %82 : vector<4x128xf32>
    %84 = math.tanh %83 : vector<4x128xf32>
    %85 = arith.mulf %80, %84 : vector<4x128xf32>
    %86 = arith.index_cast %c0_i32 : i32 to index
    %c0_37 = arith.constant 0 : index
    %c0_38 = arith.constant 0 : index
    %87 = vector.load %arg1[%86, %c0_37, %c0_38] : memref<8x4x1xf32, #tpu.memory_space<vmem>>, vector<1x4x1xf32>
    %88 = vector.shape_cast %87 : vector<1x4x1xf32> to vector<4x1xf32>
    %89 = vector.broadcast %88 : vector<4x1xf32> to vector<4x128xf32>
    %90 = arith.mulf %89, %85 : vector<4x128xf32>
    %91 = arith.addf %11, %90 : vector<4x128xf32>
    %c1_i32 = arith.constant 1 : i32
    %92 = arith.index_cast %c1_i32 : i32 to index
    %c0_39 = arith.constant 0 : index
    %c0_40 = arith.constant 0 : index
    %93 = vector.load %arg10[%92, %c0_39, %c0_40] : memref<8x4x512xf32, #tpu.memory_space<vmem>>, vector<1x4x512xf32>
    %94 = vector.shape_cast %93 : vector<1x4x512xf32> to vector<4x512xf32>
    %c0_41 = arith.constant 0 : index
    %c0_42 = arith.constant 0 : index
    %95 = vector.load %arg4[%c0_41, %c0_42] : memref<128x512xf32, #tpu.memory_space<vmem>>, vector<128x512xf32>
    %cst_43 = arith.constant dense<0.000000e+00> : vector<4x512xf32>
    %96 = tpu.matmul %48, %95, %cst_43 {dimension_numbers = #tpu.dot_dimension_numbers<[1], [0], [0], [1], [0, 0, 1, 1], [], []>} : vector<4x128xf32>, vector<128x512xf32>, vector<4x512xf32> -> vector<4x512xf32>
    %97 = arith.addf %94, %96 : vector<4x512xf32>
    %98 = vector.extract_strided_slice %97 {offsets = [0, 0], sizes = [4, 128], strides = [1, 1]} : vector<4x512xf32> to vector<4x128xf32>
    %cst_44 = arith.constant 0.000000e+00 : f32
    %99 = vector.broadcast %cst_44 : f32 to vector<4x128xf32>
    %100 = arith.subf %99, %98 : vector<4x128xf32>
    %101 = math.exp %100 : vector<4x128xf32>
    %cst_45 = arith.constant 1.000000e+00 : f32
    %102 = vector.broadcast %cst_45 : f32 to vector<4x128xf32>
    %103 = arith.addf %102, %101 : vector<4x128xf32>
    %cst_46 = arith.constant 1.000000e+00 : f32
    %104 = vector.broadcast %cst_46 : f32 to vector<4x128xf32>
    %105 = arith.divf %104, %103 : vector<4x128xf32>
    %106 = vector.extract_strided_slice %97 {offsets = [0, 128], sizes = [4, 128], strides = [1, 1]} : vector<4x512xf32> to vector<4x128xf32>
    %cst_47 = arith.constant 0.000000e+00 : f32
    %107 = vector.broadcast %cst_47 : f32 to vector<4x128xf32>
    %108 = arith.subf %107, %106 : vector<4x128xf32>
    %109 = math.exp %108 : vector<4x128xf32>
    %cst_48 = arith.constant 1.000000e+00 : f32
    %110 = vector.broadcast %cst_48 : f32 to vector<4x128xf32>
    %111 = arith.addf %110, %109 : vector<4x128xf32>
    %cst_49 = arith.constant 1.000000e+00 : f32
    %112 = vector.broadcast %cst_49 : f32 to vector<4x128xf32>
    %113 = arith.divf %112, %111 : vector<4x128xf32>
    %114 = vector.extract_strided_slice %97 {offsets = [0, 256], sizes = [4, 128], strides = [1, 1]} : vector<4x512xf32> to vector<4x128xf32>
    %115 = math.tanh %114 : vector<4x128xf32>
    %116 = vector.extract_strided_slice %97 {offsets = [0, 384], sizes = [4, 128], strides = [1, 1]} : vector<4x512xf32> to vector<4x128xf32>
    %cst_50 = arith.constant 0.000000e+00 : f32
    %117 = vector.broadcast %cst_50 : f32 to vector<4x128xf32>
    %118 = arith.subf %117, %116 : vector<4x128xf32>
    %119 = math.exp %118 : vector<4x128xf32>
    %cst_51 = arith.constant 1.000000e+00 : f32
    %120 = vector.broadcast %cst_51 : f32 to vector<4x128xf32>
    %121 = arith.addf %120, %119 : vector<4x128xf32>
    %cst_52 = arith.constant 1.000000e+00 : f32
    %122 = vector.broadcast %cst_52 : f32 to vector<4x128xf32>
    %123 = arith.divf %122, %121 : vector<4x128xf32>
    %124 = arith.mulf %113, %46 : vector<4x128xf32>
    %125 = arith.mulf %105, %115 : vector<4x128xf32>
    %126 = arith.addf %124, %125 : vector<4x128xf32>
    %127 = math.tanh %126 : vector<4x128xf32>
    %128 = arith.mulf %123, %127 : vector<4x128xf32>
    %129 = tpu.concatenate %128, %85 in 1 : vector<4x128xf32>, vector<4x128xf32> -> vector<4x256xf32>
    %c0_53 = arith.constant 0 : index
    %c0_54 = arith.constant 0 : index
    %130 = vector.load %arg5[%c0_53, %c0_54] : memref<256x512xf32, #tpu.memory_space<vmem>>, vector<256x512xf32>
    %cst_55 = arith.constant dense<0.000000e+00> : vector<4x512xf32>
    %131 = tpu.matmul %129, %130, %cst_55 {dimension_numbers = #tpu.dot_dimension_numbers<[1], [0], [0], [1], [0, 0, 1, 1], [], []>} : vector<4x256xf32>, vector<256x512xf32>, vector<4x512xf32> -> vector<4x512xf32>
    %c0_56 = arith.constant 0 : index
    %c0_57 = arith.constant 0 : index
    %132 = vector.load %arg6[%c0_56, %c0_57] : memref<1x512xf32, #tpu.memory_space<vmem>>, vector<1x512xf32>
    %133 = vector.broadcast %132 : vector<1x512xf32> to vector<4x512xf32>
    %134 = arith.addf %131, %133 : vector<4x512xf32>
    %135 = vector.extract_strided_slice %134 {offsets = [0, 0], sizes = [4, 128], strides = [1, 1]} : vector<4x512xf32> to vector<4x128xf32>
    %cst_58 = arith.constant 0.000000e+00 : f32
    %136 = vector.broadcast %cst_58 : f32 to vector<4x128xf32>
    %137 = arith.subf %136, %135 : vector<4x128xf32>
    %138 = math.exp %137 : vector<4x128xf32>
    %cst_59 = arith.constant 1.000000e+00 : f32
    %139 = vector.broadcast %cst_59 : f32 to vector<4x128xf32>
    %140 = arith.addf %139, %138 : vector<4x128xf32>
    %cst_60 = arith.constant 1.000000e+00 : f32
    %141 = vector.broadcast %cst_60 : f32 to vector<4x128xf32>
    %142 = arith.divf %141, %140 : vector<4x128xf32>
    %143 = vector.extract_strided_slice %134 {offsets = [0, 128], sizes = [4, 128], strides = [1, 1]} : vector<4x512xf32> to vector<4x128xf32>
    %cst_61 = arith.constant 0.000000e+00 : f32
    %144 = vector.broadcast %cst_61 : f32 to vector<4x128xf32>
    %145 = arith.subf %144, %143 : vector<4x128xf32>
    %146 = math.exp %145 : vector<4x128xf32>
    %cst_62 = arith.constant 1.000000e+00 : f32
    %147 = vector.broadcast %cst_62 : f32 to vector<4x128xf32>
    %148 = arith.addf %147, %146 : vector<4x128xf32>
    %cst_63 = arith.constant 1.000000e+00 : f32
    %149 = vector.broadcast %cst_63 : f32 to vector<4x128xf32>
    %150 = arith.divf %149, %148 : vector<4x128xf32>
    %151 = vector.extract_strided_slice %134 {offsets = [0, 256], sizes = [4, 128], strides = [1, 1]} : vector<4x512xf32> to vector<4x128xf32>
    %152 = math.tanh %151 : vector<4x128xf32>
    %153 = vector.extract_strided_slice %134 {offsets = [0, 384], sizes = [4, 128], strides = [1, 1]} : vector<4x512xf32> to vector<4x128xf32>
    %cst_64 = arith.constant 0.000000e+00 : f32
    %154 = vector.broadcast %cst_64 : f32 to vector<4x128xf32>
    %155 = arith.subf %154, %153 : vector<4x128xf32>
    %156 = math.exp %155 : vector<4x128xf32>
    %cst_65 = arith.constant 1.000000e+00 : f32
    %157 = vector.broadcast %cst_65 : f32 to vector<4x128xf32>
    %158 = arith.addf %157, %156 : vector<4x128xf32>
    %cst_66 = arith.constant 1.000000e+00 : f32
    %159 = vector.broadcast %cst_66 : f32 to vector<4x128xf32>
    %160 = arith.divf %159, %158 : vector<4x128xf32>
    %161 = arith.mulf %150, %83 : vector<4x128xf32>
    %162 = arith.mulf %142, %152 : vector<4x128xf32>
    %163 = arith.addf %161, %162 : vector<4x128xf32>
    %164 = math.tanh %163 : vector<4x128xf32>
    %165 = arith.mulf %160, %164 : vector<4x128xf32>
    %166 = arith.index_cast %c1_i32 : i32 to index
    %c0_67 = arith.constant 0 : index
    %c0_68 = arith.constant 0 : index
    %167 = vector.load %arg1[%166, %c0_67, %c0_68] : memref<8x4x1xf32, #tpu.memory_space<vmem>>, vector<1x4x1xf32>
    %168 = vector.shape_cast %167 : vector<1x4x1xf32> to vector<4x1xf32>
    %169 = vector.broadcast %168 : vector<4x1xf32> to vector<4x128xf32>
    %170 = arith.mulf %169, %165 : vector<4x128xf32>
    %171 = arith.addf %91, %170 : vector<4x128xf32>
    %c2_i32 = arith.constant 2 : i32
    %172 = arith.index_cast %c2_i32 : i32 to index
    %c0_69 = arith.constant 0 : index
    %c0_70 = arith.constant 0 : index
    %173 = vector.load %arg10[%172, %c0_69, %c0_70] : memref<8x4x512xf32, #tpu.memory_space<vmem>>, vector<1x4x512xf32>
    %174 = vector.shape_cast %173 : vector<1x4x512xf32> to vector<4x512xf32>
    %c0_71 = arith.constant 0 : index
    %c0_72 = arith.constant 0 : index
    %175 = vector.load %arg4[%c0_71, %c0_72] : memref<128x512xf32, #tpu.memory_space<vmem>>, vector<128x512xf32>
    %cst_73 = arith.constant dense<0.000000e+00> : vector<4x512xf32>
    %176 = tpu.matmul %128, %175, %cst_73 {dimension_numbers = #tpu.dot_dimension_numbers<[1], [0], [0], [1], [0, 0, 1, 1], [], []>} : vector<4x128xf32>, vector<128x512xf32>, vector<4x512xf32> -> vector<4x512xf32>
    %177 = arith.addf %174, %176 : vector<4x512xf32>
    %178 = vector.extract_strided_slice %177 {offsets = [0, 0], sizes = [4, 128], strides = [1, 1]} : vector<4x512xf32> to vector<4x128xf32>
    %cst_74 = arith.constant 0.000000e+00 : f32
    %179 = vector.broadcast %cst_74 : f32 to vector<4x128xf32>
    %180 = arith.subf %179, %178 : vector<4x128xf32>
    %181 = math.exp %180 : vector<4x128xf32>
    %cst_75 = arith.constant 1.000000e+00 : f32
    %182 = vector.broadcast %cst_75 : f32 to vector<4x128xf32>
    %183 = arith.addf %182, %181 : vector<4x128xf32>
    %cst_76 = arith.constant 1.000000e+00 : f32
    %184 = vector.broadcast %cst_76 : f32 to vector<4x128xf32>
    %185 = arith.divf %184, %183 : vector<4x128xf32>
    %186 = vector.extract_strided_slice %177 {offsets = [0, 128], sizes = [4, 128], strides = [1, 1]} : vector<4x512xf32> to vector<4x128xf32>
    %cst_77 = arith.constant 0.000000e+00 : f32
    %187 = vector.broadcast %cst_77 : f32 to vector<4x128xf32>
    %188 = arith.subf %187, %186 : vector<4x128xf32>
    %189 = math.exp %188 : vector<4x128xf32>
    %cst_78 = arith.constant 1.000000e+00 : f32
    %190 = vector.broadcast %cst_78 : f32 to vector<4x128xf32>
    %191 = arith.addf %190, %189 : vector<4x128xf32>
    %cst_79 = arith.constant 1.000000e+00 : f32
    %192 = vector.broadcast %cst_79 : f32 to vector<4x128xf32>
    %193 = arith.divf %192, %191 : vector<4x128xf32>
    %194 = vector.extract_strided_slice %177 {offsets = [0, 256], sizes = [4, 128], strides = [1, 1]} : vector<4x512xf32> to vector<4x128xf32>
    %195 = math.tanh %194 : vector<4x128xf32>
    %196 = vector.extract_strided_slice %177 {offsets = [0, 384], sizes = [4, 128], strides = [1, 1]} : vector<4x512xf32> to vector<4x128xf32>
    %cst_80 = arith.constant 0.000000e+00 : f32
    %197 = vector.broadcast %cst_80 : f32 to vector<4x128xf32>
    %198 = arith.subf %197, %196 : vector<4x128xf32>
    %199 = math.exp %198 : vector<4x128xf32>
    %cst_81 = arith.constant 1.000000e+00 : f32
    %200 = vector.broadcast %cst_81 : f32 to vector<4x128xf32>
    %201 = arith.addf %200, %199 : vector<4x128xf32>
    %cst_82 = arith.constant 1.000000e+00 : f32
    %202 = vector.broadcast %cst_82 : f32 to vector<4x128xf32>
    %203 = arith.divf %202, %201 : vector<4x128xf32>
    %204 = arith.mulf %193, %126 : vector<4x128xf32>
    %205 = arith.mulf %185, %195 : vector<4x128xf32>
    %206 = arith.addf %204, %205 : vector<4x128xf32>
    %207 = math.tanh %206 : vector<4x128xf32>
    %208 = arith.mulf %203, %207 : vector<4x128xf32>
    %209 = tpu.concatenate %208, %165 in 1 : vector<4x128xf32>, vector<4x128xf32> -> vector<4x256xf32>
    %c0_83 = arith.constant 0 : index
    %c0_84 = arith.constant 0 : index
    %210 = vector.load %arg5[%c0_83, %c0_84] : memref<256x512xf32, #tpu.memory_space<vmem>>, vector<256x512xf32>
    %cst_85 = arith.constant dense<0.000000e+00> : vector<4x512xf32>
    %211 = tpu.matmul %209, %210, %cst_85 {dimension_numbers = #tpu.dot_dimension_numbers<[1], [0], [0], [1], [0, 0, 1, 1], [], []>} : vector<4x256xf32>, vector<256x512xf32>, vector<4x512xf32> -> vector<4x512xf32>
    %c0_86 = arith.constant 0 : index
    %c0_87 = arith.constant 0 : index
    %212 = vector.load %arg6[%c0_86, %c0_87] : memref<1x512xf32, #tpu.memory_space<vmem>>, vector<1x512xf32>
    %213 = vector.broadcast %212 : vector<1x512xf32> to vector<4x512xf32>
    %214 = arith.addf %211, %213 : vector<4x512xf32>
    %215 = vector.extract_strided_slice %214 {offsets = [0, 0], sizes = [4, 128], strides = [1, 1]} : vector<4x512xf32> to vector<4x128xf32>
    %cst_88 = arith.constant 0.000000e+00 : f32
    %216 = vector.broadcast %cst_88 : f32 to vector<4x128xf32>
    %217 = arith.subf %216, %215 : vector<4x128xf32>
    %218 = math.exp %217 : vector<4x128xf32>
    %cst_89 = arith.constant 1.000000e+00 : f32
    %219 = vector.broadcast %cst_89 : f32 to vector<4x128xf32>
    %220 = arith.addf %219, %218 : vector<4x128xf32>
    %cst_90 = arith.constant 1.000000e+00 : f32
    %221 = vector.broadcast %cst_90 : f32 to vector<4x128xf32>
    %222 = arith.divf %221, %220 : vector<4x128xf32>
    %223 = vector.extract_strided_slice %214 {offsets = [0, 128], sizes = [4, 128], strides = [1, 1]} : vector<4x512xf32> to vector<4x128xf32>
    %cst_91 = arith.constant 0.000000e+00 : f32
    %224 = vector.broadcast %cst_91 : f32 to vector<4x128xf32>
    %225 = arith.subf %224, %223 : vector<4x128xf32>
    %226 = math.exp %225 : vector<4x128xf32>
    %cst_92 = arith.constant 1.000000e+00 : f32
    %227 = vector.broadcast %cst_92 : f32 to vector<4x128xf32>
    %228 = arith.addf %227, %226 : vector<4x128xf32>
    %cst_93 = arith.constant 1.000000e+00 : f32
    %229 = vector.broadcast %cst_93 : f32 to vector<4x128xf32>
    %230 = arith.divf %229, %228 : vector<4x128xf32>
    %231 = vector.extract_strided_slice %214 {offsets = [0, 256], sizes = [4, 128], strides = [1, 1]} : vector<4x512xf32> to vector<4x128xf32>
    %232 = math.tanh %231 : vector<4x128xf32>
    %233 = vector.extract_strided_slice %214 {offsets = [0, 384], sizes = [4, 128], strides = [1, 1]} : vector<4x512xf32> to vector<4x128xf32>
    %cst_94 = arith.constant 0.000000e+00 : f32
    %234 = vector.broadcast %cst_94 : f32 to vector<4x128xf32>
    %235 = arith.subf %234, %233 : vector<4x128xf32>
    %236 = math.exp %235 : vector<4x128xf32>
    %cst_95 = arith.constant 1.000000e+00 : f32
    %237 = vector.broadcast %cst_95 : f32 to vector<4x128xf32>
    %238 = arith.addf %237, %236 : vector<4x128xf32>
    %cst_96 = arith.constant 1.000000e+00 : f32
    %239 = vector.broadcast %cst_96 : f32 to vector<4x128xf32>
    %240 = arith.divf %239, %238 : vector<4x128xf32>
    %241 = arith.mulf %230, %163 : vector<4x128xf32>
    %242 = arith.mulf %222, %232 : vector<4x128xf32>
    %243 = arith.addf %241, %242 : vector<4x128xf32>
    %244 = math.tanh %243 : vector<4x128xf32>
    %245 = arith.mulf %240, %244 : vector<4x128xf32>
    %246 = arith.index_cast %c2_i32 : i32 to index
    %c0_97 = arith.constant 0 : index
    %c0_98 = arith.constant 0 : index
    %247 = vector.load %arg1[%246, %c0_97, %c0_98] : memref<8x4x1xf32, #tpu.memory_space<vmem>>, vector<1x4x1xf32>
    %248 = vector.shape_cast %247 : vector<1x4x1xf32> to vector<4x1xf32>
    %249 = vector.broadcast %248 : vector<4x1xf32> to vector<4x128xf32>
    %250 = arith.mulf %249, %245 : vector<4x128xf32>
    %251 = arith.addf %171, %250 : vector<4x128xf32>
    %c3_i32 = arith.constant 3 : i32
    %252 = arith.index_cast %c3_i32 : i32 to index
    %c0_99 = arith.constant 0 : index
    %c0_100 = arith.constant 0 : index
    %253 = vector.load %arg10[%252, %c0_99, %c0_100] : memref<8x4x512xf32, #tpu.memory_space<vmem>>, vector<1x4x512xf32>
    %254 = vector.shape_cast %253 : vector<1x4x512xf32> to vector<4x512xf32>
    %c0_101 = arith.constant 0 : index
    %c0_102 = arith.constant 0 : index
    %255 = vector.load %arg4[%c0_101, %c0_102] : memref<128x512xf32, #tpu.memory_space<vmem>>, vector<128x512xf32>
    %cst_103 = arith.constant dense<0.000000e+00> : vector<4x512xf32>
    %256 = tpu.matmul %208, %255, %cst_103 {dimension_numbers = #tpu.dot_dimension_numbers<[1], [0], [0], [1], [0, 0, 1, 1], [], []>} : vector<4x128xf32>, vector<128x512xf32>, vector<4x512xf32> -> vector<4x512xf32>
    %257 = arith.addf %254, %256 : vector<4x512xf32>
    %258 = vector.extract_strided_slice %257 {offsets = [0, 0], sizes = [4, 128], strides = [1, 1]} : vector<4x512xf32> to vector<4x128xf32>
    %cst_104 = arith.constant 0.000000e+00 : f32
    %259 = vector.broadcast %cst_104 : f32 to vector<4x128xf32>
    %260 = arith.subf %259, %258 : vector<4x128xf32>
    %261 = math.exp %260 : vector<4x128xf32>
    %cst_105 = arith.constant 1.000000e+00 : f32
    %262 = vector.broadcast %cst_105 : f32 to vector<4x128xf32>
    %263 = arith.addf %262, %261 : vector<4x128xf32>
    %cst_106 = arith.constant 1.000000e+00 : f32
    %264 = vector.broadcast %cst_106 : f32 to vector<4x128xf32>
    %265 = arith.divf %264, %263 : vector<4x128xf32>
    %266 = vector.extract_strided_slice %257 {offsets = [0, 128], sizes = [4, 128], strides = [1, 1]} : vector<4x512xf32> to vector<4x128xf32>
    %cst_107 = arith.constant 0.000000e+00 : f32
    %267 = vector.broadcast %cst_107 : f32 to vector<4x128xf32>
    %268 = arith.subf %267, %266 : vector<4x128xf32>
    %269 = math.exp %268 : vector<4x128xf32>
    %cst_108 = arith.constant 1.000000e+00 : f32
    %270 = vector.broadcast %cst_108 : f32 to vector<4x128xf32>
    %271 = arith.addf %270, %269 : vector<4x128xf32>
    %cst_109 = arith.constant 1.000000e+00 : f32
    %272 = vector.broadcast %cst_109 : f32 to vector<4x128xf32>
    %273 = arith.divf %272, %271 : vector<4x128xf32>
    %274 = vector.extract_strided_slice %257 {offsets = [0, 256], sizes = [4, 128], strides = [1, 1]} : vector<4x512xf32> to vector<4x128xf32>
    %275 = math.tanh %274 : vector<4x128xf32>
    %276 = vector.extract_strided_slice %257 {offsets = [0, 384], sizes = [4, 128], strides = [1, 1]} : vector<4x512xf32> to vector<4x128xf32>
    %cst_110 = arith.constant 0.000000e+00 : f32
    %277 = vector.broadcast %cst_110 : f32 to vector<4x128xf32>
    %278 = arith.subf %277, %276 : vector<4x128xf32>
    %279 = math.exp %278 : vector<4x128xf32>
    %cst_111 = arith.constant 1.000000e+00 : f32
    %280 = vector.broadcast %cst_111 : f32 to vector<4x128xf32>
    %281 = arith.addf %280, %279 : vector<4x128xf32>
    %cst_112 = arith.constant 1.000000e+00 : f32
    %282 = vector.broadcast %cst_112 : f32 to vector<4x128xf32>
    %283 = arith.divf %282, %281 : vector<4x128xf32>
    %284 = arith.mulf %273, %206 : vector<4x128xf32>
    %285 = arith.mulf %265, %275 : vector<4x128xf32>
    %286 = arith.addf %284, %285 : vector<4x128xf32>
    %287 = math.tanh %286 : vector<4x128xf32>
    %288 = arith.mulf %283, %287 : vector<4x128xf32>
    %289 = tpu.concatenate %288, %245 in 1 : vector<4x128xf32>, vector<4x128xf32> -> vector<4x256xf32>
    %c0_113 = arith.constant 0 : index
    %c0_114 = arith.constant 0 : index
    %290 = vector.load %arg5[%c0_113, %c0_114] : memref<256x512xf32, #tpu.memory_space<vmem>>, vector<256x512xf32>
    %cst_115 = arith.constant dense<0.000000e+00> : vector<4x512xf32>
    %291 = tpu.matmul %289, %290, %cst_115 {dimension_numbers = #tpu.dot_dimension_numbers<[1], [0], [0], [1], [0, 0, 1, 1], [], []>} : vector<4x256xf32>, vector<256x512xf32>, vector<4x512xf32> -> vector<4x512xf32>
    %c0_116 = arith.constant 0 : index
    %c0_117 = arith.constant 0 : index
    %292 = vector.load %arg6[%c0_116, %c0_117] : memref<1x512xf32, #tpu.memory_space<vmem>>, vector<1x512xf32>
    %293 = vector.broadcast %292 : vector<1x512xf32> to vector<4x512xf32>
    %294 = arith.addf %291, %293 : vector<4x512xf32>
    %295 = vector.extract_strided_slice %294 {offsets = [0, 0], sizes = [4, 128], strides = [1, 1]} : vector<4x512xf32> to vector<4x128xf32>
    %cst_118 = arith.constant 0.000000e+00 : f32
    %296 = vector.broadcast %cst_118 : f32 to vector<4x128xf32>
    %297 = arith.subf %296, %295 : vector<4x128xf32>
    %298 = math.exp %297 : vector<4x128xf32>
    %cst_119 = arith.constant 1.000000e+00 : f32
    %299 = vector.broadcast %cst_119 : f32 to vector<4x128xf32>
    %300 = arith.addf %299, %298 : vector<4x128xf32>
    %cst_120 = arith.constant 1.000000e+00 : f32
    %301 = vector.broadcast %cst_120 : f32 to vector<4x128xf32>
    %302 = arith.divf %301, %300 : vector<4x128xf32>
    %303 = vector.extract_strided_slice %294 {offsets = [0, 128], sizes = [4, 128], strides = [1, 1]} : vector<4x512xf32> to vector<4x128xf32>
    %cst_121 = arith.constant 0.000000e+00 : f32
    %304 = vector.broadcast %cst_121 : f32 to vector<4x128xf32>
    %305 = arith.subf %304, %303 : vector<4x128xf32>
    %306 = math.exp %305 : vector<4x128xf32>
    %cst_122 = arith.constant 1.000000e+00 : f32
    %307 = vector.broadcast %cst_122 : f32 to vector<4x128xf32>
    %308 = arith.addf %307, %306 : vector<4x128xf32>
    %cst_123 = arith.constant 1.000000e+00 : f32
    %309 = vector.broadcast %cst_123 : f32 to vector<4x128xf32>
    %310 = arith.divf %309, %308 : vector<4x128xf32>
    %311 = vector.extract_strided_slice %294 {offsets = [0, 256], sizes = [4, 128], strides = [1, 1]} : vector<4x512xf32> to vector<4x128xf32>
    %312 = math.tanh %311 : vector<4x128xf32>
    %313 = vector.extract_strided_slice %294 {offsets = [0, 384], sizes = [4, 128], strides = [1, 1]} : vector<4x512xf32> to vector<4x128xf32>
    %cst_124 = arith.constant 0.000000e+00 : f32
    %314 = vector.broadcast %cst_124 : f32 to vector<4x128xf32>
    %315 = arith.subf %314, %313 : vector<4x128xf32>
    %316 = math.exp %315 : vector<4x128xf32>
    %cst_125 = arith.constant 1.000000e+00 : f32
    %317 = vector.broadcast %cst_125 : f32 to vector<4x128xf32>
    %318 = arith.addf %317, %316 : vector<4x128xf32>
    %cst_126 = arith.constant 1.000000e+00 : f32
    %319 = vector.broadcast %cst_126 : f32 to vector<4x128xf32>
    %320 = arith.divf %319, %318 : vector<4x128xf32>
    %321 = arith.mulf %310, %243 : vector<4x128xf32>
    %322 = arith.mulf %302, %312 : vector<4x128xf32>
    %323 = arith.addf %321, %322 : vector<4x128xf32>
    %324 = math.tanh %323 : vector<4x128xf32>
    %325 = arith.mulf %320, %324 : vector<4x128xf32>
    %326 = arith.index_cast %c3_i32 : i32 to index
    %c0_127 = arith.constant 0 : index
    %c0_128 = arith.constant 0 : index
    %327 = vector.load %arg1[%326, %c0_127, %c0_128] : memref<8x4x1xf32, #tpu.memory_space<vmem>>, vector<1x4x1xf32>
    %328 = vector.shape_cast %327 : vector<1x4x1xf32> to vector<4x1xf32>
    %329 = vector.broadcast %328 : vector<4x1xf32> to vector<4x128xf32>
    %330 = arith.mulf %329, %325 : vector<4x128xf32>
    %331 = arith.addf %251, %330 : vector<4x128xf32>
    %c4_i32 = arith.constant 4 : i32
    %332 = arith.index_cast %c4_i32 : i32 to index
    %c0_129 = arith.constant 0 : index
    %c0_130 = arith.constant 0 : index
    %333 = vector.load %arg10[%332, %c0_129, %c0_130] : memref<8x4x512xf32, #tpu.memory_space<vmem>>, vector<1x4x512xf32>
    %334 = vector.shape_cast %333 : vector<1x4x512xf32> to vector<4x512xf32>
    %c0_131 = arith.constant 0 : index
    %c0_132 = arith.constant 0 : index
    %335 = vector.load %arg4[%c0_131, %c0_132] : memref<128x512xf32, #tpu.memory_space<vmem>>, vector<128x512xf32>
    %cst_133 = arith.constant dense<0.000000e+00> : vector<4x512xf32>
    %336 = tpu.matmul %288, %335, %cst_133 {dimension_numbers = #tpu.dot_dimension_numbers<[1], [0], [0], [1], [0, 0, 1, 1], [], []>} : vector<4x128xf32>, vector<128x512xf32>, vector<4x512xf32> -> vector<4x512xf32>
    %337 = arith.addf %334, %336 : vector<4x512xf32>
    %338 = vector.extract_strided_slice %337 {offsets = [0, 0], sizes = [4, 128], strides = [1, 1]} : vector<4x512xf32> to vector<4x128xf32>
    %cst_134 = arith.constant 0.000000e+00 : f32
    %339 = vector.broadcast %cst_134 : f32 to vector<4x128xf32>
    %340 = arith.subf %339, %338 : vector<4x128xf32>
    %341 = math.exp %340 : vector<4x128xf32>
    %cst_135 = arith.constant 1.000000e+00 : f32
    %342 = vector.broadcast %cst_135 : f32 to vector<4x128xf32>
    %343 = arith.addf %342, %341 : vector<4x128xf32>
    %cst_136 = arith.constant 1.000000e+00 : f32
    %344 = vector.broadcast %cst_136 : f32 to vector<4x128xf32>
    %345 = arith.divf %344, %343 : vector<4x128xf32>
    %346 = vector.extract_strided_slice %337 {offsets = [0, 128], sizes = [4, 128], strides = [1, 1]} : vector<4x512xf32> to vector<4x128xf32>
    %cst_137 = arith.constant 0.000000e+00 : f32
    %347 = vector.broadcast %cst_137 : f32 to vector<4x128xf32>
    %348 = arith.subf %347, %346 : vector<4x128xf32>
    %349 = math.exp %348 : vector<4x128xf32>
    %cst_138 = arith.constant 1.000000e+00 : f32
    %350 = vector.broadcast %cst_138 : f32 to vector<4x128xf32>
    %351 = arith.addf %350, %349 : vector<4x128xf32>
    %cst_139 = arith.constant 1.000000e+00 : f32
    %352 = vector.broadcast %cst_139 : f32 to vector<4x128xf32>
    %353 = arith.divf %352, %351 : vector<4x128xf32>
    %354 = vector.extract_strided_slice %337 {offsets = [0, 256], sizes = [4, 128], strides = [1, 1]} : vector<4x512xf32> to vector<4x128xf32>
    %355 = math.tanh %354 : vector<4x128xf32>
    %356 = vector.extract_strided_slice %337 {offsets = [0, 384], sizes = [4, 128], strides = [1, 1]} : vector<4x512xf32> to vector<4x128xf32>
    %cst_140 = arith.constant 0.000000e+00 : f32
    %357 = vector.broadcast %cst_140 : f32 to vector<4x128xf32>
    %358 = arith.subf %357, %356 : vector<4x128xf32>
    %359 = math.exp %358 : vector<4x128xf32>
    %cst_141 = arith.constant 1.000000e+00 : f32
    %360 = vector.broadcast %cst_141 : f32 to vector<4x128xf32>
    %361 = arith.addf %360, %359 : vector<4x128xf32>
    %cst_142 = arith.constant 1.000000e+00 : f32
    %362 = vector.broadcast %cst_142 : f32 to vector<4x128xf32>
    %363 = arith.divf %362, %361 : vector<4x128xf32>
    %364 = arith.mulf %353, %286 : vector<4x128xf32>
    %365 = arith.mulf %345, %355 : vector<4x128xf32>
    %366 = arith.addf %364, %365 : vector<4x128xf32>
    %367 = math.tanh %366 : vector<4x128xf32>
    %368 = arith.mulf %363, %367 : vector<4x128xf32>
    %369 = tpu.concatenate %368, %325 in 1 : vector<4x128xf32>, vector<4x128xf32> -> vector<4x256xf32>
    %c0_143 = arith.constant 0 : index
    %c0_144 = arith.constant 0 : index
    %370 = vector.load %arg5[%c0_143, %c0_144] : memref<256x512xf32, #tpu.memory_space<vmem>>, vector<256x512xf32>
    %cst_145 = arith.constant dense<0.000000e+00> : vector<4x512xf32>
    %371 = tpu.matmul %369, %370, %cst_145 {dimension_numbers = #tpu.dot_dimension_numbers<[1], [0], [0], [1], [0, 0, 1, 1], [], []>} : vector<4x256xf32>, vector<256x512xf32>, vector<4x512xf32> -> vector<4x512xf32>
    %c0_146 = arith.constant 0 : index
    %c0_147 = arith.constant 0 : index
    %372 = vector.load %arg6[%c0_146, %c0_147] : memref<1x512xf32, #tpu.memory_space<vmem>>, vector<1x512xf32>
    %373 = vector.broadcast %372 : vector<1x512xf32> to vector<4x512xf32>
    %374 = arith.addf %371, %373 : vector<4x512xf32>
    %375 = vector.extract_strided_slice %374 {offsets = [0, 0], sizes = [4, 128], strides = [1, 1]} : vector<4x512xf32> to vector<4x128xf32>
    %cst_148 = arith.constant 0.000000e+00 : f32
    %376 = vector.broadcast %cst_148 : f32 to vector<4x128xf32>
    %377 = arith.subf %376, %375 : vector<4x128xf32>
    %378 = math.exp %377 : vector<4x128xf32>
    %cst_149 = arith.constant 1.000000e+00 : f32
    %379 = vector.broadcast %cst_149 : f32 to vector<4x128xf32>
    %380 = arith.addf %379, %378 : vector<4x128xf32>
    %cst_150 = arith.constant 1.000000e+00 : f32
    %381 = vector.broadcast %cst_150 : f32 to vector<4x128xf32>
    %382 = arith.divf %381, %380 : vector<4x128xf32>
    %383 = vector.extract_strided_slice %374 {offsets = [0, 128], sizes = [4, 128], strides = [1, 1]} : vector<4x512xf32> to vector<4x128xf32>
    %cst_151 = arith.constant 0.000000e+00 : f32
    %384 = vector.broadcast %cst_151 : f32 to vector<4x128xf32>
    %385 = arith.subf %384, %383 : vector<4x128xf32>
    %386 = math.exp %385 : vector<4x128xf32>
    %cst_152 = arith.constant 1.000000e+00 : f32
    %387 = vector.broadcast %cst_152 : f32 to vector<4x128xf32>
    %388 = arith.addf %387, %386 : vector<4x128xf32>
    %cst_153 = arith.constant 1.000000e+00 : f32
    %389 = vector.broadcast %cst_153 : f32 to vector<4x128xf32>
    %390 = arith.divf %389, %388 : vector<4x128xf32>
    %391 = vector.extract_strided_slice %374 {offsets = [0, 256], sizes = [4, 128], strides = [1, 1]} : vector<4x512xf32> to vector<4x128xf32>
    %392 = math.tanh %391 : vector<4x128xf32>
    %393 = vector.extract_strided_slice %374 {offsets = [0, 384], sizes = [4, 128], strides = [1, 1]} : vector<4x512xf32> to vector<4x128xf32>
    %cst_154 = arith.constant 0.000000e+00 : f32
    %394 = vector.broadcast %cst_154 : f32 to vector<4x128xf32>
    %395 = arith.subf %394, %393 : vector<4x128xf32>
    %396 = math.exp %395 : vector<4x128xf32>
    %cst_155 = arith.constant 1.000000e+00 : f32
    %397 = vector.broadcast %cst_155 : f32 to vector<4x128xf32>
    %398 = arith.addf %397, %396 : vector<4x128xf32>
    %cst_156 = arith.constant 1.000000e+00 : f32
    %399 = vector.broadcast %cst_156 : f32 to vector<4x128xf32>
    %400 = arith.divf %399, %398 : vector<4x128xf32>
    %401 = arith.mulf %390, %323 : vector<4x128xf32>
    %402 = arith.mulf %382, %392 : vector<4x128xf32>
    %403 = arith.addf %401, %402 : vector<4x128xf32>
    %404 = math.tanh %403 : vector<4x128xf32>
    %405 = arith.mulf %400, %404 : vector<4x128xf32>
    %406 = arith.index_cast %c4_i32 : i32 to index
    %c0_157 = arith.constant 0 : index
    %c0_158 = arith.constant 0 : index
    %407 = vector.load %arg1[%406, %c0_157, %c0_158] : memref<8x4x1xf32, #tpu.memory_space<vmem>>, vector<1x4x1xf32>
    %408 = vector.shape_cast %407 : vector<1x4x1xf32> to vector<4x1xf32>
    %409 = vector.broadcast %408 : vector<4x1xf32> to vector<4x128xf32>
    %410 = arith.mulf %409, %405 : vector<4x128xf32>
    %411 = arith.addf %331, %410 : vector<4x128xf32>
    %c5_i32 = arith.constant 5 : i32
    %412 = arith.index_cast %c5_i32 : i32 to index
    %c0_159 = arith.constant 0 : index
    %c0_160 = arith.constant 0 : index
    %413 = vector.load %arg10[%412, %c0_159, %c0_160] : memref<8x4x512xf32, #tpu.memory_space<vmem>>, vector<1x4x512xf32>
    %414 = vector.shape_cast %413 : vector<1x4x512xf32> to vector<4x512xf32>
    %c0_161 = arith.constant 0 : index
    %c0_162 = arith.constant 0 : index
    %415 = vector.load %arg4[%c0_161, %c0_162] : memref<128x512xf32, #tpu.memory_space<vmem>>, vector<128x512xf32>
    %cst_163 = arith.constant dense<0.000000e+00> : vector<4x512xf32>
    %416 = tpu.matmul %368, %415, %cst_163 {dimension_numbers = #tpu.dot_dimension_numbers<[1], [0], [0], [1], [0, 0, 1, 1], [], []>} : vector<4x128xf32>, vector<128x512xf32>, vector<4x512xf32> -> vector<4x512xf32>
    %417 = arith.addf %414, %416 : vector<4x512xf32>
    %418 = vector.extract_strided_slice %417 {offsets = [0, 0], sizes = [4, 128], strides = [1, 1]} : vector<4x512xf32> to vector<4x128xf32>
    %cst_164 = arith.constant 0.000000e+00 : f32
    %419 = vector.broadcast %cst_164 : f32 to vector<4x128xf32>
    %420 = arith.subf %419, %418 : vector<4x128xf32>
    %421 = math.exp %420 : vector<4x128xf32>
    %cst_165 = arith.constant 1.000000e+00 : f32
    %422 = vector.broadcast %cst_165 : f32 to vector<4x128xf32>
    %423 = arith.addf %422, %421 : vector<4x128xf32>
    %cst_166 = arith.constant 1.000000e+00 : f32
    %424 = vector.broadcast %cst_166 : f32 to vector<4x128xf32>
    %425 = arith.divf %424, %423 : vector<4x128xf32>
    %426 = vector.extract_strided_slice %417 {offsets = [0, 128], sizes = [4, 128], strides = [1, 1]} : vector<4x512xf32> to vector<4x128xf32>
    %cst_167 = arith.constant 0.000000e+00 : f32
    %427 = vector.broadcast %cst_167 : f32 to vector<4x128xf32>
    %428 = arith.subf %427, %426 : vector<4x128xf32>
    %429 = math.exp %428 : vector<4x128xf32>
    %cst_168 = arith.constant 1.000000e+00 : f32
    %430 = vector.broadcast %cst_168 : f32 to vector<4x128xf32>
    %431 = arith.addf %430, %429 : vector<4x128xf32>
    %cst_169 = arith.constant 1.000000e+00 : f32
    %432 = vector.broadcast %cst_169 : f32 to vector<4x128xf32>
    %433 = arith.divf %432, %431 : vector<4x128xf32>
    %434 = vector.extract_strided_slice %417 {offsets = [0, 256], sizes = [4, 128], strides = [1, 1]} : vector<4x512xf32> to vector<4x128xf32>
    %435 = math.tanh %434 : vector<4x128xf32>
    %436 = vector.extract_strided_slice %417 {offsets = [0, 384], sizes = [4, 128], strides = [1, 1]} : vector<4x512xf32> to vector<4x128xf32>
    %cst_170 = arith.constant 0.000000e+00 : f32
    %437 = vector.broadcast %cst_170 : f32 to vector<4x128xf32>
    %438 = arith.subf %437, %436 : vector<4x128xf32>
    %439 = math.exp %438 : vector<4x128xf32>
    %cst_171 = arith.constant 1.000000e+00 : f32
    %440 = vector.broadcast %cst_171 : f32 to vector<4x128xf32>
    %441 = arith.addf %440, %439 : vector<4x128xf32>
    %cst_172 = arith.constant 1.000000e+00 : f32
    %442 = vector.broadcast %cst_172 : f32 to vector<4x128xf32>
    %443 = arith.divf %442, %441 : vector<4x128xf32>
    %444 = arith.mulf %433, %366 : vector<4x128xf32>
    %445 = arith.mulf %425, %435 : vector<4x128xf32>
    %446 = arith.addf %444, %445 : vector<4x128xf32>
    %447 = math.tanh %446 : vector<4x128xf32>
    %448 = arith.mulf %443, %447 : vector<4x128xf32>
    %449 = tpu.concatenate %448, %405 in 1 : vector<4x128xf32>, vector<4x128xf32> -> vector<4x256xf32>
    %c0_173 = arith.constant 0 : index
    %c0_174 = arith.constant 0 : index
    %450 = vector.load %arg5[%c0_173, %c0_174] : memref<256x512xf32, #tpu.memory_space<vmem>>, vector<256x512xf32>
    %cst_175 = arith.constant dense<0.000000e+00> : vector<4x512xf32>
    %451 = tpu.matmul %449, %450, %cst_175 {dimension_numbers = #tpu.dot_dimension_numbers<[1], [0], [0], [1], [0, 0, 1, 1], [], []>} : vector<4x256xf32>, vector<256x512xf32>, vector<4x512xf32> -> vector<4x512xf32>
    %c0_176 = arith.constant 0 : index
    %c0_177 = arith.constant 0 : index
    %452 = vector.load %arg6[%c0_176, %c0_177] : memref<1x512xf32, #tpu.memory_space<vmem>>, vector<1x512xf32>
    %453 = vector.broadcast %452 : vector<1x512xf32> to vector<4x512xf32>
    %454 = arith.addf %451, %453 : vector<4x512xf32>
    %455 = vector.extract_strided_slice %454 {offsets = [0, 0], sizes = [4, 128], strides = [1, 1]} : vector<4x512xf32> to vector<4x128xf32>
    %cst_178 = arith.constant 0.000000e+00 : f32
    %456 = vector.broadcast %cst_178 : f32 to vector<4x128xf32>
    %457 = arith.subf %456, %455 : vector<4x128xf32>
    %458 = math.exp %457 : vector<4x128xf32>
    %cst_179 = arith.constant 1.000000e+00 : f32
    %459 = vector.broadcast %cst_179 : f32 to vector<4x128xf32>
    %460 = arith.addf %459, %458 : vector<4x128xf32>
    %cst_180 = arith.constant 1.000000e+00 : f32
    %461 = vector.broadcast %cst_180 : f32 to vector<4x128xf32>
    %462 = arith.divf %461, %460 : vector<4x128xf32>
    %463 = vector.extract_strided_slice %454 {offsets = [0, 128], sizes = [4, 128], strides = [1, 1]} : vector<4x512xf32> to vector<4x128xf32>
    %cst_181 = arith.constant 0.000000e+00 : f32
    %464 = vector.broadcast %cst_181 : f32 to vector<4x128xf32>
    %465 = arith.subf %464, %463 : vector<4x128xf32>
    %466 = math.exp %465 : vector<4x128xf32>
    %cst_182 = arith.constant 1.000000e+00 : f32
    %467 = vector.broadcast %cst_182 : f32 to vector<4x128xf32>
    %468 = arith.addf %467, %466 : vector<4x128xf32>
    %cst_183 = arith.constant 1.000000e+00 : f32
    %469 = vector.broadcast %cst_183 : f32 to vector<4x128xf32>
    %470 = arith.divf %469, %468 : vector<4x128xf32>
    %471 = vector.extract_strided_slice %454 {offsets = [0, 256], sizes = [4, 128], strides = [1, 1]} : vector<4x512xf32> to vector<4x128xf32>
    %472 = math.tanh %471 : vector<4x128xf32>
    %473 = vector.extract_strided_slice %454 {offsets = [0, 384], sizes = [4, 128], strides = [1, 1]} : vector<4x512xf32> to vector<4x128xf32>
    %cst_184 = arith.constant 0.000000e+00 : f32
    %474 = vector.broadcast %cst_184 : f32 to vector<4x128xf32>
    %475 = arith.subf %474, %473 : vector<4x128xf32>
    %476 = math.exp %475 : vector<4x128xf32>
    %cst_185 = arith.constant 1.000000e+00 : f32
    %477 = vector.broadcast %cst_185 : f32 to vector<4x128xf32>
    %478 = arith.addf %477, %476 : vector<4x128xf32>
    %cst_186 = arith.constant 1.000000e+00 : f32
    %479 = vector.broadcast %cst_186 : f32 to vector<4x128xf32>
    %480 = arith.divf %479, %478 : vector<4x128xf32>
    %481 = arith.mulf %470, %403 : vector<4x128xf32>
    %482 = arith.mulf %462, %472 : vector<4x128xf32>
    %483 = arith.addf %481, %482 : vector<4x128xf32>
    %484 = math.tanh %483 : vector<4x128xf32>
    %485 = arith.mulf %480, %484 : vector<4x128xf32>
    %486 = arith.index_cast %c5_i32 : i32 to index
    %c0_187 = arith.constant 0 : index
    %c0_188 = arith.constant 0 : index
    %487 = vector.load %arg1[%486, %c0_187, %c0_188] : memref<8x4x1xf32, #tpu.memory_space<vmem>>, vector<1x4x1xf32>
    %488 = vector.shape_cast %487 : vector<1x4x1xf32> to vector<4x1xf32>
    %489 = vector.broadcast %488 : vector<4x1xf32> to vector<4x128xf32>
    %490 = arith.mulf %489, %485 : vector<4x128xf32>
    %491 = arith.addf %411, %490 : vector<4x128xf32>
    %c6_i32 = arith.constant 6 : i32
    %492 = arith.index_cast %c6_i32 : i32 to index
    %c0_189 = arith.constant 0 : index
    %c0_190 = arith.constant 0 : index
    %493 = vector.load %arg10[%492, %c0_189, %c0_190] : memref<8x4x512xf32, #tpu.memory_space<vmem>>, vector<1x4x512xf32>
    %494 = vector.shape_cast %493 : vector<1x4x512xf32> to vector<4x512xf32>
    %c0_191 = arith.constant 0 : index
    %c0_192 = arith.constant 0 : index
    %495 = vector.load %arg4[%c0_191, %c0_192] : memref<128x512xf32, #tpu.memory_space<vmem>>, vector<128x512xf32>
    %cst_193 = arith.constant dense<0.000000e+00> : vector<4x512xf32>
    %496 = tpu.matmul %448, %495, %cst_193 {dimension_numbers = #tpu.dot_dimension_numbers<[1], [0], [0], [1], [0, 0, 1, 1], [], []>} : vector<4x128xf32>, vector<128x512xf32>, vector<4x512xf32> -> vector<4x512xf32>
    %497 = arith.addf %494, %496 : vector<4x512xf32>
    %498 = vector.extract_strided_slice %497 {offsets = [0, 0], sizes = [4, 128], strides = [1, 1]} : vector<4x512xf32> to vector<4x128xf32>
    %cst_194 = arith.constant 0.000000e+00 : f32
    %499 = vector.broadcast %cst_194 : f32 to vector<4x128xf32>
    %500 = arith.subf %499, %498 : vector<4x128xf32>
    %501 = math.exp %500 : vector<4x128xf32>
    %cst_195 = arith.constant 1.000000e+00 : f32
    %502 = vector.broadcast %cst_195 : f32 to vector<4x128xf32>
    %503 = arith.addf %502, %501 : vector<4x128xf32>
    %cst_196 = arith.constant 1.000000e+00 : f32
    %504 = vector.broadcast %cst_196 : f32 to vector<4x128xf32>
    %505 = arith.divf %504, %503 : vector<4x128xf32>
    %506 = vector.extract_strided_slice %497 {offsets = [0, 128], sizes = [4, 128], strides = [1, 1]} : vector<4x512xf32> to vector<4x128xf32>
    %cst_197 = arith.constant 0.000000e+00 : f32
    %507 = vector.broadcast %cst_197 : f32 to vector<4x128xf32>
    %508 = arith.subf %507, %506 : vector<4x128xf32>
    %509 = math.exp %508 : vector<4x128xf32>
    %cst_198 = arith.constant 1.000000e+00 : f32
    %510 = vector.broadcast %cst_198 : f32 to vector<4x128xf32>
    %511 = arith.addf %510, %509 : vector<4x128xf32>
    %cst_199 = arith.constant 1.000000e+00 : f32
    %512 = vector.broadcast %cst_199 : f32 to vector<4x128xf32>
    %513 = arith.divf %512, %511 : vector<4x128xf32>
    %514 = vector.extract_strided_slice %497 {offsets = [0, 256], sizes = [4, 128], strides = [1, 1]} : vector<4x512xf32> to vector<4x128xf32>
    %515 = math.tanh %514 : vector<4x128xf32>
    %516 = vector.extract_strided_slice %497 {offsets = [0, 384], sizes = [4, 128], strides = [1, 1]} : vector<4x512xf32> to vector<4x128xf32>
    %cst_200 = arith.constant 0.000000e+00 : f32
    %517 = vector.broadcast %cst_200 : f32 to vector<4x128xf32>
    %518 = arith.subf %517, %516 : vector<4x128xf32>
    %519 = math.exp %518 : vector<4x128xf32>
    %cst_201 = arith.constant 1.000000e+00 : f32
    %520 = vector.broadcast %cst_201 : f32 to vector<4x128xf32>
    %521 = arith.addf %520, %519 : vector<4x128xf32>
    %cst_202 = arith.constant 1.000000e+00 : f32
    %522 = vector.broadcast %cst_202 : f32 to vector<4x128xf32>
    %523 = arith.divf %522, %521 : vector<4x128xf32>
    %524 = arith.mulf %513, %446 : vector<4x128xf32>
    %525 = arith.mulf %505, %515 : vector<4x128xf32>
    %526 = arith.addf %524, %525 : vector<4x128xf32>
    %527 = math.tanh %526 : vector<4x128xf32>
    %528 = arith.mulf %523, %527 : vector<4x128xf32>
    %529 = tpu.concatenate %528, %485 in 1 : vector<4x128xf32>, vector<4x128xf32> -> vector<4x256xf32>
    %c0_203 = arith.constant 0 : index
    %c0_204 = arith.constant 0 : index
    %530 = vector.load %arg5[%c0_203, %c0_204] : memref<256x512xf32, #tpu.memory_space<vmem>>, vector<256x512xf32>
    %cst_205 = arith.constant dense<0.000000e+00> : vector<4x512xf32>
    %531 = tpu.matmul %529, %530, %cst_205 {dimension_numbers = #tpu.dot_dimension_numbers<[1], [0], [0], [1], [0, 0, 1, 1], [], []>} : vector<4x256xf32>, vector<256x512xf32>, vector<4x512xf32> -> vector<4x512xf32>
    %c0_206 = arith.constant 0 : index
    %c0_207 = arith.constant 0 : index
    %532 = vector.load %arg6[%c0_206, %c0_207] : memref<1x512xf32, #tpu.memory_space<vmem>>, vector<1x512xf32>
    %533 = vector.broadcast %532 : vector<1x512xf32> to vector<4x512xf32>
    %534 = arith.addf %531, %533 : vector<4x512xf32>
    %535 = vector.extract_strided_slice %534 {offsets = [0, 0], sizes = [4, 128], strides = [1, 1]} : vector<4x512xf32> to vector<4x128xf32>
    %cst_208 = arith.constant 0.000000e+00 : f32
    %536 = vector.broadcast %cst_208 : f32 to vector<4x128xf32>
    %537 = arith.subf %536, %535 : vector<4x128xf32>
    %538 = math.exp %537 : vector<4x128xf32>
    %cst_209 = arith.constant 1.000000e+00 : f32
    %539 = vector.broadcast %cst_209 : f32 to vector<4x128xf32>
    %540 = arith.addf %539, %538 : vector<4x128xf32>
    %cst_210 = arith.constant 1.000000e+00 : f32
    %541 = vector.broadcast %cst_210 : f32 to vector<4x128xf32>
    %542 = arith.divf %541, %540 : vector<4x128xf32>
    %543 = vector.extract_strided_slice %534 {offsets = [0, 128], sizes = [4, 128], strides = [1, 1]} : vector<4x512xf32> to vector<4x128xf32>
    %cst_211 = arith.constant 0.000000e+00 : f32
    %544 = vector.broadcast %cst_211 : f32 to vector<4x128xf32>
    %545 = arith.subf %544, %543 : vector<4x128xf32>
    %546 = math.exp %545 : vector<4x128xf32>
    %cst_212 = arith.constant 1.000000e+00 : f32
    %547 = vector.broadcast %cst_212 : f32 to vector<4x128xf32>
    %548 = arith.addf %547, %546 : vector<4x128xf32>
    %cst_213 = arith.constant 1.000000e+00 : f32
    %549 = vector.broadcast %cst_213 : f32 to vector<4x128xf32>
    %550 = arith.divf %549, %548 : vector<4x128xf32>
    %551 = vector.extract_strided_slice %534 {offsets = [0, 256], sizes = [4, 128], strides = [1, 1]} : vector<4x512xf32> to vector<4x128xf32>
    %552 = math.tanh %551 : vector<4x128xf32>
    %553 = vector.extract_strided_slice %534 {offsets = [0, 384], sizes = [4, 128], strides = [1, 1]} : vector<4x512xf32> to vector<4x128xf32>
    %cst_214 = arith.constant 0.000000e+00 : f32
    %554 = vector.broadcast %cst_214 : f32 to vector<4x128xf32>
    %555 = arith.subf %554, %553 : vector<4x128xf32>
    %556 = math.exp %555 : vector<4x128xf32>
    %cst_215 = arith.constant 1.000000e+00 : f32
    %557 = vector.broadcast %cst_215 : f32 to vector<4x128xf32>
    %558 = arith.addf %557, %556 : vector<4x128xf32>
    %cst_216 = arith.constant 1.000000e+00 : f32
    %559 = vector.broadcast %cst_216 : f32 to vector<4x128xf32>
    %560 = arith.divf %559, %558 : vector<4x128xf32>
    %561 = arith.mulf %550, %483 : vector<4x128xf32>
    %562 = arith.mulf %542, %552 : vector<4x128xf32>
    %563 = arith.addf %561, %562 : vector<4x128xf32>
    %564 = math.tanh %563 : vector<4x128xf32>
    %565 = arith.mulf %560, %564 : vector<4x128xf32>
    %566 = arith.index_cast %c6_i32 : i32 to index
    %c0_217 = arith.constant 0 : index
    %c0_218 = arith.constant 0 : index
    %567 = vector.load %arg1[%566, %c0_217, %c0_218] : memref<8x4x1xf32, #tpu.memory_space<vmem>>, vector<1x4x1xf32>
    %568 = vector.shape_cast %567 : vector<1x4x1xf32> to vector<4x1xf32>
    %569 = vector.broadcast %568 : vector<4x1xf32> to vector<4x128xf32>
    %570 = arith.mulf %569, %565 : vector<4x128xf32>
    %571 = arith.addf %491, %570 : vector<4x128xf32>
    %c7_i32 = arith.constant 7 : i32
    %572 = arith.index_cast %c7_i32 : i32 to index
    %c0_219 = arith.constant 0 : index
    %c0_220 = arith.constant 0 : index
    %573 = vector.load %arg10[%572, %c0_219, %c0_220] : memref<8x4x512xf32, #tpu.memory_space<vmem>>, vector<1x4x512xf32>
    %574 = vector.shape_cast %573 : vector<1x4x512xf32> to vector<4x512xf32>
    %c0_221 = arith.constant 0 : index
    %c0_222 = arith.constant 0 : index
    %575 = vector.load %arg4[%c0_221, %c0_222] : memref<128x512xf32, #tpu.memory_space<vmem>>, vector<128x512xf32>
    %cst_223 = arith.constant dense<0.000000e+00> : vector<4x512xf32>
    %576 = tpu.matmul %528, %575, %cst_223 {dimension_numbers = #tpu.dot_dimension_numbers<[1], [0], [0], [1], [0, 0, 1, 1], [], []>} : vector<4x128xf32>, vector<128x512xf32>, vector<4x512xf32> -> vector<4x512xf32>
    %577 = arith.addf %574, %576 : vector<4x512xf32>
    %578 = vector.extract_strided_slice %577 {offsets = [0, 0], sizes = [4, 128], strides = [1, 1]} : vector<4x512xf32> to vector<4x128xf32>
    %cst_224 = arith.constant 0.000000e+00 : f32
    %579 = vector.broadcast %cst_224 : f32 to vector<4x128xf32>
    %580 = arith.subf %579, %578 : vector<4x128xf32>
    %581 = math.exp %580 : vector<4x128xf32>
    %cst_225 = arith.constant 1.000000e+00 : f32
    %582 = vector.broadcast %cst_225 : f32 to vector<4x128xf32>
    %583 = arith.addf %582, %581 : vector<4x128xf32>
    %cst_226 = arith.constant 1.000000e+00 : f32
    %584 = vector.broadcast %cst_226 : f32 to vector<4x128xf32>
    %585 = arith.divf %584, %583 : vector<4x128xf32>
    %586 = vector.extract_strided_slice %577 {offsets = [0, 128], sizes = [4, 128], strides = [1, 1]} : vector<4x512xf32> to vector<4x128xf32>
    %cst_227 = arith.constant 0.000000e+00 : f32
    %587 = vector.broadcast %cst_227 : f32 to vector<4x128xf32>
    %588 = arith.subf %587, %586 : vector<4x128xf32>
    %589 = math.exp %588 : vector<4x128xf32>
    %cst_228 = arith.constant 1.000000e+00 : f32
    %590 = vector.broadcast %cst_228 : f32 to vector<4x128xf32>
    %591 = arith.addf %590, %589 : vector<4x128xf32>
    %cst_229 = arith.constant 1.000000e+00 : f32
    %592 = vector.broadcast %cst_229 : f32 to vector<4x128xf32>
    %593 = arith.divf %592, %591 : vector<4x128xf32>
    %594 = vector.extract_strided_slice %577 {offsets = [0, 256], sizes = [4, 128], strides = [1, 1]} : vector<4x512xf32> to vector<4x128xf32>
    %595 = math.tanh %594 : vector<4x128xf32>
    %596 = vector.extract_strided_slice %577 {offsets = [0, 384], sizes = [4, 128], strides = [1, 1]} : vector<4x512xf32> to vector<4x128xf32>
    %cst_230 = arith.constant 0.000000e+00 : f32
    %597 = vector.broadcast %cst_230 : f32 to vector<4x128xf32>
    %598 = arith.subf %597, %596 : vector<4x128xf32>
    %599 = math.exp %598 : vector<4x128xf32>
    %cst_231 = arith.constant 1.000000e+00 : f32
    %600 = vector.broadcast %cst_231 : f32 to vector<4x128xf32>
    %601 = arith.addf %600, %599 : vector<4x128xf32>
    %cst_232 = arith.constant 1.000000e+00 : f32
    %602 = vector.broadcast %cst_232 : f32 to vector<4x128xf32>
    %603 = arith.divf %602, %601 : vector<4x128xf32>
    %604 = arith.mulf %593, %526 : vector<4x128xf32>
    %605 = arith.mulf %585, %595 : vector<4x128xf32>
    %606 = arith.addf %604, %605 : vector<4x128xf32>
    %607 = math.tanh %606 : vector<4x128xf32>
    %608 = arith.mulf %603, %607 : vector<4x128xf32>
    %609 = tpu.concatenate %608, %565 in 1 : vector<4x128xf32>, vector<4x128xf32> -> vector<4x256xf32>
    %c0_233 = arith.constant 0 : index
    %c0_234 = arith.constant 0 : index
    %610 = vector.load %arg5[%c0_233, %c0_234] : memref<256x512xf32, #tpu.memory_space<vmem>>, vector<256x512xf32>
    %cst_235 = arith.constant dense<0.000000e+00> : vector<4x512xf32>
    %611 = tpu.matmul %609, %610, %cst_235 {dimension_numbers = #tpu.dot_dimension_numbers<[1], [0], [0], [1], [0, 0, 1, 1], [], []>} : vector<4x256xf32>, vector<256x512xf32>, vector<4x512xf32> -> vector<4x512xf32>
    %c0_236 = arith.constant 0 : index
    %c0_237 = arith.constant 0 : index
    %612 = vector.load %arg6[%c0_236, %c0_237] : memref<1x512xf32, #tpu.memory_space<vmem>>, vector<1x512xf32>
    %613 = vector.broadcast %612 : vector<1x512xf32> to vector<4x512xf32>
    %614 = arith.addf %611, %613 : vector<4x512xf32>
    %615 = vector.extract_strided_slice %614 {offsets = [0, 0], sizes = [4, 128], strides = [1, 1]} : vector<4x512xf32> to vector<4x128xf32>
    %cst_238 = arith.constant 0.000000e+00 : f32
    %616 = vector.broadcast %cst_238 : f32 to vector<4x128xf32>
    %617 = arith.subf %616, %615 : vector<4x128xf32>
    %618 = math.exp %617 : vector<4x128xf32>
    %cst_239 = arith.constant 1.000000e+00 : f32
    %619 = vector.broadcast %cst_239 : f32 to vector<4x128xf32>
    %620 = arith.addf %619, %618 : vector<4x128xf32>
    %cst_240 = arith.constant 1.000000e+00 : f32
    %621 = vector.broadcast %cst_240 : f32 to vector<4x128xf32>
    %622 = arith.divf %621, %620 : vector<4x128xf32>
    %623 = vector.extract_strided_slice %614 {offsets = [0, 128], sizes = [4, 128], strides = [1, 1]} : vector<4x512xf32> to vector<4x128xf32>
    %cst_241 = arith.constant 0.000000e+00 : f32
    %624 = vector.broadcast %cst_241 : f32 to vector<4x128xf32>
    %625 = arith.subf %624, %623 : vector<4x128xf32>
    %626 = math.exp %625 : vector<4x128xf32>
    %cst_242 = arith.constant 1.000000e+00 : f32
    %627 = vector.broadcast %cst_242 : f32 to vector<4x128xf32>
    %628 = arith.addf %627, %626 : vector<4x128xf32>
    %cst_243 = arith.constant 1.000000e+00 : f32
    %629 = vector.broadcast %cst_243 : f32 to vector<4x128xf32>
    %630 = arith.divf %629, %628 : vector<4x128xf32>
    %631 = vector.extract_strided_slice %614 {offsets = [0, 256], sizes = [4, 128], strides = [1, 1]} : vector<4x512xf32> to vector<4x128xf32>
    %632 = math.tanh %631 : vector<4x128xf32>
    %633 = vector.extract_strided_slice %614 {offsets = [0, 384], sizes = [4, 128], strides = [1, 1]} : vector<4x512xf32> to vector<4x128xf32>
    %cst_244 = arith.constant 0.000000e+00 : f32
    %634 = vector.broadcast %cst_244 : f32 to vector<4x128xf32>
    %635 = arith.subf %634, %633 : vector<4x128xf32>
    %636 = math.exp %635 : vector<4x128xf32>
    %cst_245 = arith.constant 1.000000e+00 : f32
    %637 = vector.broadcast %cst_245 : f32 to vector<4x128xf32>
    %638 = arith.addf %637, %636 : vector<4x128xf32>
    %cst_246 = arith.constant 1.000000e+00 : f32
    %639 = vector.broadcast %cst_246 : f32 to vector<4x128xf32>
    %640 = arith.divf %639, %638 : vector<4x128xf32>
    %641 = arith.mulf %630, %563 : vector<4x128xf32>
    %642 = arith.mulf %622, %632 : vector<4x128xf32>
    %643 = arith.addf %641, %642 : vector<4x128xf32>
    %644 = math.tanh %643 : vector<4x128xf32>
    %645 = arith.mulf %640, %644 : vector<4x128xf32>
    %646 = arith.index_cast %c7_i32 : i32 to index
    %c0_247 = arith.constant 0 : index
    %c0_248 = arith.constant 0 : index
    %647 = vector.load %arg1[%646, %c0_247, %c0_248] : memref<8x4x1xf32, #tpu.memory_space<vmem>>, vector<1x4x1xf32>
    %648 = vector.shape_cast %647 : vector<1x4x1xf32> to vector<4x1xf32>
    %649 = vector.broadcast %648 : vector<4x1xf32> to vector<4x128xf32>
    %650 = arith.mulf %649, %645 : vector<4x128xf32>
    %651 = arith.addf %571, %650 : vector<4x128xf32>
    %c8_i32 = arith.constant 8 : i32
    %c0_249 = arith.constant 0 : index
    %c0_250 = arith.constant 0 : index
    %652 = vector.load %arg7[%c0_249, %c0_250] : memref<128x64xf32, #tpu.memory_space<vmem>>, vector<128x64xf32>
    %cst_251 = arith.constant dense<0.000000e+00> : vector<4x64xf32>
    %653 = tpu.matmul %651, %652, %cst_251 {dimension_numbers = #tpu.dot_dimension_numbers<[1], [0], [0], [1], [0, 0, 1, 1], [], []>} : vector<4x128xf32>, vector<128x64xf32>, vector<4x64xf32> -> vector<4x64xf32>
    %c0_252 = arith.constant 0 : index
    %c0_253 = arith.constant 0 : index
    %654 = vector.load %arg8[%c0_252, %c0_253] : memref<1x64xf32, #tpu.memory_space<vmem>>, vector<1x64xf32>
    %655 = vector.broadcast %654 : vector<1x64xf32> to vector<4x64xf32>
    %656 = arith.addf %653, %655 : vector<4x64xf32>
    %cst_254 = arith.constant 0.000000e+00 : f32
    %657 = vector.broadcast %cst_254 : f32 to vector<4x64xf32>
    %658 = arith.maximumf %656, %657 : vector<4x64xf32>
    %c0_255 = arith.constant 0 : index
    %c0_256 = arith.constant 0 : index
    %659 = vector.load %arg9[%c0_255, %c0_256] : memref<4x64xf32, #tpu.memory_space<vmem>>, vector<4x64xf32>
    tpu.vector_store %arg9[%c0_255, %c0_256], %658 {strides = array<i32>} : memref<4x64xf32, #tpu.memory_space<vmem>>, vector<4x64xf32>,
    return
  }
}

</mosaic_0001>

<llo_original>
// kernel: tpu_custom_call.1
$region0: #{tpu_custom_call.1}
  #allocation0 [shape = 'u32[]', space=smem, size = 0x4, offset = 0x4, fixed_abs, tag = 'smem constant byte address 0x4 - core index']
  #allocation1 [shape = 'u32[72,128]{1,0:T(1,128)}', space=vmem, size = 0x9000, scoped, tag = 'internal scratch']
  #allocation2 [shape = 'f32[8,4,512]{2,1,0:T(4,128)}', space=vmem, size = 0x10000, scoped, tag = 'scratch operand']
  %s0 = inlined_call_operand.vmem [shape: f32[8,4,1], index: 0, kind: input, shape index: {}]
  %s1 = inlined_call_operand.vmem [shape: f32[8,4,1], index: 1, kind: input, shape index: {}]
  %s2 = inlined_call_operand.vmem [shape: f32[1,512], index: 2, kind: input, shape index: {}]
  %s3 = inlined_call_operand.vmem [shape: f32[1,512], index: 3, kind: input, shape index: {}]
  %s4 = inlined_call_operand.hbm [shape: f32[128,512], index: 4, kind: input, shape index: {}]
  %s5 = inlined_call_operand.hbm [shape: f32[256,512], index: 5, kind: input, shape index: {}]
  %s6 = inlined_call_operand.vmem [shape: f32[1,512], index: 6, kind: input, shape index: {}]
  %s7 = inlined_call_operand.vmem [shape: f32[128,64], index: 7, kind: input, shape index: {}]
  %s8 = inlined_call_operand.vmem [shape: f32[1,64], index: 8, kind: input, shape index: {}]
  %s9 = inlined_call_operand.hbm [shape: f32[4,64], index: 9, kind: output, shape index: {}]
  %s10 = sld [smem:[#allocation0]]
  $region54: #{tpu_custom_call.1} parent=0
    _
  %s12 = ssub.s32 1, %s10
  %s13 = scalar_select 0, %s12, %s10
  $region1: #{tpu_custom_call.1} parent=0
    #allocation3 [shape = 'u8[262144]{0}', space=vmem, size = 0x40000, scoped, tag = 'input window, operand 4, single buffered']
    #allocation4 [shape = 's32[1]{0}', space=sflag, size = 0x4, scoped, tag = 'scoped memory for tpu_custom_call.1']
    #allocation5 [shape = 's32[1]{0}', space=sflag, size = 0x4, scoped, tag = 'scoped memory for tpu_custom_call.1']
    #allocation6 [shape = 'u8[524288]{0}', space=vmem, size = 0x80000, scoped, tag = 'input window, operand 5, single buffered']
    #allocation7 [shape = 's32[1]{0}', space=sflag, size = 0x4, scoped, tag = 'scoped memory for tpu_custom_call.1']
    #allocation8 [shape = 'u8[2048]{0}', space=vmem, size = 0x800, scoped, tag = 'output window, operand 0, single buffered']
    %14 = vsyncpa [#allocation4], 0
    %15 = vsyncpa [#allocation7], 0
    %16 = vsyncpa [#allocation5], 0
    // Predicated region
    $region2: #{tpu_custom_call.1} parent=1 // pred_check
      _
    $region3: #{tpu_custom_call.1} parent=1 // pred_check_branch
      %18 = sbr.rel (0) target = $region5
    $region4: #{tpu_custom_call.1} parent=1 // pred_region
      _
    $region5: #{tpu_custom_call.1} parent=1 // pred_fallthru
      _
    // Predicated region
    $region6: #{tpu_custom_call.1} parent=1 // pred_check
      _
    $region7: #{tpu_custom_call.1} parent=1 // pred_check_branch
      %20 = sbr.rel (0) target = $region9
    $region8: #{tpu_custom_call.1} parent=1 // pred_region
      _
    $region9: #{tpu_custom_call.1} parent=1 // pred_fallthru
      _
    // Predicated region
    $region10: #{tpu_custom_call.1} parent=1 // pred_check
      _
    $region11: #{tpu_custom_call.1} parent=1 // pred_check_branch
      %22 = sbr.rel (0) target = $region13
    $region12: #{tpu_custom_call.1} parent=1 // pred_region
      _
    $region13: #{tpu_custom_call.1} parent=1 // pred_fallthru
      _
    // Predicated region
    $region14: #{tpu_custom_call.1} parent=1 // pred_check
      _
    $region15: #{tpu_custom_call.1} parent=1 // pred_check_branch
      %24 = sbr.rel (0) target = $region17
    $region16: #{tpu_custom_call.1} parent=1 // pred_region
      _
    $region17: #{tpu_custom_call.1} parent=1 // pred_fallthru
      _
    // Predicated region
    $region18: #{tpu_custom_call.1} parent=1 // pred_check
      _
    $region19: #{tpu_custom_call.1} parent=1 // pred_check_branch
      %26 = sbr.rel (0) target = $region21
    $region20: #{tpu_custom_call.1} parent=1 // pred_region
      %28 = vsyncadd [#allocation4], 0
      %s29 = sshll.u32 %s4, 4
      %s30 = int_to_ptr.hbm [resolvable:$true] %s29
      %s31 = sshll.u32 [#allocation3], 4
      %s32 = int_to_ptr.vmem [resolvable:$true] %s31
      %37 = dma.hbm_to_vmem [thread:$0]  %s30, 8192, %s32, [#allocation4], 512, 512, 32
    $region21: #{tpu_custom_call.1} parent=1 // pred_fallthru
      _
    // Predicated region
    $region22: #{tpu_custom_call.1} parent=1 // pred_check
      _
    $region23: #{tpu_custom_call.1} parent=1 // pred_check_branch
      %39 = sbr.rel (0) target = $region25
    $region24: #{tpu_custom_call.1} parent=1 // pred_region
      %41 = vsyncadd [#allocation7], 0
      %s42 = sshll.u32 %s5, 4
      %s43 = int_to_ptr.hbm [resolvable:$true] %s42
      %s44 = sshll.u32 [#allocation6], 4
      %s45 = int_to_ptr.vmem [resolvable:$true] %s44
      %50 = dma.hbm_to_vmem [thread:$0]  %s43, 16384, %s45, [#allocation7], 512, 512, 32
    $region25: #{tpu_custom_call.1} parent=1 // pred_fallthru
      _
    // Predicated region
    $region26: #{tpu_custom_call.1} parent=1 // pred_check
      _
    $region27: #{tpu_custom_call.1} parent=1 // pred_check_branch
      %52 = sbr.rel (0) target = $region29
    $region28: #{tpu_custom_call.1} parent=1 // pred_region
      _
    $region29: #{tpu_custom_call.1} parent=1 // pred_fallthru
      _
    // Predicated region
    $region30: #{tpu_custom_call.1} parent=1 // pred_check
      _
    $region31: #{tpu_custom_call.1} parent=1 // pred_check_branch
      %54 = sbr.rel (0) target = $region33
    $region32: #{tpu_custom_call.1} parent=1 // pred_region
      _
    $region33: #{tpu_custom_call.1} parent=1 // pred_fallthru
      _
    // Predicated region
    $region34: #{tpu_custom_call.1} parent=1 // pred_check
      _
    $region35: #{tpu_custom_call.1} parent=1 // pred_check_branch
      %56 = sbr.rel (0) target = $region37
    $region36: #{tpu_custom_call.1} parent=1 // pred_region
      _
    $region37: #{tpu_custom_call.1} parent=1 // pred_fallthru
      _
    // Predicated region
    $region38: #{tpu_custom_call.1} parent=1 // pred_check
      _
    $region39: #{tpu_custom_call.1} parent=1 // pred_check_branch
      %58 = sbr.rel (0) target = $region41
    $region40: #{tpu_custom_call.1} parent=1 // pred_region
      %60 = dma.done [#allocation4], 8192
    $region41: #{tpu_custom_call.1} parent=1 // pred_fallthru
      _
    // Predicated region
    $region42: #{tpu_custom_call.1} parent=1 // pred_check
      _
    $region43: #{tpu_custom_call.1} parent=1 // pred_check_branch
      %62 = sbr.rel (0) target = $region45
    $region44: #{tpu_custom_call.1} parent=1 // pred_region
      %64 = dma.done [#allocation7], 16384
    $region45: #{tpu_custom_call.1} parent=1 // pred_fallthru
      _
    %v65 = vld [vmem:[%s0] sm:$0xf]
    %v66 = vld [vmem:[%s0 + $0x4] sm:$0xf]
    %v67 = vld [vmem:[%s0 + $0x8] sm:$0xf]
    %v68 = vld [vmem:[%s0 + $0xc] sm:$0xf]
    %v69 = vld [vmem:[%s0 + $0x10] sm:$0xf]
    %v70 = vld [vmem:[%s0 + $0x14] sm:$0xf]
    %v71 = vld [vmem:[%s0 + $0x18] sm:$0xf]
    %v72 = vld [vmem:[%s0 + $0x1c] sm:$0xf]
    %v73 = vld [vmem:[%s2] sm:$0xf]
    %75 = vset.pattern.permute.xlu0 0
    %76 = vperm.xlu0 %75, %v65
    %v77 = vpop.permute.xlu0 %76
    %80 = vset.pattern.permute.xlu0 0
    %81 = vperm.xlu0 %80, %v66
    %v82 = vpop.permute.xlu0 %81
    %85 = vset.pattern.permute.xlu0 0
    %86 = vperm.xlu0 %85, %v67
    %v87 = vpop.permute.xlu0 %86
    %90 = vset.pattern.permute.xlu0 0
    %91 = vperm.xlu0 %90, %v68
    %v92 = vpop.permute.xlu0 %91
    %95 = vset.pattern.permute.xlu0 0
    %96 = vperm.xlu0 %95, %v69
    %v97 = vpop.permute.xlu0 %96
    %100 = vset.pattern.permute.xlu0 0
    %101 = vperm.xlu0 %100, %v70
    %v102 = vpop.permute.xlu0 %101
    %105 = vset.pattern.permute.xlu0 0
    %106 = vperm.xlu0 %105, %v71
    %v107 = vpop.permute.xlu0 %106
    %110 = vset.pattern.permute.xlu0 0
    %111 = vperm.xlu0 %110, %v72
    %v112 = vpop.permute.xlu0 %111
    %v115 = vperm.slane %v73, 0
    %v116 = vperm.slane %v73, 1
    %v117 = vperm.slane %v73, 2
    %v118 = vperm.slane %v73, 3
    %v123 = vmul.f32 %v77, %v115
    %v124 = vmul.f32 %v77, %v116
    %v125 = vmul.f32 %v77, %v117
    %v126 = vmul.f32 %v77, %v118
    %v127 = vmul.f32 %v82, %v115
    %v128 = vmul.f32 %v82, %v116
    %v129 = vmul.f32 %v82, %v117
    %v130 = vmul.f32 %v82, %v118
    %v131 = vmul.f32 %v87, %v115
    %v132 = vmul.f32 %v87, %v116
    %v133 = vmul.f32 %v87, %v117
    %v134 = vmul.f32 %v87, %v118
    %v135 = vmul.f32 %v92, %v115
    %v136 = vmul.f32 %v92, %v116
    %v137 = vmul.f32 %v92, %v117
    %v138 = vmul.f32 %v92, %v118
    %v139 = vmul.f32 %v97, %v115
    %v140 = vmul.f32 %v97, %v116
    %v141 = vmul.f32 %v97, %v117
    %v142 = vmul.f32 %v97, %v118
    %v143 = vmul.f32 %v102, %v115
    %v144 = vmul.f32 %v102, %v116
    %v145 = vmul.f32 %v102, %v117
    %v146 = vmul.f32 %v102, %v118
    %v147 = vmul.f32 %v107, %v115
    %v148 = vmul.f32 %v107, %v116
    %v149 = vmul.f32 %v107, %v117
    %v150 = vmul.f32 %v107, %v118
    %v151 = vmul.f32 %v112, %v115
    %v152 = vmul.f32 %v112, %v116
    %v153 = vmul.f32 %v112, %v117
    %v154 = vmul.f32 %v112, %v118
    %v155 = vld [vmem:[%s3] sm:$0xf]
    %v157 = vperm.slane %v155, 0
    %v158 = vperm.slane %v155, 1
    %v159 = vperm.slane %v155, 2
    %v160 = vperm.slane %v155, 3
    %v165 = vadd.f32 %v123, %v157
    %v166 = vadd.f32 %v124, %v158
    %v167 = vadd.f32 %v125, %v159
    %v168 = vadd.f32 %v126, %v160
    %v169 = vadd.f32 %v127, %v157
    %v170 = vadd.f32 %v128, %v158
    %v171 = vadd.f32 %v129, %v159
    %v172 = vadd.f32 %v130, %v160
    %v173 = vadd.f32 %v131, %v157
    %v174 = vadd.f32 %v132, %v158
    %v175 = vadd.f32 %v133, %v159
    %v176 = vadd.f32 %v134, %v160
    %v177 = vadd.f32 %v135, %v157
    %v178 = vadd.f32 %v136, %v158
    %v179 = vadd.f32 %v137, %v159
    %v180 = vadd.f32 %v138, %v160
    %v181 = vadd.f32 %v139, %v157
    %v182 = vadd.f32 %v140, %v158
    %v183 = vadd.f32 %v141, %v159
    %v184 = vadd.f32 %v142, %v160
    %v185 = vadd.f32 %v143, %v157
    %v186 = vadd.f32 %v144, %v158
    %v187 = vadd.f32 %v145, %v159
    %v188 = vadd.f32 %v146, %v160
    %v189 = vadd.f32 %v147, %v157
    %v190 = vadd.f32 %v148, %v158
    %v191 = vadd.f32 %v149, %v159
    %v192 = vadd.f32 %v150, %v160
    %v193 = vadd.f32 %v151, %v157
    %v194 = vadd.f32 %v152, %v158
    %v195 = vadd.f32 %v153, %v159
    %v196 = vadd.f32 %v154, %v160
    %v229 = vrot.slane %v166, 4
    %v230 = vrot.slane %v168, 4
    %v231 = vrot.slane %v170, 4
    %v232 = vrot.slane %v172, 4
    %v233 = vrot.slane %v174, 4
    %v234 = vrot.slane %v176, 4
    %v235 = vrot.slane %v178, 4
    %v236 = vrot.slane %v180, 4
    %v237 = vrot.slane %v182, 4
    %v238 = vrot.slane %v184, 4
    %v239 = vrot.slane %v186, 4
    %v240 = vrot.slane %v188, 4
    %v241 = vrot.slane %v190, 4
    %v242 = vrot.slane %v192, 4
    %v243 = vrot.slane %v194, 4
    %v244 = vrot.slane %v196, 4
    %vm245 = vcmask 1043456
    %v246 = vsel %vm245, %v165, %v229
    %v247 = vsel %vm245, %v167, %v230
    %v248 = vsel %vm245, %v169, %v231
    %v249 = vsel %vm245, %v171, %v232
    %v250 = vsel %vm245, %v173, %v233
    %v251 = vsel %vm245, %v175, %v234
    %v252 = vsel %vm245, %v177, %v235
    %v253 = vsel %vm245, %v179, %v236
    %v254 = vsel %vm245, %v181, %v237
    %v255 = vsel %vm245, %v183, %v238
    %v256 = vsel %vm245, %v185, %v239
    %v257 = vsel %vm245, %v187, %v240
    %v258 = vsel %vm245, %v189, %v241
    %v259 = vsel %vm245, %v191, %v242
    %v260 = vsel %vm245, %v193, %v243
    %v261 = vsel %vm245, %v195, %v244
    %278 = vst [vmem:[#allocation2] sm:$0xff] %v246
    %279 = vst [vmem:[#allocation2 + $0x8] sm:$0xff] %v247
    %280 = vst [vmem:[#allocation2 + $0x10] sm:$0xff] %v248
    %281 = vst [vmem:[#allocation2 + $0x18] sm:$0xff] %v249
    %282 = vst [vmem:[#allocation2 + $0x20] sm:$0xff] %v250
    %283 = vst [vmem:[#allocation2 + $0x28] sm:$0xff] %v251
    %284 = vst [vmem:[#allocation2 + $0x30] sm:$0xff] %v252
    %285 = vst [vmem:[#allocation2 + $0x38] sm:$0xff] %v253
    %286 = vst [vmem:[#allocation2 + $0x40] sm:$0xff] %v254
    %287 = vst [vmem:[#allocation2 + $0x48] sm:$0xff] %v255
    %288 = vst [vmem:[#allocation2 + $0x50] sm:$0xff] %v256
    %289 = vst [vmem:[#allocation2 + $0x58] sm:$0xff] %v257
    %290 = vst [vmem:[#allocation2 + $0x60] sm:$0xff] %v258
    %291 = vst [vmem:[#allocation2 + $0x68] sm:$0xff] %v259
    %292 = vst [vmem:[#allocation2 + $0x70] sm:$0xff] %v260
    %293 = vst [vmem:[#allocation2 + $0x78] sm:$0xff] %v261
    %v294 = vld [vmem:[#allocation2] sm:$0xff]
    %v295 = vld [vmem:[#allocation2 + $0x8] sm:$0xff]
    %v296 = vld [vmem:[#allocation3] sm:$0xff]
    %v297 = vld [vmem:[#allocation3 + $0x8] sm:$0xff]
    %v298 = vld [vmem:[#allocation3 + $0x10] sm:$0xff]
    %v299 = vld [vmem:[#allocation3 + $0x18] sm:$0xff]
    %v300 = vld [vmem:[#allocation3 + $0x20] sm:$0xff]
    %v301 = vld [vmem:[#allocation3 + $0x28] sm:$0xff]
    %v302 = vld [vmem:[#allocation3 + $0x30] sm:$0xff]
    %v303 = vld [vmem:[#allocation3 + $0x38] sm:$0xff]
    %v304 = vld [vmem:[#allocation3 + $0x40] sm:$0xff]
    %v305 = vld [vmem:[#allocation3 + $0x48] sm:$0xff]
    %v306 = vld [vmem:[#allocation3 + $0x50] sm:$0xff]
    %v307 = vld [vmem:[#allocation3 + $0x58] sm:$0xff]
    %v308 = vld [vmem:[#allocation3 + $0x60] sm:$0xff]
    %v309 = vld [vmem:[#allocation3 + $0x68] sm:$0xff]
    %v310 = vld [vmem:[#allocation3 + $0x70] sm:$0xff]
    %v311 = vld [vmem:[#allocation3 + $0x78] sm:$0xff]
    %v312 = vld [vmem:[#allocation3 + $0x80] sm:$0xff]
    %v313 = vld [vmem:[#allocation3 + $0x88] sm:$0xff]
    %v314 = vld [vmem:[#allocation3 + $0x90] sm:$0xff]
    %v315 = vld [vmem:[#allocation3 + $0x98] sm:$0xff]
    %v316 = vld [vmem:[#allocation3 + $0xa0] sm:$0xff]
    %v317 = vld [vmem:[#allocation3 + $0xa8] sm:$0xff]
    %v318 = vld [vmem:[#allocation3 + $0xb0] sm:$0xff]
    %v319 = vld [vmem:[#allocation3 + $0xb8] sm:$0xff]
    %v320 = vld [vmem:[#allocation3 + $0xc0] sm:$0xff]
    %v321 = vld [vmem:[#allocation3 + $0xc8] sm:$0xff]
    %v322 = vld [vmem:[#allocation3 + $0xd0] sm:$0xff]
    %v323 = vld [vmem:[#allocation3 + $0xd8] sm:$0xff]
    %v324 = vld [vmem:[#allocation3 + $0xe0] sm:$0xff]
    %v325 = vld [vmem:[#allocation3 + $0xe8] sm:$0xff]
    %v326 = vld [vmem:[#allocation3 + $0xf0] sm:$0xff]
    %v327 = vld [vmem:[#allocation3 + $0xf8] sm:$0xff]
    %v328 = vld [vmem:[#allocation3 + $0x100] sm:$0xff]
    %v329 = vld [vmem:[#allocation3 + $0x108] sm:$0xff]
    %v330 = vld [vmem:[#allocation3 + $0x110] sm:$0xff]
    %v331 = vld [vmem:[#allocation3 + $0x118] sm:$0xff]
    %v332 = vld [vmem:[#allocation3 + $0x120] sm:$0xff]
    %v333 = vld [vmem:[#allocation3 + $0x128] sm:$0xff]
    %v334 = vld [vmem:[#allocation3 + $0x130] sm:$0xff]
    %v335 = vld [vmem:[#allocation3 + $0x138] sm:$0xff]
    %v336 = vld [vmem:[#allocation3 + $0x140] sm:$0xff]
    %v337 = vld [vmem:[#allocation3 + $0x148] sm:$0xff]
    %v338 = vld [vmem:[#allocation3 + $0x150] sm:$0xff]
    %v339 = vld [vmem:[#allocation3 + $0x158] sm:$0xff]
    %v340 = vld [vmem:[#allocation3 + $0x160] sm:$0xff]
    %v341 = vld [vmem:[#allocation3 + $0x168] sm:$0xff]
    %v342 = vld [vmem:[#allocation3 + $0x170] sm:$0xff]
    %v343 = vld [vmem:[#allocation3 + $0x178] sm:$0xff]
    %v344 = vld [vmem:[#allocation3 + $0x180] sm:$0xff]
    %v345 = vld [vmem:[#allocation3 + $0x188] sm:$0xff]
    %v346 = vld [vmem:[#allocation3 + $0x190] sm:$0xff]
    %v347 = vld [vmem:[#allocation3 + $0x198] sm:$0xff]
    %v348 = vld [vmem:[#allocation3 + $0x1a0] sm:$0xff]
    %v349 = vld [vmem:[#allocation3 + $0x1a8] sm:$0xff]
    %v350 = vld [vmem:[#allocation3 + $0x1b0] sm:$0xff]
    %v351 = vld [vmem:[#allocation3 + $0x1b8] sm:$0xff]
    %v352 = vld [vmem:[#allocation3 + $0x1c0] sm:$0xff]
    %v353 = vld [vmem:[#allocation3 + $0x1c8] sm:$0xff]
    %v354 = vld [vmem:[#allocation3 + $0x1d0] sm:$0xff]
    %v355 = vld [vmem:[#allocation3 + $0x1d8] sm:$0xff]
    %v356 = vld [vmem:[#allocation3 + $0x1e0] sm:$0xff]
    %v357 = vld [vmem:[#allocation3 + $0x1e8] sm:$0xff]
    %v358 = vld [vmem:[#allocation3 + $0x1f0] sm:$0xff]
    %v359 = vld [vmem:[#allocation3 + $0x1f8] sm:$0xff]
    %360 = vmatpush.msra.mxu0 %v356
    %361 = vmatpush.msra.mxu0 %v352
    %362 = vmatpush.msra.mxu0 %v348
    %363 = vmatpush.msra.mxu0 %v344
    %364 = vmatpush.msra.mxu0 %v340
    %365 = vmatpush.msra.mxu0 %v336
    %366 = vmatpush.msra.mxu0 %v332
    %367 = vmatpush.msra.mxu0 %v328
    %368 = vmatpush.msra.mxu0 %v324
    %369 = vmatpush.msra.mxu0 %v320
    %370 = vmatpush.msra.mxu0 %v316
    %371 = vmatpush.msra.mxu0 %v312
    %372 = vmatpush.msra.mxu0 %v308
    %373 = vmatpush.msra.mxu0 %v304
    %374 = vmatpush.msra.mxu0 %v300
    %375 = vmatpush.msra.mxu0 %v296
    %376 = vmatmul.f32.gmra.mxu0 0.0
    %v377 = vpop.f32.mrf.mxu0
    %v378 = vadd.f32 0.0, %v377
    %379 = vdwg.mxu0
    %380 = vmatpush.msra.mxu0 %v357
    %381 = vmatpush.msra.mxu0 %v353
    %382 = vmatpush.msra.mxu0 %v349
    %383 = vmatpush.msra.mxu0 %v345
    %384 = vmatpush.msra.mxu0 %v341
    %385 = vmatpush.msra.mxu0 %v337
    %386 = vmatpush.msra.mxu0 %v333
    %387 = vmatpush.msra.mxu0 %v329
    %388 = vmatpush.msra.mxu0 %v325
    %389 = vmatpush.msra.mxu0 %v321
    %390 = vmatpush.msra.mxu0 %v317
    %391 = vmatpush.msra.mxu0 %v313
    %392 = vmatpush.msra.mxu0 %v309
    %393 = vmatpush.msra.mxu0 %v305
    %394 = vmatpush.msra.mxu0 %v301
    %395 = vmatpush.msra.mxu0 %v297
    %396 = vmatmul.f32.gmra.mxu0 0.0
    %v397 = vpop.f32.mrf.mxu0
    %v398 = vadd.f32 0.0, %v397
    %399 = vdwg.mxu0
    %400 = vmatpush.msra.mxu0 %v358
    %401 = vmatpush.msra.mxu0 %v354
    %402 = vmatpush.msra.mxu0 %v350
    %403 = vmatpush.msra.mxu0 %v346
    %404 = vmatpush.msra.mxu0 %v342
    %405 = vmatpush.msra.mxu0 %v338
    %406 = vmatpush.msra.mxu0 %v334
    %407 = vmatpush.msra.mxu0 %v330
    %408 = vmatpush.msra.mxu0 %v326
    %409 = vmatpush.msra.mxu0 %v322
    %410 = vmatpush.msra.mxu0 %v318
    %411 = vmatpush.msra.mxu0 %v314
    %412 = vmatpush.msra.mxu0 %v310
    %413 = vmatpush.msra.mxu0 %v306
    %414 = vmatpush.msra.mxu0 %v302
    %415 = vmatpush.msra.mxu0 %v298
    %416 = vmatmul.f32.gmra.mxu0 0.0
    %v417 = vpop.f32.mrf.mxu0
    %v418 = vadd.f32 0.0, %v417
    %419 = vdwg.mxu0
    %420 = vmatpush.msra.mxu0 %v359
    %421 = vmatpush.msra.mxu0 %v355
    %422 = vmatpush.msra.mxu0 %v351
    %423 = vmatpush.msra.mxu0 %v347
    %424 = vmatpush.msra.mxu0 %v343
    %425 = vmatpush.msra.mxu0 %v339
    %426 = vmatpush.msra.mxu0 %v335
    %427 = vmatpush.msra.mxu0 %v331
    %428 = vmatpush.msra.mxu0 %v327
    %429 = vmatpush.msra.mxu0 %v323
    %430 = vmatpush.msra.mxu0 %v319
    %431 = vmatpush.msra.mxu0 %v315
    %432 = vmatpush.msra.mxu0 %v311
    %433 = vmatpush.msra.mxu0 %v307
    %434 = vmatpush.msra.mxu0 %v303
    %435 = vmatpush.msra.mxu0 %v299
    %436 = vmatmul.f32.gmra.mxu0 0.0
    %v437 = vpop.f32.mrf.mxu0
    %v438 = vadd.f32 0.0, %v437
    %439 = vdwg.mxu0
    %v444 = vrot.slane %v398, 4
    %v445 = vrot.slane %v438, 4
    %v446 = vsel %vm245, %v378, %v444
    %v447 = vsel %vm245, %v418, %v445
    %v450 = vadd.f32 %v294, %v446
    %v451 = vadd.f32 %v295, %v447
    %v452 = vsub.f32 0.0, %v450
    %v453 = vmul.f32 %v452, 1.442695
    %v454 = vpow.pop %v453
    %v455 = vadd.f32 %v454, 1.0
    %v456 = vrcp.pop %v455
    %v457 = vmul.f32 %v455, %v456
    %v458 = vsub.f32 1.0, %v457
    %v459 = vmul.f32 %v456, %v458
    %v460 = vadd.f32 %v456, %v459
    %vm461 = vweird.f32 %v455
    %vm462 = vweird.f32 %v456
    %vm463 = vmor %vm461, %vm462
    %v464 = vsel %vm463, %v456, %v460
    %v465 = vand.u32 2147483647, %v455
    %vm466 = vcmp.eq.f32.partialorder %v465, 8.507059e+37
    %v467 = vand.u32 %v455, 2147483648
    %v468 = vor.u32 1.1754944e-38, %v467
    %v469 = vsel %vm466, %v468, %v464
    %v470 = vmul.f32 1.0, %v469
    %v472 = vrot.slane %v450, 4
    %v474 = vsub.f32 0.0, %v472
    %v475 = vmul.f32 %v474, 1.442695
    %v476 = vpow.pop %v475
    %v477 = vadd.f32 %v476, 1.0
    %v478 = vrcp.pop %v477
    %v479 = vmul.f32 %v477, %v478
    %v480 = vsub.f32 1.0, %v479
    %v481 = vmul.f32 %v478, %v480
    %v482 = vadd.f32 %v478, %v481
    %vm483 = vweird.f32 %v477
    %vm484 = vweird.f32 %v478
    %vm485 = vmor %vm483, %vm484
    %v486 = vsel %vm485, %v478, %v482
    %v487 = vand.u32 2147483647, %v477
    %vm488 = vcmp.eq.f32.partialorder %v487, 8.507059e+37
    %v489 = vand.u32 %v477, 2147483648
    %v490 = vor.u32 1.1754944e-38, %v489
    %v491 = vsel %vm488, %v490, %v486
    %v492 = vmul.f32 1.0, %v491
    %v493 = vtanh.pop %v451
    %v495 = vrot.slane %v451, 4
    %v497 = vsub.f32 0.0, %v495
    %v498 = vmul.f32 %v497, 1.442695
    %v499 = vpow.pop %v498
    %v500 = vadd.f32 %v499, 1.0
    %v501 = vrcp.pop %v500
    %v502 = vmul.f32 %v500, %v501
    %v503 = vsub.f32 1.0, %v502
    %v504 = vmul.f32 %v501, %v503
    %v505 = vadd.f32 %v501, %v504
    %vm506 = vweird.f32 %v500
    %vm507 = vweird.f32 %v501
    %vm508 = vmor %vm506, %vm507
    %v509 = vsel %vm508, %v501, %v505
    %v510 = vand.u32 2147483647, %v500
    %vm511 = vcmp.eq.f32.partialorder %v510, 8.507059e+37
    %v512 = vand.u32 %v500, 2147483648
    %v513 = vor.u32 1.1754944e-38, %v512
    %v514 = vsel %vm511, %v513, %v509
    %v515 = vmul.f32 1.0, %v514
    %v516 = vmul.f32 %v492, 0.0
    %v517 = vmul.f32 %v470, %v493
    %v518 = vadd.f32 %v516, %v517
    %v519 = vtanh.pop %v518
    %v520 = vmul.f32 %v515, %v519
    %v521 = vld [vmem:[#allocation6] sm:$0xff]
    %v522 = vld [vmem:[#allocation6 + $0x8] sm:$0xff]
    %v523 = vld [vmem:[#allocation6 + $0x10] sm:$0xff]
    %v524 = vld [vmem:[#allocation6 + $0x18] sm:$0xff]
    %v525 = vld [vmem:[#allocation6 + $0x20] sm:$0xff]
    %v526 = vld [vmem:[#allocation6 + $0x28] sm:$0xff]
    %v527 = vld [vmem:[#allocation6 + $0x30] sm:$0xff]
    %v528 = vld [vmem:[#allocation6 + $0x38] sm:$0xff]
    %v529 = vld [vmem:[#allocation6 + $0x40] sm:$0xff]
    %v530 = vld [vmem:[#allocation6 + $0x48] sm:$0xff]
    %v531 = vld [vmem:[#allocation6 + $0x50] sm:$0xff]
    %v532 = vld [vmem:[#allocation6 + $0x58] sm:$0xff]
    %v533 = vld [vmem:[#allocation6 + $0x60] sm:$0xff]
    %v534 = vld [vmem:[#allocation6 + $0x68] sm:$0xff]
    %v535 = vld [vmem:[#allocation6 + $0x70] sm:$0xff]
    %v536 = vld [vmem:[#allocation6 + $0x78] sm:$0xff]
    %v537 = vld [vmem:[#allocation6 + $0x80] sm:$0xff]
    %v538 = vld [vmem:[#allocation6 + $0x88] sm:$0xff]
    %v539 = vld [vmem:[#allocation6 + $0x90] sm:$0xff]
    %v540 = vld [vmem:[#allocation6 + $0x98] sm:$0xff]
    %v541 = vld [vmem:[#allocation6 + $0xa0] sm:$0xff]
    %v542 = vld [vmem:[#allocation6 + $0xa8] sm:$0xff]
    %v543 = vld [vmem:[#allocation6 + $0xb0] sm:$0xff]
    %v544 = vld [vmem:[#allocation6 + $0xb8] sm:$0xff]
    %v545 = vld [vmem:[#allocation6 + $0xc0] sm:$0xff]
    %v546 = vld [vmem:[#allocation6 + $0xc8] sm:$0xff]
    %v547 = vld [vmem:[#allocation6 + $0xd0] sm:$0xff]
    %v548 = vld [vmem:[#allocation6 + $0xd8] sm:$0xff]
    %v549 = vld [vmem:[#allocation6 + $0xe0] sm:$0xff]
    %v550 = vld [vmem:[#allocation6 + $0xe8] sm:$0xff]
    %v551 = vld [vmem:[#allocation6 + $0xf0] sm:$0xff]
    %v552 = vld [vmem:[#allocation6 + $0xf8] sm:$0xff]
    %v553 = vld [vmem:[#allocation6 + $0x100] sm:$0xff]
    %v554 = vld [vmem:[#allocation6 + $0x108] sm:$0xff]
    %v555 = vld [vmem:[#allocation6 + $0x110] sm:$0xff]
    %v556 = vld [vmem:[#allocation6 + $0x118] sm:$0xff]
    %v557 = vld [vmem:[#allocation6 + $0x120] sm:$0xff]
    %v558 = vld [vmem:[#allocation6 + $0x128] sm:$0xff]
    %v559 = vld [vmem:[#allocation6 + $0x130] sm:$0xff]
    %v560 = vld [vmem:[#allocation6 + $0x138] sm:$0xff]
    %v561 = vld [vmem:[#allocation6 + $0x140] sm:$0xff]
    %v562 = vld [vmem:[#allocation6 + $0x148] sm:$0xff]
    %v563 = vld [vmem:[#allocation6 + $0x150] sm:$0xff]
    %v564 = vld [vmem:[#allocation6 + $0x158] sm:$0xff]
    %v565 = vld [vmem:[#allocation6 + $0x160] sm:$0xff]
    %v566 = vld [vmem:[#allocation6 + $0x168] sm:$0xff]
    %v567 = vld [vmem:[#allocation6 + $0x170] sm:$0xff]
    %v568 = vld [vmem:[#allocation6 + $0x178] sm:$0xff]
    %v569 = vld [vmem:[#allocation6 + $0x180] sm:$0xff]
    %v570 = vld [vmem:[#allocation6 + $0x188] sm:$0xff]
    %v571 = vld [vmem:[#allocation6 + $0x190] sm:$0xff]
    %v572 = vld [vmem:[#allocation6 + $0x198] sm:$0xff]
    %v573 = vld [vmem:[#allocation6 + $0x1a0] sm:$0xff]
    %v574 = vld [vmem:[#allocation6 + $0x1a8] sm:$0xff]
    %v575 = vld [vmem:[#allocation6 + $0x1b0] sm:$0xff]
    %v576 = vld [vmem:[#allocation6 + $0x1b8] sm:$0xff]
    %v577 = vld [vmem:[#allocation6 + $0x1c0] sm:$0xff]
    %v578 = vld [vmem:[#allocation6 + $0x1c8] sm:$0xff]
    %v579 = vld [vmem:[#allocation6 + $0x1d0] sm:$0xff]
    %v580 = vld [vmem:[#allocation6 + $0x1d8] sm:$0xff]
    %v581 = vld [vmem:[#allocation6 + $0x1e0] sm:$0xff]
    %v582 = vld [vmem:[#allocation6 + $0x1e8] sm:$0xff]
    %v583 = vld [vmem:[#allocation6 + $0x1f0] sm:$0xff]
    %v584 = vld [vmem:[#allocation6 + $0x1f8] sm:$0xff]
    %v585 = vld [vmem:[#allocation6 + $0x200] sm:$0xff]
    %v586 = vld [vmem:[#allocation6 + $0x208] sm:$0xff]
    %v587 = vld [vmem:[#allocation6 + $0x210] sm:$0xff]
    %v588 = vld [vmem:[#allocation6 + $0x218] sm:$0xff]
    %v589 = vld [vmem:[#allocation6 + $0x220] sm:$0xff]
    %v590 = vld [vmem:[#allocation6 + $0x228] sm:$0xff]
    %v591 = vld [vmem:[#allocation6 + $0x230] sm:$0xff]
    %v592 = vld [vmem:[#allocation6 + $0x238] sm:$0xff]
    %v593 = vld [vmem:[#allocation6 + $0x240] sm:$0xff]
    %v594 = vld [vmem:[#allocation6 + $0x248] sm:$0xff]
    %v595 = vld [vmem:[#allocation6 + $0x250] sm:$0xff]
    %v596 = vld [vmem:[#allocation6 + $0x258] sm:$0xff]
    %v597 = vld [vmem:[#allocation6 + $0x260] sm:$0xff]
    %v598 = vld [vmem:[#allocation6 + $0x268] sm:$0xff]
    %v599 = vld [vmem:[#allocation6 + $0x270] sm:$0xff]
    %v600 = vld [vmem:[#allocation6 + $0x278] sm:$0xff]
    %v601 = vld [vmem:[#allocation6 + $0x280] sm:$0xff]
    %v602 = vld [vmem:[#allocation6 + $0x288] sm:$0xff]
    %v603 = vld [vmem:[#allocation6 + $0x290] sm:$0xff]
    %v604 = vld [vmem:[#allocation6 + $0x298] sm:$0xff]
    %v605 = vld [vmem:[#allocation6 + $0x2a0] sm:$0xff]
    %v606 = vld [vmem:[#allocation6 + $0x2a8] sm:$0xff]
    %v607 = vld [vmem:[#allocation6 + $0x2b0] sm:$0xff]
    %v608 = vld [vmem:[#allocation6 + $0x2b8] sm:$0xff]
    %v609 = vld [vmem:[#allocation6 + $0x2c0] sm:$0xff]
    %v610 = vld [vmem:[#allocation6 + $0x2c8] sm:$0xff]
    %v611 = vld [vmem:[#allocation6 + $0x2d0] sm:$0xff]
    %v612 = vld [vmem:[#allocation6 + $0x2d8] sm:$0xff]
    %v613 = vld [vmem:[#allocation6 + $0x2e0] sm:$0xff]
    %v614 = vld [vmem:[#allocation6 + $0x2e8] sm:$0xff]
    %v615 = vld [vmem:[#allocation6 + $0x2f0] sm:$0xff]
    %v616 = vld [vmem:[#allocation6 + $0x2f8] sm:$0xff]
    %v617 = vld [vmem:[#allocation6 + $0x300] sm:$0xff]
    %v618 = vld [vmem:[#allocation6 + $0x308] sm:$0xff]
    %v619 = vld [vmem:[#allocation6 + $0x310] sm:$0xff]
    %v620 = vld [vmem:[#allocation6 + $0x318] sm:$0xff]
    %v621 = vld [vmem:[#allocation6 + $0x320] sm:$0xff]
    %v622 = vld [vmem:[#allocation6 + $0x328] sm:$0xff]
    %v623 = vld [vmem:[#allocation6 + $0x330] sm:$0xff]
    %v624 = vld [vmem:[#allocation6 + $0x338] sm:$0xff]
    %v625 = vld [vmem:[#allocation6 + $0x340] sm:$0xff]
    %v626 = vld [vmem:[#allocation6 + $0x348] sm:$0xff]
    %v627 = vld [vmem:[#allocation6 + $0x350] sm:$0xff]
    %v628 = vld [vmem:[#allocation6 + $0x358] sm:$0xff]
    %v629 = vld [vmem:[#allocation6 + $0x360] sm:$0xff]
    %v630 = vld [vmem:[#allocation6 + $0x368] sm:$0xff]
    %v631 = vld [vmem:[#allocation6 + $0x370] sm:$0xff]
    %v632 = vld [vmem:[#allocation6 + $0x378] sm:$0xff]
    %v633 = vld [vmem:[#allocation6 + $0x380] sm:$0xff]
    %v634 = vld [vmem:[#allocation6 + $0x388] sm:$0xff]
    %v635 = vld [vmem:[#allocation6 + $0x390] sm:$0xff]
    %v636 = vld [vmem:[#allocation6 + $0x398] sm:$0xff]
    %v637 = vld [vmem:[#allocation6 + $0x3a0] sm:$0xff]
    %v638 = vld [vmem:[#allocation6 + $0x3a8] sm:$0xff]
    %v639 = vld [vmem:[#allocation6 + $0x3b0] sm:$0xff]
    %v640 = vld [vmem:[#allocation6 + $0x3b8] sm:$0xff]
    %v641 = vld [vmem:[#allocation6 + $0x3c0] sm:$0xff]
    %v642 = vld [vmem:[#allocation6 + $0x3c8] sm:$0xff]
    %v643 = vld [vmem:[#allocation6 + $0x3d0] sm:$0xff]
    %v644 = vld [vmem:[#allocation6 + $0x3d8] sm:$0xff]
    %v645 = vld [vmem:[#allocation6 + $0x3e0] sm:$0xff]
    %v646 = vld [vmem:[#allocation6 + $0x3e8] sm:$0xff]
    %v647 = vld [vmem:[#allocation6 + $0x3f0] sm:$0xff]
    %v648 = vld [vmem:[#allocation6 + $0x3f8] sm:$0xff]
    %v649 = vld [vmem:[%s6] sm:$0xf]
    %v651 = vperm.slane %v649, 0
    %v652 = vperm.slane %v649, 1
    %v653 = vperm.slane %v649, 2
    %v654 = vperm.slane %v649, 3
    %659 = vmatpush.msra.mxu0 %v581
    %660 = vmatpush.msra.mxu0 %v577
    %661 = vmatpush.msra.mxu0 %v573
    %662 = vmatpush.msra.mxu0 %v569
    %663 = vmatpush.msra.mxu0 %v565
    %664 = vmatpush.msra.mxu0 %v561
    %665 = vmatpush.msra.mxu0 %v557
    %666 = vmatpush.msra.mxu0 %v553
    %667 = vmatpush.msra.mxu0 %v549
    %668 = vmatpush.msra.mxu0 %v545
    %669 = vmatpush.msra.mxu0 %v541
    %670 = vmatpush.msra.mxu0 %v537
    %671 = vmatpush.msra.mxu0 %v533
    %672 = vmatpush.msra.mxu0 %v529
    %673 = vmatpush.msra.mxu0 %v525
    %674 = vmatpush.msra.mxu0 %v521
    %675 = vmatmul.f32.gmra.mxu0 %v520
    %v676 = vpop.f32.mrf.mxu0
    %v677 = vadd.f32 %v651, %v676
    %678 = vdwg.mxu0
    %679 = vmatpush.msra.mxu0 %v645
    %680 = vmatpush.msra.mxu0 %v641
    %681 = vmatpush.msra.mxu0 %v637
    %682 = vmatpush.msra.mxu0 %v633
    %683 = vmatpush.msra.mxu0 %v629
    %684 = vmatpush.msra.mxu0 %v625
    %685 = vmatpush.msra.mxu0 %v621
    %686 = vmatpush.msra.mxu0 %v617
    %687 = vmatpush.msra.mxu0 %v613
    %688 = vmatpush.msra.mxu0 %v609
    %689 = vmatpush.msra.mxu0 %v605
    %690 = vmatpush.msra.mxu0 %v601
    %691 = vmatpush.msra.mxu0 %v597
    %692 = vmatpush.msra.mxu0 %v593
    %693 = vmatpush.msra.mxu0 %v589
    %694 = vmatpush.msra.mxu0 %v585
    %695 = vmatmul.f32.gmra.mxu0 0.0
    %v696 = vpop.f32.mrf.mxu0
    %v697 = vadd.f32 %v677, %v696
    %698 = vdwg.mxu0
    %699 = vmatpush.msra.mxu0 %v582
    %700 = vmatpush.msra.mxu0 %v578
    %701 = vmatpush.msra.mxu0 %v574
    %702 = vmatpush.msra.mxu0 %v570
    %703 = vmatpush.msra.mxu0 %v566
    %704 = vmatpush.msra.mxu0 %v562
    %705 = vmatpush.msra.mxu0 %v558
    %706 = vmatpush.msra.mxu0 %v554
    %707 = vmatpush.msra.mxu0 %v550
    %708 = vmatpush.msra.mxu0 %v546
    %709 = vmatpush.msra.mxu0 %v542
    %710 = vmatpush.msra.mxu0 %v538
    %711 = vmatpush.msra.mxu0 %v534
    %712 = vmatpush.msra.mxu0 %v530
    %713 = vmatpush.msra.mxu0 %v526
    %714 = vmatpush.msra.mxu0 %v522
    %715 = vmatmul.f32.gmra.mxu0 %v520
    %v716 = vpop.f32.mrf.mxu0
    %v717 = vadd.f32 %v652, %v716
    %718 = vdwg.mxu0
    %719 = vmatpush.msra.mxu0 %v646
    %720 = vmatpush.msra.mxu0 %v642
    %721 = vmatpush.msra.mxu0 %v638
    %722 = vmatpush.msra.mxu0 %v634
    %723 = vmatpush.msra.mxu0 %v630
    %724 = vmatpush.msra.mxu0 %v626
    %725 = vmatpush.msra.mxu0 %v622
    %726 = vmatpush.msra.mxu0 %v618
    %727 = vmatpush.msra.mxu0 %v614
    %728 = vmatpush.msra.mxu0 %v610
    %729 = vmatpush.msra.mxu0 %v606
    %730 = vmatpush.msra.mxu0 %v602
    %731 = vmatpush.msra.mxu0 %v598
    %732 = vmatpush.msra.mxu0 %v594
    %733 = vmatpush.msra.mxu0 %v590
    %734 = vmatpush.msra.mxu0 %v586
    %735 = vmatmul.f32.gmra.mxu0 0.0
    %v736 = vpop.f32.mrf.mxu0
    %v737 = vadd.f32 %v717, %v736
    %738 = vdwg.mxu0
    %739 = vmatpush.msra.mxu0 %v583
    %740 = vmatpush.msra.mxu0 %v579
    %741 = vmatpush.msra.mxu0 %v575
    %742 = vmatpush.msra.mxu0 %v571
    %743 = vmatpush.msra.mxu0 %v567
    %744 = vmatpush.msra.mxu0 %v563
    %745 = vmatpush.msra.mxu0 %v559
    %746 = vmatpush.msra.mxu0 %v555
    %747 = vmatpush.msra.mxu0 %v551
    %748 = vmatpush.msra.mxu0 %v547
    %749 = vmatpush.msra.mxu0 %v543
    %750 = vmatpush.msra.mxu0 %v539
    %751 = vmatpush.msra.mxu0 %v535
    %752 = vmatpush.msra.mxu0 %v531
    %753 = vmatpush.msra.mxu0 %v527
    %754 = vmatpush.msra.mxu0 %v523
    %755 = vmatmul.f32.gmra.mxu0 %v520
    %v756 = vpop.f32.mrf.mxu0
    %v757 = vadd.f32 %v653, %v756
    %758 = vdwg.mxu0
    %759 = vmatpush.msra.mxu0 %v647
    %760 = vmatpush.msra.mxu0 %v643
    %761 = vmatpush.msra.mxu0 %v639
    %762 = vmatpush.msra.mxu0 %v635
    %763 = vmatpush.msra.mxu0 %v631
    %764 = vmatpush.msra.mxu0 %v627
    %765 = vmatpush.msra.mxu0 %v623
    %766 = vmatpush.msra.mxu0 %v619
    %767 = vmatpush.msra.mxu0 %v615
    %768 = vmatpush.msra.mxu0 %v611
    %769 = vmatpush.msra.mxu0 %v607
    %770 = vmatpush.msra.mxu0 %v603
    %771 = vmatpush.msra.mxu0 %v599
    %772 = vmatpush.msra.mxu0 %v595
    %773 = vmatpush.msra.mxu0 %v591
    %774 = vmatpush.msra.mxu0 %v587
    %775 = vmatmul.f32.gmra.mxu0 0.0
    %v776 = vpop.f32.mrf.mxu0
    %v777 = vadd.f32 %v757, %v776
    %778 = vdwg.mxu0
    %779 = vmatpush.msra.mxu0 %v584
    %780 = vmatpush.msra.mxu0 %v580
    %781 = vmatpush.msra.mxu0 %v576
    %782 = vmatpush.msra.mxu0 %v572
    %783 = vmatpush.msra.mxu0 %v568
    %784 = vmatpush.msra.mxu0 %v564
    %785 = vmatpush.msra.mxu0 %v560
    %786 = vmatpush.msra.mxu0 %v556
    %787 = vmatpush.msra.mxu0 %v552
    %788 = vmatpush.msra.mxu0 %v548
    %789 = vmatpush.msra.mxu0 %v544
    %790 = vmatpush.msra.mxu0 %v540
    %791 = vmatpush.msra.mxu0 %v536
    %792 = vmatpush.msra.mxu0 %v532
    %793 = vmatpush.msra.mxu0 %v528
    %794 = vmatpush.msra.mxu0 %v524
    %795 = vmatmul.f32.gmra.mxu0 %v520
    %v796 = vpop.f32.mrf.mxu0
    %v797 = vadd.f32 %v654, %v796
    %798 = vdwg.mxu0
    %799 = vmatpush.msra.mxu0 %v648
    %800 = vmatpush.msra.mxu0 %v644
    %801 = vmatpush.msra.mxu0 %v640
    %802 = vmatpush.msra.mxu0 %v636
    %803 = vmatpush.msra.mxu0 %v632
    %804 = vmatpush.msra.mxu0 %v628
    %805 = vmatpush.msra.mxu0 %v624
    %806 = vmatpush.msra.mxu0 %v620
    %807 = vmatpush.msra.mxu0 %v616
    %808 = vmatpush.msra.mxu0 %v612
    %809 = vmatpush.msra.mxu0 %v608
    %810 = vmatpush.msra.mxu0 %v604
    %811 = vmatpush.msra.mxu0 %v600
    %812 = vmatpush.msra.mxu0 %v596
    %813 = vmatpush.msra.mxu0 %v592
    %814 = vmatpush.msra.mxu0 %v588
    %815 = vmatmul.f32.gmra.mxu0 0.0
    %v816 = vpop.f32.mrf.mxu0
    %v817 = vadd.f32 %v797, %v816
    %818 = vdwg.mxu0
    %v819 = vsub.f32 0.0, %v697
    %v820 = vmul.f32 %v819, 1.442695
    %v821 = vpow.pop %v820
    %v822 = vadd.f32 %v821, 1.0
    %v823 = vrcp.pop %v822
    %v824 = vmul.f32 %v822, %v823
    %v825 = vsub.f32 1.0, %v824
    %v826 = vmul.f32 %v823, %v825
    %v827 = vadd.f32 %v823, %v826
    %vm828 = vweird.f32 %v822
    %vm829 = vweird.f32 %v823
    %vm830 = vmor %vm828, %vm829
    %v831 = vsel %vm830, %v823, %v827
    %v832 = vand.u32 2147483647, %v822
    %vm833 = vcmp.eq.f32.partialorder %v832, 8.507059e+37
    %v834 = vand.u32 %v822, 2147483648
    %v835 = vor.u32 1.1754944e-38, %v834
    %v836 = vsel %vm833, %v835, %v831
    %v837 = vmul.f32 1.0, %v836
    %v838 = vsub.f32 0.0, %v737
    %v839 = vmul.f32 %v838, 1.442695
    %v840 = vpow.pop %v839
    %v841 = vadd.f32 %v840, 1.0
    %v842 = vrcp.pop %v841
    %v843 = vmul.f32 %v841, %v842
    %v844 = vsub.f32 1.0, %v843
    %v845 = vmul.f32 %v842, %v844
    %v846 = vadd.f32 %v842, %v845
    %vm847 = vweird.f32 %v841
    %vm848 = vweird.f32 %v842
    %vm849 = vmor %vm847, %vm848
    %v850 = vsel %vm849, %v842, %v846
    %v851 = vand.u32 2147483647, %v841
    %vm852 = vcmp.eq.f32.partialorder %v851, 8.507059e+37
    %v853 = vand.u32 %v841, 2147483648
    %v854 = vor.u32 1.1754944e-38, %v853
    %v855 = vsel %vm852, %v854, %v850
    %v856 = vmul.f32 1.0, %v855
    %v857 = vtanh.pop %v777
    %v858 = vsub.f32 0.0, %v817
    %v859 = vmul.f32 %v858, 1.442695
    %v860 = vpow.pop %v859
    %v861 = vadd.f32 %v860, 1.0
    %v862 = vrcp.pop %v861
    %v863 = vmul.f32 %v861, %v862
    %v864 = vsub.f32 1.0, %v863
    %v865 = vmul.f32 %v862, %v864
    %v866 = vadd.f32 %v862, %v865
    %vm867 = vweird.f32 %v861
    %vm868 = vweird.f32 %v862
    %vm869 = vmor %vm867, %vm868
    %v870 = vsel %vm869, %v862, %v866
    %v871 = vand.u32 2147483647, %v861
    %vm872 = vcmp.eq.f32.partialorder %v871, 8.507059e+37
    %v873 = vand.u32 %v861, 2147483648
    %v874 = vor.u32 1.1754944e-38, %v873
    %v875 = vsel %vm872, %v874, %v870
    %v876 = vmul.f32 1.0, %v875
    %v877 = vmul.f32 %v856, 0.0
    %v878 = vmul.f32 %v837, %v857
    %v879 = vadd.f32 %v877, %v878
    %v880 = vtanh.pop %v879
    %v881 = vmul.f32 %v876, %v880
    %v882 = vld [vmem:[%s1] sm:$0xf]
    %884 = vset.pattern.permute.xlu0 0
    %885 = vperm.xlu0 %884, %v882
    %v886 = vpop.permute.xlu0 %885
    %v888 = vmul.f32 %v886, %v881
    %v889 = vadd.f32 %v888, 0.0
    %s890 = scalar_lea.vmem [#allocation2], 16
    %v891 = vld [vmem:[%s890] sm:$0xff]
    %v892 = vld [vmem:[%s890 + $0x8] sm:$0xff]
    %893 = vmatpush.msra.mxu0 %v356
    %894 = vmatpush.msra.mxu0 %v352
    %895 = vmatpush.msra.mxu0 %v348
    %896 = vmatpush.msra.mxu0 %v344
    %897 = vmatpush.msra.mxu0 %v340
    %898 = vmatpush.msra.mxu0 %v336
    %899 = vmatpush.msra.mxu0 %v332
    %900 = vmatpush.msra.mxu0 %v328
    %901 = vmatpush.msra.mxu0 %v324
    %902 = vmatpush.msra.mxu0 %v320
    %903 = vmatpush.msra.mxu0 %v316
    %904 = vmatpush.msra.mxu0 %v312
    %905 = vmatpush.msra.mxu0 %v308
    %906 = vmatpush.msra.mxu0 %v304
    %907 = vmatpush.msra.mxu0 %v300
    %908 = vmatpush.msra.mxu0 %v296
    %909 = vmatmul.f32.gmra.mxu0 %v520
    %v910 = vpop.f32.mrf.mxu0
    %v911 = vadd.f32 0.0, %v910
    %912 = vdwg.mxu0
    %913 = vmatpush.msra.mxu0 %v357
    %914 = vmatpush.msra.mxu0 %v353
    %915 = vmatpush.msra.mxu0 %v349
    %916 = vmatpush.msra.mxu0 %v345
    %917 = vmatpush.msra.mxu0 %v341
    %918 = vmatpush.msra.mxu0 %v337
    %919 = vmatpush.msra.mxu0 %v333
    %920 = vmatpush.msra.mxu0 %v329
    %921 = vmatpush.msra.mxu0 %v325
    %922 = vmatpush.msra.mxu0 %v321
    %923 = vmatpush.msra.mxu0 %v317
    %924 = vmatpush.msra.mxu0 %v313
    %925 = vmatpush.msra.mxu0 %v309
    %926 = vmatpush.msra.mxu0 %v305
    %927 = vmatpush.msra.mxu0 %v301
    %928 = vmatpush.msra.mxu0 %v297
    %929 = vmatmul.f32.gmra.mxu0 %v520
    %v930 = vpop.f32.mrf.mxu0
    %v931 = vadd.f32 0.0, %v930
    %932 = vdwg.mxu0
    %933 = vmatpush.msra.mxu0 %v358
    %934 = vmatpush.msra.mxu0 %v354
    %935 = vmatpush.msra.mxu0 %v350
    %936 = vmatpush.msra.mxu0 %v346
    %937 = vmatpush.msra.mxu0 %v342
    %938 = vmatpush.msra.mxu0 %v338
    %939 = vmatpush.msra.mxu0 %v334
    %940 = vmatpush.msra.mxu0 %v330
    %941 = vmatpush.msra.mxu0 %v326
    %942 = vmatpush.msra.mxu0 %v322
    %943 = vmatpush.msra.mxu0 %v318
    %944 = vmatpush.msra.mxu0 %v314
    %945 = vmatpush.msra.mxu0 %v310
    %946 = vmatpush.msra.mxu0 %v306
    %947 = vmatpush.msra.mxu0 %v302
    %948 = vmatpush.msra.mxu0 %v298
    %949 = vmatmul.f32.gmra.mxu0 %v520
    %v950 = vpop.f32.mrf.mxu0
    %v951 = vadd.f32 0.0, %v950
    %952 = vdwg.mxu0
    %953 = vmatpush.msra.mxu0 %v359
    %954 = vmatpush.msra.mxu0 %v355
    %955 = vmatpush.msra.mxu0 %v351
    %956 = vmatpush.msra.mxu0 %v347
    %957 = vmatpush.msra.mxu0 %v343
    %958 = vmatpush.msra.mxu0 %v339
    %959 = vmatpush.msra.mxu0 %v335
    %960 = vmatpush.msra.mxu0 %v331
    %961 = vmatpush.msra.mxu0 %v327
    %962 = vmatpush.msra.mxu0 %v323
    %963 = vmatpush.msra.mxu0 %v319
    %964 = vmatpush.msra.mxu0 %v315
    %965 = vmatpush.msra.mxu0 %v311
    %966 = vmatpush.msra.mxu0 %v307
    %967 = vmatpush.msra.mxu0 %v303
    %968 = vmatpush.msra.mxu0 %v299
    %969 = vmatmul.f32.gmra.mxu0 %v520
    %v970 = vpop.f32.mrf.mxu0
    %v971 = vadd.f32 0.0, %v970
    %972 = vdwg.mxu0
    %v977 = vrot.slane %v931, 4
    %v978 = vrot.slane %v971, 4
    %v979 = vsel %vm245, %v911, %v977
    %v980 = vsel %vm245, %v951, %v978
    %v983 = vadd.f32 %v891, %v979
    %v984 = vadd.f32 %v892, %v980
    %v985 = vsub.f32 0.0, %v983
    %v986 = vmul.f32 %v985, 1.442695
    %v987 = vpow.pop %v986
    %v988 = vadd.f32 %v987, 1.0
    %v989 = vrcp.pop %v988
    %v990 = vmul.f32 %v988, %v989
    %v991 = vsub.f32 1.0, %v990
    %v992 = vmul.f32 %v989, %v991
    %v993 = vadd.f32 %v989, %v992
    %vm994 = vweird.f32 %v988
    %vm995 = vweird.f32 %v989
    %vm996 = vmor %vm994, %vm995
    %v997 = vsel %vm996, %v989, %v993
    %v998 = vand.u32 2147483647, %v988
    %vm999 = vcmp.eq.f32.partialorder %v998, 8.507059e+37
    %v1000 = vand.u32 %v988, 2147483648
    %v1001 = vor.u32 1.1754944e-38, %v1000
    %v1002 = vsel %vm999, %v1001, %v997
    %v1003 = vmul.f32 1.0, %v1002
    %v1005 = vrot.slane %v983, 4
    %v1007 = vsub.f32 0.0, %v1005
    %v1008 = vmul.f32 %v1007, 1.442695
    %v1009 = vpow.pop %v1008
    %v1010 = vadd.f32 %v1009, 1.0
    %v1011 = vrcp.pop %v1010
    %v1012 = vmul.f32 %v1010, %v1011
    %v1013 = vsub.f32 1.0, %v1012
    %v1014 = vmul.f32 %v1011, %v1013
    %v1015 = vadd.f32 %v1011, %v1014
    %vm1016 = vweird.f32 %v1010
    %vm1017 = vweird.f32 %v1011
    %vm1018 = vmor %vm1016, %vm1017
    %v1019 = vsel %vm1018, %v1011, %v1015
    %v1020 = vand.u32 2147483647, %v1010
    %vm1021 = vcmp.eq.f32.partialorder %v1020, 8.507059e+37
    %v1022 = vand.u32 %v1010, 2147483648
    %v1023 = vor.u32 1.1754944e-38, %v1022
    %v1024 = vsel %vm1021, %v1023, %v1019
    %v1025 = vmul.f32 1.0, %v1024
    %v1026 = vtanh.pop %v984
    %v1028 = vrot.slane %v984, 4
    %v1030 = vsub.f32 0.0, %v1028
    %v1031 = vmul.f32 %v1030, 1.442695
    %v1032 = vpow.pop %v1031
    %v1033 = vadd.f32 %v1032, 1.0
    %v1034 = vrcp.pop %v1033
    %v1035 = vmul.f32 %v1033, %v1034
    %v1036 = vsub.f32 1.0, %v1035
    %v1037 = vmul.f32 %v1034, %v1036
    %v1038 = vadd.f32 %v1034, %v1037
    %vm1039 = vweird.f32 %v1033
    %vm1040 = vweird.f32 %v1034
    %vm1041 = vmor %vm1039, %vm1040
    %v1042 = vsel %vm1041, %v1034, %v1038
    %v1043 = vand.u32 2147483647, %v1033
    %vm1044 = vcmp.eq.f32.partialorder %v1043, 8.507059e+37
    %v1045 = vand.u32 %v1033, 2147483648
    %v1046 = vor.u32 1.1754944e-38, %v1045
    %v1047 = vsel %vm1044, %v1046, %v1042
    %v1048 = vmul.f32 1.0, %v1047
    %v1049 = vmul.f32 %v1025, %v518
    %v1050 = vmul.f32 %v1003, %v1026
    %v1051 = vadd.f32 %v1049, %v1050
    %v1052 = vtanh.pop %v1051
    %v1053 = vmul.f32 %v1048, %v1052
    %1054 = vmatpush.msra.mxu0 %v581
    %1055 = vmatpush.msra.mxu0 %v577
    %1056 = vmatpush.msra.mxu0 %v573
    %1057 = vmatpush.msra.mxu0 %v569
    %1058 = vmatpush.msra.mxu0 %v565
    %1059 = vmatpush.msra.mxu0 %v561
    %1060 = vmatpush.msra.mxu0 %v557
    %1061 = vmatpush.msra.mxu0 %v553
    %1062 = vmatpush.msra.mxu0 %v549
    %1063 = vmatpush.msra.mxu0 %v545
    %1064 = vmatpush.msra.mxu0 %v541
    %1065 = vmatpush.msra.mxu0 %v537
    %1066 = vmatpush.msra.mxu0 %v533
    %1067 = vmatpush.msra.mxu0 %v529
    %1068 = vmatpush.msra.mxu0 %v525
    %1069 = vmatpush.msra.mxu0 %v521
    %1070 = vmatmul.f32.gmra.mxu0 %v1053
    %v1071 = vpop.f32.mrf.mxu0
    %v1072 = vadd.f32 %v651, %v1071
    %1073 = vdwg.mxu0
    %1074 = vmatpush.msra.mxu0 %v645
    %1075 = vmatpush.msra.mxu0 %v641
    %1076 = vmatpush.msra.mxu0 %v637
    %1077 = vmatpush.msra.mxu0 %v633
    %1078 = vmatpush.msra.mxu0 %v629
    %1079 = vmatpush.msra.mxu0 %v625
    %1080 = vmatpush.msra.mxu0 %v621
    %1081 = vmatpush.msra.mxu0 %v617
    %1082 = vmatpush.msra.mxu0 %v613
    %1083 = vmatpush.msra.mxu0 %v609
    %1084 = vmatpush.msra.mxu0 %v605
    %1085 = vmatpush.msra.mxu0 %v601
    %1086 = vmatpush.msra.mxu0 %v597
    %1087 = vmatpush.msra.mxu0 %v593
    %1088 = vmatpush.msra.mxu0 %v589
    %1089 = vmatpush.msra.mxu0 %v585
    %1090 = vmatmul.f32.gmra.mxu0 %v881
    %v1091 = vpop.f32.mrf.mxu0
    %v1092 = vadd.f32 %v1072, %v1091
    %1093 = vdwg.mxu0
    %1094 = vmatpush.msra.mxu0 %v582
    %1095 = vmatpush.msra.mxu0 %v578
    %1096 = vmatpush.msra.mxu0 %v574
    %1097 = vmatpush.msra.mxu0 %v570
    %1098 = vmatpush.msra.mxu0 %v566
    %1099 = vmatpush.msra.mxu0 %v562
    %1100 = vmatpush.msra.mxu0 %v558
    %1101 = vmatpush.msra.mxu0 %v554
    %1102 = vmatpush.msra.mxu0 %v550
    %1103 = vmatpush.msra.mxu0 %v546
    %1104 = vmatpush.msra.mxu0 %v542
    %1105 = vmatpush.msra.mxu0 %v538
    %1106 = vmatpush.msra.mxu0 %v534
    %1107 = vmatpush.msra.mxu0 %v530
    %1108 = vmatpush.msra.mxu0 %v526
    %1109 = vmatpush.msra.mxu0 %v522
    %1110 = vmatmul.f32.gmra.mxu0 %v1053
    %v1111 = vpop.f32.mrf.mxu0
    %v1112 = vadd.f32 %v652, %v1111
    %1113 = vdwg.mxu0
    %1114 = vmatpush.msra.mxu0 %v646
    %1115 = vmatpush.msra.mxu0 %v642
    %1116 = vmatpush.msra.mxu0 %v638
    %1117 = vmatpush.msra.mxu0 %v634
    %1118 = vmatpush.msra.mxu0 %v630
    %1119 = vmatpush.msra.mxu0 %v626
    %1120 = vmatpush.msra.mxu0 %v622
    %1121 = vmatpush.msra.mxu0 %v618
    %1122 = vmatpush.msra.mxu0 %v614
    %1123 = vmatpush.msra.mxu0 %v610
    %1124 = vmatpush.msra.mxu0 %v606
    %1125 = vmatpush.msra.mxu0 %v602
    %1126 = vmatpush.msra.mxu0 %v598
    %1127 = vmatpush.msra.mxu0 %v594
    %1128 = vmatpush.msra.mxu0 %v590
    %1129 = vmatpush.msra.mxu0 %v586
    %1130 = vmatmul.f32.gmra.mxu0 %v881
    %v1131 = vpop.f32.mrf.mxu0
    %v1132 = vadd.f32 %v1112, %v1131
    %1133 = vdwg.mxu0
    %1134 = vmatpush.msra.mxu0 %v583
    %1135 = vmatpush.msra.mxu0 %v579
    %1136 = vmatpush.msra.mxu0 %v575
    %1137 = vmatpush.msra.mxu0 %v571
    %1138 = vmatpush.msra.mxu0 %v567
    %1139 = vmatpush.msra.mxu0 %v563
    %1140 = vmatpush.msra.mxu0 %v559
    %1141 = vmatpush.msra.mxu0 %v555
    %1142 = vmatpush.msra.mxu0 %v551
    %1143 = vmatpush.msra.mxu0 %v547
    %1144 = vmatpush.msra.mxu0 %v543
    %1145 = vmatpush.msra.mxu0 %v539
    %1146 = vmatpush.msra.mxu0 %v535
    %1147 = vmatpush.msra.mxu0 %v531
    %1148 = vmatpush.msra.mxu0 %v527
    %1149 = vmatpush.msra.mxu0 %v523
    %1150 = vmatmul.f32.gmra.mxu0 %v1053
    %v1151 = vpop.f32.mrf.mxu0
    %v1152 = vadd.f32 %v653, %v1151
    %1153 = vdwg.mxu0
    %1154 = vmatpush.msra.mxu0 %v647
    %1155 = vmatpush.msra.mxu0 %v643
    %1156 = vmatpush.msra.mxu0 %v639
    %1157 = vmatpush.msra.mxu0 %v635
    %1158 = vmatpush.msra.mxu0 %v631
    %1159 = vmatpush.msra.mxu0 %v627
    %1160 = vmatpush.msra.mxu0 %v623
    %1161 = vmatpush.msra.mxu0 %v619
    %1162 = vmatpush.msra.mxu0 %v615
    %1163 = vmatpush.msra.mxu0 %v611
    %1164 = vmatpush.msra.mxu0 %v607
    %1165 = vmatpush.msra.mxu0 %v603
    %1166 = vmatpush.msra.mxu0 %v599
    %1167 = vmatpush.msra.mxu0 %v595
    %1168 = vmatpush.msra.mxu0 %v591
    %1169 = vmatpush.msra.mxu0 %v587
    %1170 = vmatmul.f32.gmra.mxu0 %v881
    %v1171 = vpop.f32.mrf.mxu0
    %v1172 = vadd.f32 %v1152, %v1171
    %1173 = vdwg.mxu0
    %1174 = vmatpush.msra.mxu0 %v584
    %1175 = vmatpush.msra.mxu0 %v580
    %1176 = vmatpush.msra.mxu0 %v576
    %1177 = vmatpush.msra.mxu0 %v572
    %1178 = vmatpush.msra.mxu0 %v568
    %1179 = vmatpush.msra.mxu0 %v564
    %1180 = vmatpush.msra.mxu0 %v560
    %1181 = vmatpush.msra.mxu0 %v556
    %1182 = vmatpush.msra.mxu0 %v552
    %1183 = vmatpush.msra.mxu0 %v548
    %1184 = vmatpush.msra.mxu0 %v544
    %1185 = vmatpush.msra.mxu0 %v540
    %1186 = vmatpush.msra.mxu0 %v536
    %1187 = vmatpush.msra.mxu0 %v532
    %1188 = vmatpush.msra.mxu0 %v528
    %1189 = vmatpush.msra.mxu0 %v524
    %1190 = vmatmul.f32.gmra.mxu0 %v1053
    %v1191 = vpop.f32.mrf.mxu0
    %v1192 = vadd.f32 %v654, %v1191
    %1193 = vdwg.mxu0
    %1194 = vmatpush.msra.mxu0 %v648
    %1195 = vmatpush.msra.mxu0 %v644
    %1196 = vmatpush.msra.mxu0 %v640
    %1197 = vmatpush.msra.mxu0 %v636
    %1198 = vmatpush.msra.mxu0 %v632
    %1199 = vmatpush.msra.mxu0 %v628
    %1200 = vmatpush.msra.mxu0 %v624
    %1201 = vmatpush.msra.mxu0 %v620
    %1202 = vmatpush.msra.mxu0 %v616
    %1203 = vmatpush.msra.mxu0 %v612
    %1204 = vmatpush.msra.mxu0 %v608
    %1205 = vmatpush.msra.mxu0 %v604
    %1206 = vmatpush.msra.mxu0 %v600
    %1207 = vmatpush.msra.mxu0 %v596
    %1208 = vmatpush.msra.mxu0 %v592
    %1209 = vmatpush.msra.mxu0 %v588
    %1210 = vmatmul.f32.gmra.mxu0 %v881
    %v1211 = vpop.f32.mrf.mxu0
    %v1212 = vadd.f32 %v1192, %v1211
    %1213 = vdwg.mxu0
    %v1214 = vsub.f32 0.0, %v1092
    %v1215 = vmul.f32 %v1214, 1.442695
    %v1216 = vpow.pop %v1215
    %v1217 = vadd.f32 %v1216, 1.0
    %v1218 = vrcp.pop %v1217
    %v1219 = vmul.f32 %v1217, %v1218
    %v1220 = vsub.f32 1.0, %v1219
    %v1221 = vmul.f32 %v1218, %v1220
    %v1222 = vadd.f32 %v1218, %v1221
    %vm1223 = vweird.f32 %v1217
    %vm1224 = vweird.f32 %v1218
    %vm1225 = vmor %vm1223, %vm1224
    %v1226 = vsel %vm1225, %v1218, %v1222
    %v1227 = vand.u32 2147483647, %v1217
    %vm1228 = vcmp.eq.f32.partialorder %v1227, 8.507059e+37
    %v1229 = vand.u32 %v1217, 2147483648
    %v1230 = vor.u32 1.1754944e-38, %v1229
    %v1231 = vsel %vm1228, %v1230, %v1226
    %v1232 = vmul.f32 1.0, %v1231
    %v1233 = vsub.f32 0.0, %v1132
    %v1234 = vmul.f32 %v1233, 1.442695
    %v1235 = vpow.pop %v1234
    %v1236 = vadd.f32 %v1235, 1.0
    %v1237 = vrcp.pop %v1236
    %v1238 = vmul.f32 %v1236, %v1237
    %v1239 = vsub.f32 1.0, %v1238
    %v1240 = vmul.f32 %v1237, %v1239
    %v1241 = vadd.f32 %v1237, %v1240
    %vm1242 = vweird.f32 %v1236
    %vm1243 = vweird.f32 %v1237
    %vm1244 = vmor %vm1242, %vm1243
    %v1245 = vsel %vm1244, %v1237, %v1241
    %v1246 = vand.u32 2147483647, %v1236
    %vm1247 = vcmp.eq.f32.partialorder %v1246, 8.507059e+37
    %v1248 = vand.u32 %v1236, 2147483648
    %v1249 = vor.u32 1.1754944e-38, %v1248
    %v1250 = vsel %vm1247, %v1249, %v1245
    %v1251 = vmul.f32 1.0, %v1250
    %v1252 = vtanh.pop %v1172
    %v1253 = vsub.f32 0.0, %v1212
    %v1254 = vmul.f32 %v1253, 1.442695
    %v1255 = vpow.pop %v1254
    %v1256 = vadd.f32 %v1255, 1.0
    %v1257 = vrcp.pop %v1256
    %v1258 = vmul.f32 %v1256, %v1257
    %v1259 = vsub.f32 1.0, %v1258
    %v1260 = vmul.f32 %v1257, %v1259
    %v1261 = vadd.f32 %v1257, %v1260
    %vm1262 = vweird.f32 %v1256
    %vm1263 = vweird.f32 %v1257
    %vm1264 = vmor %vm1262, %vm1263
    %v1265 = vsel %vm1264, %v1257, %v1261
    %v1266 = vand.u32 2147483647, %v1256
    %vm1267 = vcmp.eq.f32.partialorder %v1266, 8.507059e+37
    %v1268 = vand.u32 %v1256, 2147483648
    %v1269 = vor.u32 1.1754944e-38, %v1268
    %v1270 = vsel %vm1267, %v1269, %v1265
    %v1271 = vmul.f32 1.0, %v1270
    %v1272 = vmul.f32 %v1251, %v879
    %v1273 = vmul.f32 %v1232, %v1252
    %v1274 = vadd.f32 %v1272, %v1273
    %v1275 = vtanh.pop %v1274
    %v1276 = vmul.f32 %v1271, %v1275
    %s1277 = scalar_lea.vmem %s1, 4
    %v1278 = vld [vmem:[%s1277] sm:$0xf]
    %1280 = vset.pattern.permute.xlu0 0
    %1281 = vperm.xlu0 %1280, %v1278
    %v1282 = vpop.permute.xlu0 %1281
    %v1284 = vmul.f32 %v1282, %v1276
    %v1285 = vadd.f32 %v889, %v1284
    %s1286 = scalar_lea.vmem [#allocation2], 32
    %v1287 = vld [vmem:[%s1286] sm:$0xff]
    %v1288 = vld [vmem:[%s1286 + $0x8] sm:$0xff]
    %1289 = vmatpush.msra.mxu0 %v356
    %1290 = vmatpush.msra.mxu0 %v352
    %1291 = vmatpush.msra.mxu0 %v348
    %1292 = vmatpush.msra.mxu0 %v344
    %1293 = vmatpush.msra.mxu0 %v340
    %1294 = vmatpush.msra.mxu0 %v336
    %1295 = vmatpush.msra.mxu0 %v332
    %1296 = vmatpush.msra.mxu0 %v328
    %1297 = vmatpush.msra.mxu0 %v324
    %1298 = vmatpush.msra.mxu0 %v320
    %1299 = vmatpush.msra.mxu0 %v316
    %1300 = vmatpush.msra.mxu0 %v312
    %1301 = vmatpush.msra.mxu0 %v308
    %1302 = vmatpush.msra.mxu0 %v304
    %1303 = vmatpush.msra.mxu0 %v300
    %1304 = vmatpush.msra.mxu0 %v296
    %1305 = vmatmul.f32.gmra.mxu0 %v1053
    %v1306 = vpop.f32.mrf.mxu0
    %v1307 = vadd.f32 0.0, %v1306
    %1308 = vdwg.mxu0
    %1309 = vmatpush.msra.mxu0 %v357
    %1310 = vmatpush.msra.mxu0 %v353
    %1311 = vmatpush.msra.mxu0 %v349
    %1312 = vmatpush.msra.mxu0 %v345
    %1313 = vmatpush.msra.mxu0 %v341
    %1314 = vmatpush.msra.mxu0 %v337
    %1315 = vmatpush.msra.mxu0 %v333
    %1316 = vmatpush.msra.mxu0 %v329
    %1317 = vmatpush.msra.mxu0 %v325
    %1318 = vmatpush.msra.mxu0 %v321
    %1319 = vmatpush.msra.mxu0 %v317
    %1320 = vmatpush.msra.mxu0 %v313
    %1321 = vmatpush.msra.mxu0 %v309
    %1322 = vmatpush.msra.mxu0 %v305
    %1323 = vmatpush.msra.mxu0 %v301
    %1324 = vmatpush.msra.mxu0 %v297
    %1325 = vmatmul.f32.gmra.mxu0 %v1053
    %v1326 = vpop.f32.mrf.mxu0
    %v1327 = vadd.f32 0.0, %v1326
    %1328 = vdwg.mxu0
    %1329 = vmatpush.msra.mxu0 %v358
    %1330 = vmatpush.msra.mxu0 %v354
    %1331 = vmatpush.msra.mxu0 %v350
    %1332 = vmatpush.msra.mxu0 %v346
    %1333 = vmatpush.msra.mxu0 %v342
    %1334 = vmatpush.msra.mxu0 %v338
    %1335 = vmatpush.msra.mxu0 %v334
    %1336 = vmatpush.msra.mxu0 %v330
    %1337 = vmatpush.msra.mxu0 %v326
    %1338 = vmatpush.msra.mxu0 %v322
    %1339 = vmatpush.msra.mxu0 %v318
    %1340 = vmatpush.msra.mxu0 %v314
    %1341 = vmatpush.msra.mxu0 %v310
    %1342 = vmatpush.msra.mxu0 %v306
    %1343 = vmatpush.msra.mxu0 %v302
    %1344 = vmatpush.msra.mxu0 %v298
    %1345 = vmatmul.f32.gmra.mxu0 %v1053
    %v1346 = vpop.f32.mrf.mxu0
    %v1347 = vadd.f32 0.0, %v1346
    %1348 = vdwg.mxu0
    %1349 = vmatpush.msra.mxu0 %v359
    %1350 = vmatpush.msra.mxu0 %v355
    %1351 = vmatpush.msra.mxu0 %v351
    %1352 = vmatpush.msra.mxu0 %v347
    %1353 = vmatpush.msra.mxu0 %v343
    %1354 = vmatpush.msra.mxu0 %v339
    %1355 = vmatpush.msra.mxu0 %v335
    %1356 = vmatpush.msra.mxu0 %v331
    %1357 = vmatpush.msra.mxu0 %v327
    %1358 = vmatpush.msra.mxu0 %v323
    %1359 = vmatpush.msra.mxu0 %v319
    %1360 = vmatpush.msra.mxu0 %v315
    %1361 = vmatpush.msra.mxu0 %v311
    %1362 = vmatpush.msra.mxu0 %v307
    %1363 = vmatpush.msra.mxu0 %v303
    %1364 = vmatpush.msra.mxu0 %v299
    %1365 = vmatmul.f32.gmra.mxu0 %v1053
    %v1366 = vpop.f32.mrf.mxu0
    %v1367 = vadd.f32 0.0, %v1366
    %1368 = vdwg.mxu0
    %v1373 = vrot.slane %v1327, 4
    %v1374 = vrot.slane %v1367, 4
    %v1375 = vsel %vm245, %v1307, %v1373
    %v1376 = vsel %vm245, %v1347, %v1374
    %v1379 = vadd.f32 %v1287, %v1375
    %v1380 = vadd.f32 %v1288, %v1376
    %v1381 = vsub.f32 0.0, %v1379
    %v1382 = vmul.f32 %v1381, 1.442695
    %v1383 = vpow.pop %v1382
    %v1384 = vadd.f32 %v1383, 1.0
    %v1385 = vrcp.pop %v1384
    %v1386 = vmul.f32 %v1384, %v1385
    %v1387 = vsub.f32 1.0, %v1386
    %v1388 = vmul.f32 %v1385, %v1387
    %v1389 = vadd.f32 %v1385, %v1388
    %vm1390 = vweird.f32 %v1384
    %vm1391 = vweird.f32 %v1385
    %vm1392 = vmor %vm1390, %vm1391
    %v1393 = vsel %vm1392, %v1385, %v1389
    %v1394 = vand.u32 2147483647, %v1384
    %vm1395 = vcmp.eq.f32.partialorder %v1394, 8.507059e+37
    %v1396 = vand.u32 %v1384, 2147483648
    %v1397 = vor.u32 1.1754944e-38, %v1396
    %v1398 = vsel %vm1395, %v1397, %v1393
    %v1399 = vmul.f32 1.0, %v1398
    %v1401 = vrot.slane %v1379, 4
    %v1403 = vsub.f32 0.0, %v1401
    %v1404 = vmul.f32 %v1403, 1.442695
    %v1405 = vpow.pop %v1404
    %v1406 = vadd.f32 %v1405, 1.0
    %v1407 = vrcp.pop %v1406
    %v1408 = vmul.f32 %v1406, %v1407
    %v1409 = vsub.f32 1.0, %v1408
    %v1410 = vmul.f32 %v1407, %v1409
    %v1411 = vadd.f32 %v1407, %v1410
    %vm1412 = vweird.f32 %v1406
    %vm1413 = vweird.f32 %v1407
    %vm1414 = vmor %vm1412, %vm1413
    %v1415 = vsel %vm1414, %v1407, %v1411
    %v1416 = vand.u32 2147483647, %v1406
    %vm1417 = vcmp.eq.f32.partialorder %v1416, 8.507059e+37
    %v1418 = vand.u32 %v1406, 2147483648
    %v1419 = vor.u32 1.1754944e-38, %v1418
    %v1420 = vsel %vm1417, %v1419, %v1415
    %v1421 = vmul.f32 1.0, %v1420
    %v1422 = vtanh.pop %v1380
    %v1424 = vrot.slane %v1380, 4
    %v1426 = vsub.f32 0.0, %v1424
    %v1427 = vmul.f32 %v1426, 1.442695
    %v1428 = vpow.pop %v1427
    %v1429 = vadd.f32 %v1428, 1.0
    %v1430 = vrcp.pop %v1429
    %v1431 = vmul.f32 %v1429, %v1430
    %v1432 = vsub.f32 1.0, %v1431
    %v1433 = vmul.f32 %v1430, %v1432
    %v1434 = vadd.f32 %v1430, %v1433
    %vm1435 = vweird.f32 %v1429
    %vm1436 = vweird.f32 %v1430
    %vm1437 = vmor %vm1435, %vm1436
    %v1438 = vsel %vm1437, %v1430, %v1434
    %v1439 = vand.u32 2147483647, %v1429
    %vm1440 = vcmp.eq.f32.partialorder %v1439, 8.507059e+37
    %v1441 = vand.u32 %v1429, 2147483648
    %v1442 = vor.u32 1.1754944e-38, %v1441
    %v1443 = vsel %vm1440, %v1442, %v1438
    %v1444 = vmul.f32 1.0, %v1443
    %v1445 = vmul.f32 %v1421, %v1051
    %v1446 = vmul.f32 %v1399, %v1422
    %v1447 = vadd.f32 %v1445, %v1446
    %v1448 = vtanh.pop %v1447
    %v1449 = vmul.f32 %v1444, %v1448
    %1450 = vmatpush.msra.mxu0 %v581
    %1451 = vmatpush.msra.mxu0 %v577
    %1452 = vmatpush.msra.mxu0 %v573
    %1453 = vmatpush.msra.mxu0 %v569
    %1454 = vmatpush.msra.mxu0 %v565
    %1455 = vmatpush.msra.mxu0 %v561
    %1456 = vmatpush.msra.mxu0 %v557
    %1457 = vmatpush.msra.mxu0 %v553
    %1458 = vmatpush.msra.mxu0 %v549
    %1459 = vmatpush.msra.mxu0 %v545
    %1460 = vmatpush.msra.mxu0 %v541
    %1461 = vmatpush.msra.mxu0 %v537
    %1462 = vmatpush.msra.mxu0 %v533
    %1463 = vmatpush.msra.mxu0 %v529
    %1464 = vmatpush.msra.mxu0 %v525
    %1465 = vmatpush.msra.mxu0 %v521
    %1466 = vmatmul.f32.gmra.mxu0 %v1449
    %v1467 = vpop.f32.mrf.mxu0
    %v1468 = vadd.f32 %v651, %v1467
    %1469 = vdwg.mxu0
    %1470 = vmatpush.msra.mxu0 %v645
    %1471 = vmatpush.msra.mxu0 %v641
    %1472 = vmatpush.msra.mxu0 %v637
    %1473 = vmatpush.msra.mxu0 %v633
    %1474 = vmatpush.msra.mxu0 %v629
    %1475 = vmatpush.msra.mxu0 %v625
    %1476 = vmatpush.msra.mxu0 %v621
    %1477 = vmatpush.msra.mxu0 %v617
    %1478 = vmatpush.msra.mxu0 %v613
    %1479 = vmatpush.msra.mxu0 %v609
    %1480 = vmatpush.msra.mxu0 %v605
    %1481 = vmatpush.msra.mxu0 %v601
    %1482 = vmatpush.msra.mxu0 %v597
    %1483 = vmatpush.msra.mxu0 %v593
    %1484 = vmatpush.msra.mxu0 %v589
    %1485 = vmatpush.msra.mxu0 %v585
    %1486 = vmatmul.f32.gmra.mxu0 %v1276
    %v1487 = vpop.f32.mrf.mxu0
    %v1488 = vadd.f32 %v1468, %v1487
    %1489 = vdwg.mxu0
    %1490 = vmatpush.msra.mxu0 %v582
    %1491 = vmatpush.msra.mxu0 %v578
    %1492 = vmatpush.msra.mxu0 %v574
    %1493 = vmatpush.msra.mxu0 %v570
    %1494 = vmatpush.msra.mxu0 %v566
    %1495 = vmatpush.msra.mxu0 %v562
    %1496 = vmatpush.msra.mxu0 %v558
    %1497 = vmatpush.msra.mxu0 %v554
    %1498 = vmatpush.msra.mxu0 %v550
    %1499 = vmatpush.msra.mxu0 %v546
    %1500 = vmatpush.msra.mxu0 %v542
    %1501 = vmatpush.msra.mxu0 %v538
    %1502 = vmatpush.msra.mxu0 %v534
    %1503 = vmatpush.msra.mxu0 %v530
    %1504 = vmatpush.msra.mxu0 %v526
    %1505 = vmatpush.msra.mxu0 %v522
    %1506 = vmatmul.f32.gmra.mxu0 %v1449
    %v1507 = vpop.f32.mrf.mxu0
    %v1508 = vadd.f32 %v652, %v1507
    %1509 = vdwg.mxu0
    %1510 = vmatpush.msra.mxu0 %v646
    %1511 = vmatpush.msra.mxu0 %v642
    %1512 = vmatpush.msra.mxu0 %v638
    %1513 = vmatpush.msra.mxu0 %v634
    %1514 = vmatpush.msra.mxu0 %v630
    %1515 = vmatpush.msra.mxu0 %v626
    %1516 = vmatpush.msra.mxu0 %v622
    %1517 = vmatpush.msra.mxu0 %v618
    %1518 = vmatpush.msra.mxu0 %v614
    %1519 = vmatpush.msra.mxu0 %v610
    %1520 = vmatpush.msra.mxu0 %v606
    %1521 = vmatpush.msra.mxu0 %v602
    %1522 = vmatpush.msra.mxu0 %v598
    %1523 = vmatpush.msra.mxu0 %v594
    %1524 = vmatpush.msra.mxu0 %v590
    %1525 = vmatpush.msra.mxu0 %v586
    %1526 = vmatmul.f32.gmra.mxu0 %v1276
    %v1527 = vpop.f32.mrf.mxu0
    %v1528 = vadd.f32 %v1508, %v1527
    %1529 = vdwg.mxu0
    %1530 = vmatpush.msra.mxu0 %v583
    %1531 = vmatpush.msra.mxu0 %v579
    %1532 = vmatpush.msra.mxu0 %v575
    %1533 = vmatpush.msra.mxu0 %v571
    %1534 = vmatpush.msra.mxu0 %v567
    %1535 = vmatpush.msra.mxu0 %v563
    %1536 = vmatpush.msra.mxu0 %v559
    %1537 = vmatpush.msra.mxu0 %v555
    %1538 = vmatpush.msra.mxu0 %v551
    %1539 = vmatpush.msra.mxu0 %v547
    %1540 = vmatpush.msra.mxu0 %v543
    %1541 = vmatpush.msra.mxu0 %v539
    %1542 = vmatpush.msra.mxu0 %v535
    %1543 = vmatpush.msra.mxu0 %v531
    %1544 = vmatpush.msra.mxu0 %v527
    %1545 = vmatpush.msra.mxu0 %v523
    %1546 = vmatmul.f32.gmra.mxu0 %v1449
    %v1547 = vpop.f32.mrf.mxu0
    %v1548 = vadd.f32 %v653, %v1547
    %1549 = vdwg.mxu0
    %1550 = vmatpush.msra.mxu0 %v647
    %1551 = vmatpush.msra.mxu0 %v643
    %1552 = vmatpush.msra.mxu0 %v639
    %1553 = vmatpush.msra.mxu0 %v635
    %1554 = vmatpush.msra.mxu0 %v631
    %1555 = vmatpush.msra.mxu0 %v627
    %1556 = vmatpush.msra.mxu0 %v623
    %1557 = vmatpush.msra.mxu0 %v619
    %1558 = vmatpush.msra.mxu0 %v615
    %1559 = vmatpush.msra.mxu0 %v611
    %1560 = vmatpush.msra.mxu0 %v607
    %1561 = vmatpush.msra.mxu0 %v603
    %1562 = vmatpush.msra.mxu0 %v599
    %1563 = vmatpush.msra.mxu0 %v595
    %1564 = vmatpush.msra.mxu0 %v591
    %1565 = vmatpush.msra.mxu0 %v587
    %1566 = vmatmul.f32.gmra.mxu0 %v1276
    %v1567 = vpop.f32.mrf.mxu0
    %v1568 = vadd.f32 %v1548, %v1567
    %1569 = vdwg.mxu0
    %1570 = vmatpush.msra.mxu0 %v584
    %1571 = vmatpush.msra.mxu0 %v580
    %1572 = vmatpush.msra.mxu0 %v576
    %1573 = vmatpush.msra.mxu0 %v572
    %1574 = vmatpush.msra.mxu0 %v568
    %1575 = vmatpush.msra.mxu0 %v564
    %1576 = vmatpush.msra.mxu0 %v560
    %1577 = vmatpush.msra.mxu0 %v556
    %1578 = vmatpush.msra.mxu0 %v552
    %1579 = vmatpush.msra.mxu0 %v548
    %1580 = vmatpush.msra.mxu0 %v544
    %1581 = vmatpush.msra.mxu0 %v540
    %1582 = vmatpush.msra.mxu0 %v536
    %1583 = vmatpush.msra.mxu0 %v532
    %1584 = vmatpush.msra.mxu0 %v528
    %1585 = vmatpush.msra.mxu0 %v524
    %1586 = vmatmul.f32.gmra.mxu0 %v1449
    %v1587 = vpop.f32.mrf.mxu0
    %v1588 = vadd.f32 %v654, %v1587
    %1589 = vdwg.mxu0
    %1590 = vmatpush.msra.mxu0 %v648
    %1591 = vmatpush.msra.mxu0 %v644
    %1592 = vmatpush.msra.mxu0 %v640
    %1593 = vmatpush.msra.mxu0 %v636
    %1594 = vmatpush.msra.mxu0 %v632
    %1595 = vmatpush.msra.mxu0 %v628
    %1596 = vmatpush.msra.mxu0 %v624
    %1597 = vmatpush.msra.mxu0 %v620
    %1598 = vmatpush.msra.mxu0 %v616
    %1599 = vmatpush.msra.mxu0 %v612
    %1600 = vmatpush.msra.mxu0 %v608
    %1601 = vmatpush.msra.mxu0 %v604
    %1602 = vmatpush.msra.mxu0 %v600
    %1603 = vmatpush.msra.mxu0 %v596
    %1604 = vmatpush.msra.mxu0 %v592
    %1605 = vmatpush.msra.mxu0 %v588
    %1606 = vmatmul.f32.gmra.mxu0 %v1276
    %v1607 = vpop.f32.mrf.mxu0
    %v1608 = vadd.f32 %v1588, %v1607
    %1609 = vdwg.mxu0
    %v1610 = vsub.f32 0.0, %v1488
    %v1611 = vmul.f32 %v1610, 1.442695
    %v1612 = vpow.pop %v1611
    %v1613 = vadd.f32 %v1612, 1.0
    %v1614 = vrcp.pop %v1613
    %v1615 = vmul.f32 %v1613, %v1614
    %v1616 = vsub.f32 1.0, %v1615
    %v1617 = vmul.f32 %v1614, %v1616
    %v1618 = vadd.f32 %v1614, %v1617
    %vm1619 = vweird.f32 %v1613
    %vm1620 = vweird.f32 %v1614
    %vm1621 = vmor %vm1619, %vm1620
    %v1622 = vsel %vm1621, %v1614, %v1618
    %v1623 = vand.u32 2147483647, %v1613
    %vm1624 = vcmp.eq.f32.partialorder %v1623, 8.507059e+37
    %v1625 = vand.u32 %v1613, 2147483648
    %v1626 = vor.u32 1.1754944e-38, %v1625
    %v1627 = vsel %vm1624, %v1626, %v1622
    %v1628 = vmul.f32 1.0, %v1627
    %v1629 = vsub.f32 0.0, %v1528
    %v1630 = vmul.f32 %v1629, 1.442695
    %v1631 = vpow.pop %v1630
    %v1632 = vadd.f32 %v1631, 1.0
    %v1633 = vrcp.pop %v1632
    %v1634 = vmul.f32 %v1632, %v1633
    %v1635 = vsub.f32 1.0, %v1634
    %v1636 = vmul.f32 %v1633, %v1635
    %v1637 = vadd.f32 %v1633, %v1636
    %vm1638 = vweird.f32 %v1632
    %vm1639 = vweird.f32 %v1633
    %vm1640 = vmor %vm1638, %vm1639
    %v1641 = vsel %vm1640, %v1633, %v1637
    %v1642 = vand.u32 2147483647, %v1632
    %vm1643 = vcmp.eq.f32.partialorder %v1642, 8.507059e+37
    %v1644 = vand.u32 %v1632, 2147483648
    %v1645 = vor.u32 1.1754944e-38, %v1644
    %v1646 = vsel %vm1643, %v1645, %v1641
    %v1647 = vmul.f32 1.0, %v1646
    %v1648 = vtanh.pop %v1568
    %v1649 = vsub.f32 0.0, %v1608
    %v1650 = vmul.f32 %v1649, 1.442695
    %v1651 = vpow.pop %v1650
    %v1652 = vadd.f32 %v1651, 1.0
    %v1653 = vrcp.pop %v1652
    %v1654 = vmul.f32 %v1652, %v1653
    %v1655 = vsub.f32 1.0, %v1654
    %v1656 = vmul.f32 %v1653, %v1655
    %v1657 = vadd.f32 %v1653, %v1656
    %vm1658 = vweird.f32 %v1652
    %vm1659 = vweird.f32 %v1653
    %vm1660 = vmor %vm1658, %vm1659
    %v1661 = vsel %vm1660, %v1653, %v1657
    %v1662 = vand.u32 2147483647, %v1652
    %vm1663 = vcmp.eq.f32.partialorder %v1662, 8.507059e+37
    %v1664 = vand.u32 %v1652, 2147483648
    %v1665 = vor.u32 1.1754944e-38, %v1664
    %v1666 = vsel %vm1663, %v1665, %v1661
    %v1667 = vmul.f32 1.0, %v1666
    %v1668 = vmul.f32 %v1647, %v1274
    %v1669 = vmul.f32 %v1628, %v1648
    %v1670 = vadd.f32 %v1668, %v1669
    %v1671 = vtanh.pop %v1670
    %v1672 = vmul.f32 %v1667, %v1671
    %s1673 = scalar_lea.vmem %s1, 8
    %v1674 = vld [vmem:[%s1673] sm:$0xf]
    %1676 = vset.pattern.permute.xlu0 0
    %1677 = vperm.xlu0 %1676, %v1674
    %v1678 = vpop.permute.xlu0 %1677
    %v1680 = vmul.f32 %v1678, %v1672
    %v1681 = vadd.f32 %v1285, %v1680
    %s1682 = scalar_lea.vmem [#allocation2], 48
    %v1683 = vld [vmem:[%s1682] sm:$0xff]
    %v1684 = vld [vmem:[%s1682 + $0x8] sm:$0xff]
    %1685 = vmatpush.msra.mxu0 %v356
    %1686 = vmatpush.msra.mxu0 %v352
    %1687 = vmatpush.msra.mxu0 %v348
    %1688 = vmatpush.msra.mxu0 %v344
    %1689 = vmatpush.msra.mxu0 %v340
    %1690 = vmatpush.msra.mxu0 %v336
    %1691 = vmatpush.msra.mxu0 %v332
    %1692 = vmatpush.msra.mxu0 %v328
    %1693 = vmatpush.msra.mxu0 %v324
    %1694 = vmatpush.msra.mxu0 %v320
    %1695 = vmatpush.msra.mxu0 %v316
    %1696 = vmatpush.msra.mxu0 %v312
    %1697 = vmatpush.msra.mxu0 %v308
    %1698 = vmatpush.msra.mxu0 %v304
    %1699 = vmatpush.msra.mxu0 %v300
    %1700 = vmatpush.msra.mxu0 %v296
    %1701 = vmatmul.f32.gmra.mxu0 %v1449
    %v1702 = vpop.f32.mrf.mxu0
    %v1703 = vadd.f32 0.0, %v1702
    %1704 = vdwg.mxu0
    %1705 = vmatpush.msra.mxu0 %v357
    %1706 = vmatpush.msra.mxu0 %v353
    %1707 = vmatpush.msra.mxu0 %v349
    %1708 = vmatpush.msra.mxu0 %v345
    %1709 = vmatpush.msra.mxu0 %v341
    %1710 = vmatpush.msra.mxu0 %v337
    %1711 = vmatpush.msra.mxu0 %v333
    %1712 = vmatpush.msra.mxu0 %v329
    %1713 = vmatpush.msra.mxu0 %v325
    %1714 = vmatpush.msra.mxu0 %v321
    %1715 = vmatpush.msra.mxu0 %v317
    %1716 = vmatpush.msra.mxu0 %v313
    %1717 = vmatpush.msra.mxu0 %v309
    %1718 = vmatpush.msra.mxu0 %v305
    %1719 = vmatpush.msra.mxu0 %v301
    %1720 = vmatpush.msra.mxu0 %v297
    %1721 = vmatmul.f32.gmra.mxu0 %v1449
    %v1722 = vpop.f32.mrf.mxu0
    %v1723 = vadd.f32 0.0, %v1722
    %1724 = vdwg.mxu0
    %1725 = vmatpush.msra.mxu0 %v358
    %1726 = vmatpush.msra.mxu0 %v354
    %1727 = vmatpush.msra.mxu0 %v350
    %1728 = vmatpush.msra.mxu0 %v346
    %1729 = vmatpush.msra.mxu0 %v342
    %1730 = vmatpush.msra.mxu0 %v338
    %1731 = vmatpush.msra.mxu0 %v334
    %1732 = vmatpush.msra.mxu0 %v330
    %1733 = vmatpush.msra.mxu0 %v326
    %1734 = vmatpush.msra.mxu0 %v322
    %1735 = vmatpush.msra.mxu0 %v318
    %1736 = vmatpush.msra.mxu0 %v314
    %1737 = vmatpush.msra.mxu0 %v310
    %1738 = vmatpush.msra.mxu0 %v306
    %1739 = vmatpush.msra.mxu0 %v302
    %1740 = vmatpush.msra.mxu0 %v298
    %1741 = vmatmul.f32.gmra.mxu0 %v1449
    %v1742 = vpop.f32.mrf.mxu0
    %v1743 = vadd.f32 0.0, %v1742
    %1744 = vdwg.mxu0
    %1745 = vmatpush.msra.mxu0 %v359
    %1746 = vmatpush.msra.mxu0 %v355
    %1747 = vmatpush.msra.mxu0 %v351
    %1748 = vmatpush.msra.mxu0 %v347
    %1749 = vmatpush.msra.mxu0 %v343
    %1750 = vmatpush.msra.mxu0 %v339
    %1751 = vmatpush.msra.mxu0 %v335
    %1752 = vmatpush.msra.mxu0 %v331
    %1753 = vmatpush.msra.mxu0 %v327
    %1754 = vmatpush.msra.mxu0 %v323
    %1755 = vmatpush.msra.mxu0 %v319
    %1756 = vmatpush.msra.mxu0 %v315
    %1757 = vmatpush.msra.mxu0 %v311
    %1758 = vmatpush.msra.mxu0 %v307
    %1759 = vmatpush.msra.mxu0 %v303
    %1760 = vmatpush.msra.mxu0 %v299
    %1761 = vmatmul.f32.gmra.mxu0 %v1449
    %v1762 = vpop.f32.mrf.mxu0
    %v1763 = vadd.f32 0.0, %v1762
    %1764 = vdwg.mxu0
    %v1769 = vrot.slane %v1723, 4
    %v1770 = vrot.slane %v1763, 4
    %v1771 = vsel %vm245, %v1703, %v1769
    %v1772 = vsel %vm245, %v1743, %v1770
    %v1775 = vadd.f32 %v1683, %v1771
    %v1776 = vadd.f32 %v1684, %v1772
    %v1777 = vsub.f32 0.0, %v1775
    %v1778 = vmul.f32 %v1777, 1.442695
    %v1779 = vpow.pop %v1778
    %v1780 = vadd.f32 %v1779, 1.0
    %v1781 = vrcp.pop %v1780
    %v1782 = vmul.f32 %v1780, %v1781
    %v1783 = vsub.f32 1.0, %v1782
    %v1784 = vmul.f32 %v1781, %v1783
    %v1785 = vadd.f32 %v1781, %v1784
    %vm1786 = vweird.f32 %v1780
    %vm1787 = vweird.f32 %v1781
    %vm1788 = vmor %vm1786, %vm1787
    %v1789 = vsel %vm1788, %v1781, %v1785
    %v1790 = vand.u32 2147483647, %v1780
    %vm1791 = vcmp.eq.f32.partialorder %v1790, 8.507059e+37
    %v1792 = vand.u32 %v1780, 2147483648
    %v1793 = vor.u32 1.1754944e-38, %v1792
    %v1794 = vsel %vm1791, %v1793, %v1789
    %v1795 = vmul.f32 1.0, %v1794
    %v1797 = vrot.slane %v1775, 4
    %v1799 = vsub.f32 0.0, %v1797
    %v1800 = vmul.f32 %v1799, 1.442695
    %v1801 = vpow.pop %v1800
    %v1802 = vadd.f32 %v1801, 1.0
    %v1803 = vrcp.pop %v1802
    %v1804 = vmul.f32 %v1802, %v1803
    %v1805 = vsub.f32 1.0, %v1804
    %v1806 = vmul.f32 %v1803, %v1805
    %v1807 = vadd.f32 %v1803, %v1806
    %vm1808 = vweird.f32 %v1802
    %vm1809 = vweird.f32 %v1803
    %vm1810 = vmor %vm1808, %vm1809
    %v1811 = vsel %vm1810, %v1803, %v1807
    %v1812 = vand.u32 2147483647, %v1802
    %vm1813 = vcmp.eq.f32.partialorder %v1812, 8.507059e+37
    %v1814 = vand.u32 %v1802, 2147483648
    %v1815 = vor.u32 1.1754944e-38, %v1814
    %v1816 = vsel %vm1813, %v1815, %v1811
    %v1817 = vmul.f32 1.0, %v1816
    %v1818 = vtanh.pop %v1776
    %v1820 = vrot.slane %v1776, 4
    %v1822 = vsub.f32 0.0, %v1820
    %v1823 = vmul.f32 %v1822, 1.442695
    %v1824 = vpow.pop %v1823
    %v1825 = vadd.f32 %v1824, 1.0
    %v1826 = vrcp.pop %v1825
    %v1827 = vmul.f32 %v1825, %v1826
    %v1828 = vsub.f32 1.0, %v1827
    %v1829 = vmul.f32 %v1826, %v1828
    %v1830 = vadd.f32 %v1826, %v1829
    %vm1831 = vweird.f32 %v1825
    %vm1832 = vweird.f32 %v1826
    %vm1833 = vmor %vm1831, %vm1832
    %v1834 = vsel %vm1833, %v1826, %v1830
    %v1835 = vand.u32 2147483647, %v1825
    %vm1836 = vcmp.eq.f32.partialorder %v1835, 8.507059e+37
    %v1837 = vand.u32 %v1825, 2147483648
    %v1838 = vor.u32 1.1754944e-38, %v1837
    %v1839 = vsel %vm1836, %v1838, %v1834
    %v1840 = vmul.f32 1.0, %v1839
    %v1841 = vmul.f32 %v1817, %v1447
    %v1842 = vmul.f32 %v1795, %v1818
    %v1843 = vadd.f32 %v1841, %v1842
    %v1844 = vtanh.pop %v1843
    %v1845 = vmul.f32 %v1840, %v1844
    %1846 = vmatpush.msra.mxu0 %v581
    %1847 = vmatpush.msra.mxu0 %v577
    %1848 = vmatpush.msra.mxu0 %v573
    %1849 = vmatpush.msra.mxu0 %v569
    %1850 = vmatpush.msra.mxu0 %v565
    %1851 = vmatpush.msra.mxu0 %v561
    %1852 = vmatpush.msra.mxu0 %v557
    %1853 = vmatpush.msra.mxu0 %v553
    %1854 = vmatpush.msra.mxu0 %v549
    %1855 = vmatpush.msra.mxu0 %v545
    %1856 = vmatpush.msra.mxu0 %v541
    %1857 = vmatpush.msra.mxu0 %v537
    %1858 = vmatpush.msra.mxu0 %v533
    %1859 = vmatpush.msra.mxu0 %v529
    %1860 = vmatpush.msra.mxu0 %v525
    %1861 = vmatpush.msra.mxu0 %v521
    %1862 = vmatmul.f32.gmra.mxu0 %v1845
    %v1863 = vpop.f32.mrf.mxu0
    %v1864 = vadd.f32 %v651, %v1863
    %1865 = vdwg.mxu0
    %1866 = vmatpush.msra.mxu0 %v645
    %1867 = vmatpush.msra.mxu0 %v641
    %1868 = vmatpush.msra.mxu0 %v637
    %1869 = vmatpush.msra.mxu0 %v633
    %1870 = vmatpush.msra.mxu0 %v629
    %1871 = vmatpush.msra.mxu0 %v625
    %1872 = vmatpush.msra.mxu0 %v621
    %1873 = vmatpush.msra.mxu0 %v617
    %1874 = vmatpush.msra.mxu0 %v613
    %1875 = vmatpush.msra.mxu0 %v609
    %1876 = vmatpush.msra.mxu0 %v605
    %1877 = vmatpush.msra.mxu0 %v601
    %1878 = vmatpush.msra.mxu0 %v597
    %1879 = vmatpush.msra.mxu0 %v593
    %1880 = vmatpush.msra.mxu0 %v589
    %1881 = vmatpush.msra.mxu0 %v585
    %1882 = vmatmul.f32.gmra.mxu0 %v1672
    %v1883 = vpop.f32.mrf.mxu0
    %v1884 = vadd.f32 %v1864, %v1883
    %1885 = vdwg.mxu0
    %1886 = vmatpush.msra.mxu0 %v582
    %1887 = vmatpush.msra.mxu0 %v578
    %1888 = vmatpush.msra.mxu0 %v574
    %1889 = vmatpush.msra.mxu0 %v570
    %1890 = vmatpush.msra.mxu0 %v566
    %1891 = vmatpush.msra.mxu0 %v562
    %1892 = vmatpush.msra.mxu0 %v558
    %1893 = vmatpush.msra.mxu0 %v554
    %1894 = vmatpush.msra.mxu0 %v550
    %1895 = vmatpush.msra.mxu0 %v546
    %1896 = vmatpush.msra.mxu0 %v542
    %1897 = vmatpush.msra.mxu0 %v538
    %1898 = vmatpush.msra.mxu0 %v534
    %1899 = vmatpush.msra.mxu0 %v530
    %1900 = vmatpush.msra.mxu0 %v526
    %1901 = vmatpush.msra.mxu0 %v522
    %1902 = vmatmul.f32.gmra.mxu0 %v1845
    %v1903 = vpop.f32.mrf.mxu0
    %v1904 = vadd.f32 %v652, %v1903
    %1905 = vdwg.mxu0
    %1906 = vmatpush.msra.mxu0 %v646
    %1907 = vmatpush.msra.mxu0 %v642
    %1908 = vmatpush.msra.mxu0 %v638
    %1909 = vmatpush.msra.mxu0 %v634
    %1910 = vmatpush.msra.mxu0 %v630
    %1911 = vmatpush.msra.mxu0 %v626
    %1912 = vmatpush.msra.mxu0 %v622
    %1913 = vmatpush.msra.mxu0 %v618
    %1914 = vmatpush.msra.mxu0 %v614
    %1915 = vmatpush.msra.mxu0 %v610
    %1916 = vmatpush.msra.mxu0 %v606
    %1917 = vmatpush.msra.mxu0 %v602
    %1918 = vmatpush.msra.mxu0 %v598
    %1919 = vmatpush.msra.mxu0 %v594
    %1920 = vmatpush.msra.mxu0 %v590
    %1921 = vmatpush.msra.mxu0 %v586
    %1922 = vmatmul.f32.gmra.mxu0 %v1672
    %v1923 = vpop.f32.mrf.mxu0
    %v1924 = vadd.f32 %v1904, %v1923
    %1925 = vdwg.mxu0
    %1926 = vmatpush.msra.mxu0 %v583
    %1927 = vmatpush.msra.mxu0 %v579
    %1928 = vmatpush.msra.mxu0 %v575
    %1929 = vmatpush.msra.mxu0 %v571
    %1930 = vmatpush.msra.mxu0 %v567
    %1931 = vmatpush.msra.mxu0 %v563
    %1932 = vmatpush.msra.mxu0 %v559
    %1933 = vmatpush.msra.mxu0 %v555
    %1934 = vmatpush.msra.mxu0 %v551
    %1935 = vmatpush.msra.mxu0 %v547
    %1936 = vmatpush.msra.mxu0 %v543
    %1937 = vmatpush.msra.mxu0 %v539
    %1938 = vmatpush.msra.mxu0 %v535
    %1939 = vmatpush.msra.mxu0 %v531
    %1940 = vmatpush.msra.mxu0 %v527
    %1941 = vmatpush.msra.mxu0 %v523
    %1942 = vmatmul.f32.gmra.mxu0 %v1845
    %v1943 = vpop.f32.mrf.mxu0
    %v1944 = vadd.f32 %v653, %v1943
    %1945 = vdwg.mxu0
    %1946 = vmatpush.msra.mxu0 %v647
    %1947 = vmatpush.msra.mxu0 %v643
    %1948 = vmatpush.msra.mxu0 %v639
    %1949 = vmatpush.msra.mxu0 %v635
    %1950 = vmatpush.msra.mxu0 %v631
    %1951 = vmatpush.msra.mxu0 %v627
    %1952 = vmatpush.msra.mxu0 %v623
    %1953 = vmatpush.msra.mxu0 %v619
    %1954 = vmatpush.msra.mxu0 %v615
    %1955 = vmatpush.msra.mxu0 %v611
    %1956 = vmatpush.msra.mxu0 %v607
    %1957 = vmatpush.msra.mxu0 %v603
    %1958 = vmatpush.msra.mxu0 %v599
    %1959 = vmatpush.msra.mxu0 %v595
    %1960 = vmatpush.msra.mxu0 %v591
    %1961 = vmatpush.msra.mxu0 %v587
    %1962 = vmatmul.f32.gmra.mxu0 %v1672
    %v1963 = vpop.f32.mrf.mxu0
    %v1964 = vadd.f32 %v1944, %v1963
    %1965 = vdwg.mxu0
    %1966 = vmatpush.msra.mxu0 %v584
    %1967 = vmatpush.msra.mxu0 %v580
    %1968 = vmatpush.msra.mxu0 %v576
    %1969 = vmatpush.msra.mxu0 %v572
    %1970 = vmatpush.msra.mxu0 %v568
    %1971 = vmatpush.msra.mxu0 %v564
    %1972 = vmatpush.msra.mxu0 %v560
    %1973 = vmatpush.msra.mxu0 %v556
    %1974 = vmatpush.msra.mxu0 %v552
    %1975 = vmatpush.msra.mxu0 %v548
    %1976 = vmatpush.msra.mxu0 %v544
    %1977 = vmatpush.msra.mxu0 %v540
    %1978 = vmatpush.msra.mxu0 %v536
    %1979 = vmatpush.msra.mxu0 %v532
    %1980 = vmatpush.msra.mxu0 %v528
    %1981 = vmatpush.msra.mxu0 %v524
    %1982 = vmatmul.f32.gmra.mxu0 %v1845
    %v1983 = vpop.f32.mrf.mxu0
    %v1984 = vadd.f32 %v654, %v1983
    %1985 = vdwg.mxu0
    %1986 = vmatpush.msra.mxu0 %v648
    %1987 = vmatpush.msra.mxu0 %v644
    %1988 = vmatpush.msra.mxu0 %v640
    %1989 = vmatpush.msra.mxu0 %v636
    %1990 = vmatpush.msra.mxu0 %v632
    %1991 = vmatpush.msra.mxu0 %v628
    %1992 = vmatpush.msra.mxu0 %v624
    %1993 = vmatpush.msra.mxu0 %v620
    %1994 = vmatpush.msra.mxu0 %v616
    %1995 = vmatpush.msra.mxu0 %v612
    %1996 = vmatpush.msra.mxu0 %v608
    %1997 = vmatpush.msra.mxu0 %v604
    %1998 = vmatpush.msra.mxu0 %v600
    %1999 = vmatpush.msra.mxu0 %v596
    %2000 = vmatpush.msra.mxu0 %v592
    %2001 = vmatpush.msra.mxu0 %v588
    %2002 = vmatmul.f32.gmra.mxu0 %v1672
    %v2003 = vpop.f32.mrf.mxu0
    %v2004 = vadd.f32 %v1984, %v2003
    %2005 = vdwg.mxu0
    %v2006 = vsub.f32 0.0, %v1884
    %v2007 = vmul.f32 %v2006, 1.442695
    %v2008 = vpow.pop %v2007
    %v2009 = vadd.f32 %v2008, 1.0
    %v2010 = vrcp.pop %v2009
    %v2011 = vmul.f32 %v2009, %v2010
    %v2012 = vsub.f32 1.0, %v2011
    %v2013 = vmul.f32 %v2010, %v2012
    %v2014 = vadd.f32 %v2010, %v2013
    %vm2015 = vweird.f32 %v2009
    %vm2016 = vweird.f32 %v2010
    %vm2017 = vmor %vm2015, %vm2016
    %v2018 = vsel %vm2017, %v2010, %v2014
    %v2019 = vand.u32 2147483647, %v2009
    %vm2020 = vcmp.eq.f32.partialorder %v2019, 8.507059e+37
    %v2021 = vand.u32 %v2009, 2147483648
    %v2022 = vor.u32 1.1754944e-38, %v2021
    %v2023 = vsel %vm2020, %v2022, %v2018
    %v2024 = vmul.f32 1.0, %v2023
    %v2025 = vsub.f32 0.0, %v1924
    %v2026 = vmul.f32 %v2025, 1.442695
    %v2027 = vpow.pop %v2026
    %v2028 = vadd.f32 %v2027, 1.0
    %v2029 = vrcp.pop %v2028
    %v2030 = vmul.f32 %v2028, %v2029
    %v2031 = vsub.f32 1.0, %v2030
    %v2032 = vmul.f32 %v2029, %v2031
    %v2033 = vadd.f32 %v2029, %v2032
    %vm2034 = vweird.f32 %v2028
    %vm2035 = vweird.f32 %v2029
    %vm2036 = vmor %vm2034, %vm2035
    %v2037 = vsel %vm2036, %v2029, %v2033
    %v2038 = vand.u32 2147483647, %v2028
    %vm2039 = vcmp.eq.f32.partialorder %v2038, 8.507059e+37
    %v2040 = vand.u32 %v2028, 2147483648
    %v2041 = vor.u32 1.1754944e-38, %v2040
    %v2042 = vsel %vm2039, %v2041, %v2037
    %v2043 = vmul.f32 1.0, %v2042
    %v2044 = vtanh.pop %v1964
    %v2045 = vsub.f32 0.0, %v2004
    %v2046 = vmul.f32 %v2045, 1.442695
    %v2047 = vpow.pop %v2046
    %v2048 = vadd.f32 %v2047, 1.0
    %v2049 = vrcp.pop %v2048
    %v2050 = vmul.f32 %v2048, %v2049
    %v2051 = vsub.f32 1.0, %v2050
    %v2052 = vmul.f32 %v2049, %v2051
    %v2053 = vadd.f32 %v2049, %v2052
    %vm2054 = vweird.f32 %v2048
    %vm2055 = vweird.f32 %v2049
    %vm2056 = vmor %vm2054, %vm2055
    %v2057 = vsel %vm2056, %v2049, %v2053
    %v2058 = vand.u32 2147483647, %v2048
    %vm2059 = vcmp.eq.f32.partialorder %v2058, 8.507059e+37
    %v2060 = vand.u32 %v2048, 2147483648
    %v2061 = vor.u32 1.1754944e-38, %v2060
    %v2062 = vsel %vm2059, %v2061, %v2057
    %v2063 = vmul.f32 1.0, %v2062
    %v2064 = vmul.f32 %v2043, %v1670
    %v2065 = vmul.f32 %v2024, %v2044
    %v2066 = vadd.f32 %v2064, %v2065
    %v2067 = vtanh.pop %v2066
    %v2068 = vmul.f32 %v2063, %v2067
    %s2069 = scalar_lea.vmem %s1, 12
    %v2070 = vld [vmem:[%s2069] sm:$0xf]
    %2072 = vset.pattern.permute.xlu0 0
    %2073 = vperm.xlu0 %2072, %v2070
    %v2074 = vpop.permute.xlu0 %2073
    %v2076 = vmul.f32 %v2074, %v2068
    %v2077 = vadd.f32 %v1681, %v2076
    %s2078 = scalar_lea.vmem [#allocation2], 64
    %v2079 = vld [vmem:[%s2078] sm:$0xff]
    %v2080 = vld [vmem:[%s2078 + $0x8] sm:$0xff]
    %2081 = vmatpush.msra.mxu0 %v356
    %2082 = vmatpush.msra.mxu0 %v352
    %2083 = vmatpush.msra.mxu0 %v348
    %2084 = vmatpush.msra.mxu0 %v344
    %2085 = vmatpush.msra.mxu0 %v340
    %2086 = vmatpush.msra.mxu0 %v336
    %2087 = vmatpush.msra.mxu0 %v332
    %2088 = vmatpush.msra.mxu0 %v328
    %2089 = vmatpush.msra.mxu0 %v324
    %2090 = vmatpush.msra.mxu0 %v320
    %2091 = vmatpush.msra.mxu0 %v316
    %2092 = vmatpush.msra.mxu0 %v312
    %2093 = vmatpush.msra.mxu0 %v308
    %2094 = vmatpush.msra.mxu0 %v304
    %2095 = vmatpush.msra.mxu0 %v300
    %2096 = vmatpush.msra.mxu0 %v296
    %2097 = vmatmul.f32.gmra.mxu0 %v1845
    %v2098 = vpop.f32.mrf.mxu0
    %v2099 = vadd.f32 0.0, %v2098
    %2100 = vdwg.mxu0
    %2101 = vmatpush.msra.mxu0 %v357
    %2102 = vmatpush.msra.mxu0 %v353
    %2103 = vmatpush.msra.mxu0 %v349
    %2104 = vmatpush.msra.mxu0 %v345
    %2105 = vmatpush.msra.mxu0 %v341
    %2106 = vmatpush.msra.mxu0 %v337
    %2107 = vmatpush.msra.mxu0 %v333
    %2108 = vmatpush.msra.mxu0 %v329
    %2109 = vmatpush.msra.mxu0 %v325
    %2110 = vmatpush.msra.mxu0 %v321
    %2111 = vmatpush.msra.mxu0 %v317
    %2112 = vmatpush.msra.mxu0 %v313
    %2113 = vmatpush.msra.mxu0 %v309
    %2114 = vmatpush.msra.mxu0 %v305
    %2115 = vmatpush.msra.mxu0 %v301
    %2116 = vmatpush.msra.mxu0 %v297
    %2117 = vmatmul.f32.gmra.mxu0 %v1845
    %v2118 = vpop.f32.mrf.mxu0
    %v2119 = vadd.f32 0.0, %v2118
    %2120 = vdwg.mxu0
    %2121 = vmatpush.msra.mxu0 %v358
    %2122 = vmatpush.msra.mxu0 %v354
    %2123 = vmatpush.msra.mxu0 %v350
    %2124 = vmatpush.msra.mxu0 %v346
    %2125 = vmatpush.msra.mxu0 %v342
    %2126 = vmatpush.msra.mxu0 %v338
    %2127 = vmatpush.msra.mxu0 %v334
    %2128 = vmatpush.msra.mxu0 %v330
    %2129 = vmatpush.msra.mxu0 %v326
    %2130 = vmatpush.msra.mxu0 %v322
    %2131 = vmatpush.msra.mxu0 %v318
    %2132 = vmatpush.msra.mxu0 %v314
    %2133 = vmatpush.msra.mxu0 %v310
    %2134 = vmatpush.msra.mxu0 %v306
    %2135 = vmatpush.msra.mxu0 %v302
    %2136 = vmatpush.msra.mxu0 %v298
    %2137 = vmatmul.f32.gmra.mxu0 %v1845
    %v2138 = vpop.f32.mrf.mxu0
    %v2139 = vadd.f32 0.0, %v2138
    %2140 = vdwg.mxu0
    %2141 = vmatpush.msra.mxu0 %v359
    %2142 = vmatpush.msra.mxu0 %v355
    %2143 = vmatpush.msra.mxu0 %v351
    %2144 = vmatpush.msra.mxu0 %v347
    %2145 = vmatpush.msra.mxu0 %v343
    %2146 = vmatpush.msra.mxu0 %v339
    %2147 = vmatpush.msra.mxu0 %v335
    %2148 = vmatpush.msra.mxu0 %v331
    %2149 = vmatpush.msra.mxu0 %v327
    %2150 = vmatpush.msra.mxu0 %v323
    %2151 = vmatpush.msra.mxu0 %v319
    %2152 = vmatpush.msra.mxu0 %v315
    %2153 = vmatpush.msra.mxu0 %v311
    %2154 = vmatpush.msra.mxu0 %v307
    %2155 = vmatpush.msra.mxu0 %v303
    %2156 = vmatpush.msra.mxu0 %v299
    %2157 = vmatmul.f32.gmra.mxu0 %v1845
    %v2158 = vpop.f32.mrf.mxu0
    %v2159 = vadd.f32 0.0, %v2158
    %2160 = vdwg.mxu0
    %v2165 = vrot.slane %v2119, 4
    %v2166 = vrot.slane %v2159, 4
    %v2167 = vsel %vm245, %v2099, %v2165
    %v2168 = vsel %vm245, %v2139, %v2166
    %v2171 = vadd.f32 %v2079, %v2167
    %v2172 = vadd.f32 %v2080, %v2168
    %v2173 = vsub.f32 0.0, %v2171
    %v2174 = vmul.f32 %v2173, 1.442695
    %v2175 = vpow.pop %v2174
    %v2176 = vadd.f32 %v2175, 1.0
    %v2177 = vrcp.pop %v2176
    %v2178 = vmul.f32 %v2176, %v2177
    %v2179 = vsub.f32 1.0, %v2178
    %v2180 = vmul.f32 %v2177, %v2179
    %v2181 = vadd.f32 %v2177, %v2180
    %vm2182 = vweird.f32 %v2176
    %vm2183 = vweird.f32 %v2177
    %vm2184 = vmor %vm2182, %vm2183
    %v2185 = vsel %vm2184, %v2177, %v2181
    %v2186 = vand.u32 2147483647, %v2176
    %vm2187 = vcmp.eq.f32.partialorder %v2186, 8.507059e+37
    %v2188 = vand.u32 %v2176, 2147483648
    %v2189 = vor.u32 1.1754944e-38, %v2188
    %v2190 = vsel %vm2187, %v2189, %v2185
    %v2191 = vmul.f32 1.0, %v2190
    %v2193 = vrot.slane %v2171, 4
    %v2195 = vsub.f32 0.0, %v2193
    %v2196 = vmul.f32 %v2195, 1.442695
    %v2197 = vpow.pop %v2196
    %v2198 = vadd.f32 %v2197, 1.0
    %v2199 = vrcp.pop %v2198
    %v2200 = vmul.f32 %v2198, %v2199
    %v2201 = vsub.f32 1.0, %v2200
    %v2202 = vmul.f32 %v2199, %v2201
    %v2203 = vadd.f32 %v2199, %v2202
    %vm2204 = vweird.f32 %v2198
    %vm2205 = vweird.f32 %v2199
    %vm2206 = vmor %vm2204, %vm2205
    %v2207 = vsel %vm2206, %v2199, %v2203
    %v2208 = vand.u32 2147483647, %v2198
    %vm2209 = vcmp.eq.f32.partialorder %v2208, 8.507059e+37
    %v2210 = vand.u32 %v2198, 2147483648
    %v2211 = vor.u32 1.1754944e-38, %v2210
    %v2212 = vsel %vm2209, %v2211, %v2207
    %v2213 = vmul.f32 1.0, %v2212
    %v2214 = vtanh.pop %v2172
    %v2216 = vrot.slane %v2172, 4
    %v2218 = vsub.f32 0.0, %v2216
    %v2219 = vmul.f32 %v2218, 1.442695
    %v2220 = vpow.pop %v2219
    %v2221 = vadd.f32 %v2220, 1.0
    %v2222 = vrcp.pop %v2221
    %v2223 = vmul.f32 %v2221, %v2222
    %v2224 = vsub.f32 1.0, %v2223
    %v2225 = vmul.f32 %v2222, %v2224
    %v2226 = vadd.f32 %v2222, %v2225
    %vm2227 = vweird.f32 %v2221
    %vm2228 = vweird.f32 %v2222
    %vm2229 = vmor %vm2227, %vm2228
    %v2230 = vsel %vm2229, %v2222, %v2226
    %v2231 = vand.u32 2147483647, %v2221
    %vm2232 = vcmp.eq.f32.partialorder %v2231, 8.507059e+37
    %v2233 = vand.u32 %v2221, 2147483648
    %v2234 = vor.u32 1.1754944e-38, %v2233
    %v2235 = vsel %vm2232, %v2234, %v2230
    %v2236 = vmul.f32 1.0, %v2235
    %v2237 = vmul.f32 %v2213, %v1843
    %v2238 = vmul.f32 %v2191, %v2214
    %v2239 = vadd.f32 %v2237, %v2238
    %v2240 = vtanh.pop %v2239
    %v2241 = vmul.f32 %v2236, %v2240
    %2242 = vmatpush.msra.mxu0 %v581
    %2243 = vmatpush.msra.mxu0 %v577
    %2244 = vmatpush.msra.mxu0 %v573
    %2245 = vmatpush.msra.mxu0 %v569
    %2246 = vmatpush.msra.mxu0 %v565
    %2247 = vmatpush.msra.mxu0 %v561
    %2248 = vmatpush.msra.mxu0 %v557
    %2249 = vmatpush.msra.mxu0 %v553
    %2250 = vmatpush.msra.mxu0 %v549
    %2251 = vmatpush.msra.mxu0 %v545
    %2252 = vmatpush.msra.mxu0 %v541
    %2253 = vmatpush.msra.mxu0 %v537
    %2254 = vmatpush.msra.mxu0 %v533
    %2255 = vmatpush.msra.mxu0 %v529
    %2256 = vmatpush.msra.mxu0 %v525
    %2257 = vmatpush.msra.mxu0 %v521
    %2258 = vmatmul.f32.gmra.mxu0 %v2241
    %v2259 = vpop.f32.mrf.mxu0
    %v2260 = vadd.f32 %v651, %v2259
    %2261 = vdwg.mxu0
    %2262 = vmatpush.msra.mxu0 %v645
    %2263 = vmatpush.msra.mxu0 %v641
    %2264 = vmatpush.msra.mxu0 %v637
    %2265 = vmatpush.msra.mxu0 %v633
    %2266 = vmatpush.msra.mxu0 %v629
    %2267 = vmatpush.msra.mxu0 %v625
    %2268 = vmatpush.msra.mxu0 %v621
    %2269 = vmatpush.msra.mxu0 %v617
    %2270 = vmatpush.msra.mxu0 %v613
    %2271 = vmatpush.msra.mxu0 %v609
    %2272 = vmatpush.msra.mxu0 %v605
    %2273 = vmatpush.msra.mxu0 %v601
    %2274 = vmatpush.msra.mxu0 %v597
    %2275 = vmatpush.msra.mxu0 %v593
    %2276 = vmatpush.msra.mxu0 %v589
    %2277 = vmatpush.msra.mxu0 %v585
    %2278 = vmatmul.f32.gmra.mxu0 %v2068
    %v2279 = vpop.f32.mrf.mxu0
    %v2280 = vadd.f32 %v2260, %v2279
    %2281 = vdwg.mxu0
    %2282 = vmatpush.msra.mxu0 %v582
    %2283 = vmatpush.msra.mxu0 %v578
    %2284 = vmatpush.msra.mxu0 %v574
    %2285 = vmatpush.msra.mxu0 %v570
    %2286 = vmatpush.msra.mxu0 %v566
    %2287 = vmatpush.msra.mxu0 %v562
    %2288 = vmatpush.msra.mxu0 %v558
    %2289 = vmatpush.msra.mxu0 %v554
    %2290 = vmatpush.msra.mxu0 %v550
    %2291 = vmatpush.msra.mxu0 %v546
    %2292 = vmatpush.msra.mxu0 %v542
    %2293 = vmatpush.msra.mxu0 %v538
    %2294 = vmatpush.msra.mxu0 %v534
    %2295 = vmatpush.msra.mxu0 %v530
    %2296 = vmatpush.msra.mxu0 %v526
    %2297 = vmatpush.msra.mxu0 %v522
    %2298 = vmatmul.f32.gmra.mxu0 %v2241
    %v2299 = vpop.f32.mrf.mxu0
    %v2300 = vadd.f32 %v652, %v2299
    %2301 = vdwg.mxu0
    %2302 = vmatpush.msra.mxu0 %v646
    %2303 = vmatpush.msra.mxu0 %v642
    %2304 = vmatpush.msra.mxu0 %v638
    %2305 = vmatpush.msra.mxu0 %v634
    %2306 = vmatpush.msra.mxu0 %v630
    %2307 = vmatpush.msra.mxu0 %v626
    %2308 = vmatpush.msra.mxu0 %v622
    %2309 = vmatpush.msra.mxu0 %v618
    %2310 = vmatpush.msra.mxu0 %v614
    %2311 = vmatpush.msra.mxu0 %v610
    %2312 = vmatpush.msra.mxu0 %v606
    %2313 = vmatpush.msra.mxu0 %v602
    %2314 = vmatpush.msra.mxu0 %v598
    %2315 = vmatpush.msra.mxu0 %v594
    %2316 = vmatpush.msra.mxu0 %v590
    %2317 = vmatpush.msra.mxu0 %v586
    %2318 = vmatmul.f32.gmra.mxu0 %v2068
    %v2319 = vpop.f32.mrf.mxu0
    %v2320 = vadd.f32 %v2300, %v2319
    %2321 = vdwg.mxu0
    %2322 = vmatpush.msra.mxu0 %v583
    %2323 = vmatpush.msra.mxu0 %v579
    %2324 = vmatpush.msra.mxu0 %v575
    %2325 = vmatpush.msra.mxu0 %v571
    %2326 = vmatpush.msra.mxu0 %v567
    %2327 = vmatpush.msra.mxu0 %v563
    %2328 = vmatpush.msra.mxu0 %v559
    %2329 = vmatpush.msra.mxu0 %v555
    %2330 = vmatpush.msra.mxu0 %v551
    %2331 = vmatpush.msra.mxu0 %v547
    %2332 = vmatpush.msra.mxu0 %v543
    %2333 = vmatpush.msra.mxu0 %v539
    %2334 = vmatpush.msra.mxu0 %v535
    %2335 = vmatpush.msra.mxu0 %v531
    %2336 = vmatpush.msra.mxu0 %v527
    %2337 = vmatpush.msra.mxu0 %v523
    %2338 = vmatmul.f32.gmra.mxu0 %v2241
    %v2339 = vpop.f32.mrf.mxu0
    %v2340 = vadd.f32 %v653, %v2339
    %2341 = vdwg.mxu0
    %2342 = vmatpush.msra.mxu0 %v647
    %2343 = vmatpush.msra.mxu0 %v643
    %2344 = vmatpush.msra.mxu0 %v639
    %2345 = vmatpush.msra.mxu0 %v635
    %2346 = vmatpush.msra.mxu0 %v631
    %2347 = vmatpush.msra.mxu0 %v627
    %2348 = vmatpush.msra.mxu0 %v623
    %2349 = vmatpush.msra.mxu0 %v619
    %2350 = vmatpush.msra.mxu0 %v615
    %2351 = vmatpush.msra.mxu0 %v611
    %2352 = vmatpush.msra.mxu0 %v607
    %2353 = vmatpush.msra.mxu0 %v603
    %2354 = vmatpush.msra.mxu0 %v599
    %2355 = vmatpush.msra.mxu0 %v595
    %2356 = vmatpush.msra.mxu0 %v591
    %2357 = vmatpush.msra.mxu0 %v587
    %2358 = vmatmul.f32.gmra.mxu0 %v2068
    %v2359 = vpop.f32.mrf.mxu0
    %v2360 = vadd.f32 %v2340, %v2359
    %2361 = vdwg.mxu0
    %2362 = vmatpush.msra.mxu0 %v584
    %2363 = vmatpush.msra.mxu0 %v580
    %2364 = vmatpush.msra.mxu0 %v576
    %2365 = vmatpush.msra.mxu0 %v572
    %2366 = vmatpush.msra.mxu0 %v568
    %2367 = vmatpush.msra.mxu0 %v564
    %2368 = vmatpush.msra.mxu0 %v560
    %2369 = vmatpush.msra.mxu0 %v556
    %2370 = vmatpush.msra.mxu0 %v552
    %2371 = vmatpush.msra.mxu0 %v548
    %2372 = vmatpush.msra.mxu0 %v544
    %2373 = vmatpush.msra.mxu0 %v540
    %2374 = vmatpush.msra.mxu0 %v536
    %2375 = vmatpush.msra.mxu0 %v532
    %2376 = vmatpush.msra.mxu0 %v528
    %2377 = vmatpush.msra.mxu0 %v524
    %2378 = vmatmul.f32.gmra.mxu0 %v2241
    %v2379 = vpop.f32.mrf.mxu0
    %v2380 = vadd.f32 %v654, %v2379
    %2381 = vdwg.mxu0
    %2382 = vmatpush.msra.mxu0 %v648
    %2383 = vmatpush.msra.mxu0 %v644
    %2384 = vmatpush.msra.mxu0 %v640
    %2385 = vmatpush.msra.mxu0 %v636
    %2386 = vmatpush.msra.mxu0 %v632
    %2387 = vmatpush.msra.mxu0 %v628
    %2388 = vmatpush.msra.mxu0 %v624
    %2389 = vmatpush.msra.mxu0 %v620
    %2390 = vmatpush.msra.mxu0 %v616
    %2391 = vmatpush.msra.mxu0 %v612
    %2392 = vmatpush.msra.mxu0 %v608
    %2393 = vmatpush.msra.mxu0 %v604
    %2394 = vmatpush.msra.mxu0 %v600
    %2395 = vmatpush.msra.mxu0 %v596
    %2396 = vmatpush.msra.mxu0 %v592
    %2397 = vmatpush.msra.mxu0 %v588
    %2398 = vmatmul.f32.gmra.mxu0 %v2068
    %v2399 = vpop.f32.mrf.mxu0
    %v2400 = vadd.f32 %v2380, %v2399
    %2401 = vdwg.mxu0
    %v2402 = vsub.f32 0.0, %v2280
    %v2403 = vmul.f32 %v2402, 1.442695
    %v2404 = vpow.pop %v2403
    %v2405 = vadd.f32 %v2404, 1.0
    %v2406 = vrcp.pop %v2405
    %v2407 = vmul.f32 %v2405, %v2406
    %v2408 = vsub.f32 1.0, %v2407
    %v2409 = vmul.f32 %v2406, %v2408
    %v2410 = vadd.f32 %v2406, %v2409
    %vm2411 = vweird.f32 %v2405
    %vm2412 = vweird.f32 %v2406
    %vm2413 = vmor %vm2411, %vm2412
    %v2414 = vsel %vm2413, %v2406, %v2410
    %v2415 = vand.u32 2147483647, %v2405
    %vm2416 = vcmp.eq.f32.partialorder %v2415, 8.507059e+37
    %v2417 = vand.u32 %v2405, 2147483648
    %v2418 = vor.u32 1.1754944e-38, %v2417
    %v2419 = vsel %vm2416, %v2418, %v2414
    %v2420 = vmul.f32 1.0, %v2419
    %v2421 = vsub.f32 0.0, %v2320
    %v2422 = vmul.f32 %v2421, 1.442695
    %v2423 = vpow.pop %v2422
    %v2424 = vadd.f32 %v2423, 1.0
    %v2425 = vrcp.pop %v2424
    %v2426 = vmul.f32 %v2424, %v2425
    %v2427 = vsub.f32 1.0, %v2426
    %v2428 = vmul.f32 %v2425, %v2427
    %v2429 = vadd.f32 %v2425, %v2428
    %vm2430 = vweird.f32 %v2424
    %vm2431 = vweird.f32 %v2425
    %vm2432 = vmor %vm2430, %vm2431
    %v2433 = vsel %vm2432, %v2425, %v2429
    %v2434 = vand.u32 2147483647, %v2424
    %vm2435 = vcmp.eq.f32.partialorder %v2434, 8.507059e+37
    %v2436 = vand.u32 %v2424, 2147483648
    %v2437 = vor.u32 1.1754944e-38, %v2436
    %v2438 = vsel %vm2435, %v2437, %v2433
    %v2439 = vmul.f32 1.0, %v2438
    %v2440 = vtanh.pop %v2360
    %v2441 = vsub.f32 0.0, %v2400
    %v2442 = vmul.f32 %v2441, 1.442695
    %v2443 = vpow.pop %v2442
    %v2444 = vadd.f32 %v2443, 1.0
    %v2445 = vrcp.pop %v2444
    %v2446 = vmul.f32 %v2444, %v2445
    %v2447 = vsub.f32 1.0, %v2446
    %v2448 = vmul.f32 %v2445, %v2447
    %v2449 = vadd.f32 %v2445, %v2448
    %vm2450 = vweird.f32 %v2444
    %vm2451 = vweird.f32 %v2445
    %vm2452 = vmor %vm2450, %vm2451
    %v2453 = vsel %vm2452, %v2445, %v2449
    %v2454 = vand.u32 2147483647, %v2444
    %vm2455 = vcmp.eq.f32.partialorder %v2454, 8.507059e+37
    %v2456 = vand.u32 %v2444, 2147483648
    %v2457 = vor.u32 1.1754944e-38, %v2456
    %v2458 = vsel %vm2455, %v2457, %v2453
    %v2459 = vmul.f32 1.0, %v2458
    %v2460 = vmul.f32 %v2439, %v2066
    %v2461 = vmul.f32 %v2420, %v2440
    %v2462 = vadd.f32 %v2460, %v2461
    %v2463 = vtanh.pop %v2462
    %v2464 = vmul.f32 %v2459, %v2463
    %s2465 = scalar_lea.vmem %s1, 16
    %v2466 = vld [vmem:[%s2465] sm:$0xf]
    %2468 = vset.pattern.permute.xlu0 0
    %2469 = vperm.xlu0 %2468, %v2466
    %v2470 = vpop.permute.xlu0 %2469
    %v2472 = vmul.f32 %v2470, %v2464
    %v2473 = vadd.f32 %v2077, %v2472
    %s2474 = scalar_lea.vmem [#allocation2], 80
    %v2475 = vld [vmem:[%s2474] sm:$0xff]
    %v2476 = vld [vmem:[%s2474 + $0x8] sm:$0xff]
    %2477 = vmatpush.msra.mxu0 %v356
    %2478 = vmatpush.msra.mxu0 %v352
    %2479 = vmatpush.msra.mxu0 %v348
    %2480 = vmatpush.msra.mxu0 %v344
    %2481 = vmatpush.msra.mxu0 %v340
    %2482 = vmatpush.msra.mxu0 %v336
    %2483 = vmatpush.msra.mxu0 %v332
    %2484 = vmatpush.msra.mxu0 %v328
    %2485 = vmatpush.msra.mxu0 %v324
    %2486 = vmatpush.msra.mxu0 %v320
    %2487 = vmatpush.msra.mxu0 %v316
    %2488 = vmatpush.msra.mxu0 %v312
    %2489 = vmatpush.msra.mxu0 %v308
    %2490 = vmatpush.msra.mxu0 %v304
    %2491 = vmatpush.msra.mxu0 %v300
    %2492 = vmatpush.msra.mxu0 %v296
    %2493 = vmatmul.f32.gmra.mxu0 %v2241
    %v2494 = vpop.f32.mrf.mxu0
    %v2495 = vadd.f32 0.0, %v2494
    %2496 = vdwg.mxu0
    %2497 = vmatpush.msra.mxu0 %v357
    %2498 = vmatpush.msra.mxu0 %v353
    %2499 = vmatpush.msra.mxu0 %v349
    %2500 = vmatpush.msra.mxu0 %v345
    %2501 = vmatpush.msra.mxu0 %v341
    %2502 = vmatpush.msra.mxu0 %v337
    %2503 = vmatpush.msra.mxu0 %v333
    %2504 = vmatpush.msra.mxu0 %v329
    %2505 = vmatpush.msra.mxu0 %v325
    %2506 = vmatpush.msra.mxu0 %v321
    %2507 = vmatpush.msra.mxu0 %v317
    %2508 = vmatpush.msra.mxu0 %v313
    %2509 = vmatpush.msra.mxu0 %v309
    %2510 = vmatpush.msra.mxu0 %v305
    %2511 = vmatpush.msra.mxu0 %v301
    %2512 = vmatpush.msra.mxu0 %v297
    %2513 = vmatmul.f32.gmra.mxu0 %v2241
    %v2514 = vpop.f32.mrf.mxu0
    %v2515 = vadd.f32 0.0, %v2514
    %2516 = vdwg.mxu0
    %2517 = vmatpush.msra.mxu0 %v358
    %2518 = vmatpush.msra.mxu0 %v354
    %2519 = vmatpush.msra.mxu0 %v350
    %2520 = vmatpush.msra.mxu0 %v346
    %2521 = vmatpush.msra.mxu0 %v342
    %2522 = vmatpush.msra.mxu0 %v338
    %2523 = vmatpush.msra.mxu0 %v334
    %2524 = vmatpush.msra.mxu0 %v330
    %2525 = vmatpush.msra.mxu0 %v326
    %2526 = vmatpush.msra.mxu0 %v322
    %2527 = vmatpush.msra.mxu0 %v318
    %2528 = vmatpush.msra.mxu0 %v314
    %2529 = vmatpush.msra.mxu0 %v310
    %2530 = vmatpush.msra.mxu0 %v306
    %2531 = vmatpush.msra.mxu0 %v302
    %2532 = vmatpush.msra.mxu0 %v298
    %2533 = vmatmul.f32.gmra.mxu0 %v2241
    %v2534 = vpop.f32.mrf.mxu0
    %v2535 = vadd.f32 0.0, %v2534
    %2536 = vdwg.mxu0
    %2537 = vmatpush.msra.mxu0 %v359
    %2538 = vmatpush.msra.mxu0 %v355
    %2539 = vmatpush.msra.mxu0 %v351
    %2540 = vmatpush.msra.mxu0 %v347
    %2541 = vmatpush.msra.mxu0 %v343
    %2542 = vmatpush.msra.mxu0 %v339
    %2543 = vmatpush.msra.mxu0 %v335
    %2544 = vmatpush.msra.mxu0 %v331
    %2545 = vmatpush.msra.mxu0 %v327
    %2546 = vmatpush.msra.mxu0 %v323
    %2547 = vmatpush.msra.mxu0 %v319
    %2548 = vmatpush.msra.mxu0 %v315
    %2549 = vmatpush.msra.mxu0 %v311
    %2550 = vmatpush.msra.mxu0 %v307
    %2551 = vmatpush.msra.mxu0 %v303
    %2552 = vmatpush.msra.mxu0 %v299
    %2553 = vmatmul.f32.gmra.mxu0 %v2241
    %v2554 = vpop.f32.mrf.mxu0
    %v2555 = vadd.f32 0.0, %v2554
    %2556 = vdwg.mxu0
    %v2561 = vrot.slane %v2515, 4
    %v2562 = vrot.slane %v2555, 4
    %v2563 = vsel %vm245, %v2495, %v2561
    %v2564 = vsel %vm245, %v2535, %v2562
    %v2567 = vadd.f32 %v2475, %v2563
    %v2568 = vadd.f32 %v2476, %v2564
    %v2569 = vsub.f32 0.0, %v2567
    %v2570 = vmul.f32 %v2569, 1.442695
    %v2571 = vpow.pop %v2570
    %v2572 = vadd.f32 %v2571, 1.0
    %v2573 = vrcp.pop %v2572
    %v2574 = vmul.f32 %v2572, %v2573
    %v2575 = vsub.f32 1.0, %v2574
    %v2576 = vmul.f32 %v2573, %v2575
    %v2577 = vadd.f32 %v2573, %v2576
    %vm2578 = vweird.f32 %v2572
    %vm2579 = vweird.f32 %v2573
    %vm2580 = vmor %vm2578, %vm2579
    %v2581 = vsel %vm2580, %v2573, %v2577
    %v2582 = vand.u32 2147483647, %v2572
    %vm2583 = vcmp.eq.f32.partialorder %v2582, 8.507059e+37
    %v2584 = vand.u32 %v2572, 2147483648
    %v2585 = vor.u32 1.1754944e-38, %v2584
    %v2586 = vsel %vm2583, %v2585, %v2581
    %v2587 = vmul.f32 1.0, %v2586
    %v2589 = vrot.slane %v2567, 4
    %v2591 = vsub.f32 0.0, %v2589
    %v2592 = vmul.f32 %v2591, 1.442695
    %v2593 = vpow.pop %v2592
    %v2594 = vadd.f32 %v2593, 1.0
    %v2595 = vrcp.pop %v2594
    %v2596 = vmul.f32 %v2594, %v2595
    %v2597 = vsub.f32 1.0, %v2596
    %v2598 = vmul.f32 %v2595, %v2597
    %v2599 = vadd.f32 %v2595, %v2598
    %vm2600 = vweird.f32 %v2594
    %vm2601 = vweird.f32 %v2595
    %vm2602 = vmor %vm2600, %vm2601
    %v2603 = vsel %vm2602, %v2595, %v2599
    %v2604 = vand.u32 2147483647, %v2594
    %vm2605 = vcmp.eq.f32.partialorder %v2604, 8.507059e+37
    %v2606 = vand.u32 %v2594, 2147483648
    %v2607 = vor.u32 1.1754944e-38, %v2606
    %v2608 = vsel %vm2605, %v2607, %v2603
    %v2609 = vmul.f32 1.0, %v2608
    %v2610 = vtanh.pop %v2568
    %v2612 = vrot.slane %v2568, 4
    %v2614 = vsub.f32 0.0, %v2612
    %v2615 = vmul.f32 %v2614, 1.442695
    %v2616 = vpow.pop %v2615
    %v2617 = vadd.f32 %v2616, 1.0
    %v2618 = vrcp.pop %v2617
    %v2619 = vmul.f32 %v2617, %v2618
    %v2620 = vsub.f32 1.0, %v2619
    %v2621 = vmul.f32 %v2618, %v2620
    %v2622 = vadd.f32 %v2618, %v2621
    %vm2623 = vweird.f32 %v2617
    %vm2624 = vweird.f32 %v2618
    %vm2625 = vmor %vm2623, %vm2624
    %v2626 = vsel %vm2625, %v2618, %v2622
    %v2627 = vand.u32 2147483647, %v2617
    %vm2628 = vcmp.eq.f32.partialorder %v2627, 8.507059e+37
    %v2629 = vand.u32 %v2617, 2147483648
    %v2630 = vor.u32 1.1754944e-38, %v2629
    %v2631 = vsel %vm2628, %v2630, %v2626
    %v2632 = vmul.f32 1.0, %v2631
    %v2633 = vmul.f32 %v2609, %v2239
    %v2634 = vmul.f32 %v2587, %v2610
    %v2635 = vadd.f32 %v2633, %v2634
    %v2636 = vtanh.pop %v2635
    %v2637 = vmul.f32 %v2632, %v2636
    %2638 = vmatpush.msra.mxu0 %v581
    %2639 = vmatpush.msra.mxu0 %v577
    %2640 = vmatpush.msra.mxu0 %v573
    %2641 = vmatpush.msra.mxu0 %v569
    %2642 = vmatpush.msra.mxu0 %v565
    %2643 = vmatpush.msra.mxu0 %v561
    %2644 = vmatpush.msra.mxu0 %v557
    %2645 = vmatpush.msra.mxu0 %v553
    %2646 = vmatpush.msra.mxu0 %v549
    %2647 = vmatpush.msra.mxu0 %v545
    %2648 = vmatpush.msra.mxu0 %v541
    %2649 = vmatpush.msra.mxu0 %v537
    %2650 = vmatpush.msra.mxu0 %v533
    %2651 = vmatpush.msra.mxu0 %v529
    %2652 = vmatpush.msra.mxu0 %v525
    %2653 = vmatpush.msra.mxu0 %v521
    %2654 = vmatmul.f32.gmra.mxu0 %v2637
    %v2655 = vpop.f32.mrf.mxu0
    %v2656 = vadd.f32 %v651, %v2655
    %2657 = vdwg.mxu0
    %2658 = vmatpush.msra.mxu0 %v645
    %2659 = vmatpush.msra.mxu0 %v641
    %2660 = vmatpush.msra.mxu0 %v637
    %2661 = vmatpush.msra.mxu0 %v633
    %2662 = vmatpush.msra.mxu0 %v629
    %2663 = vmatpush.msra.mxu0 %v625
    %2664 = vmatpush.msra.mxu0 %v621
    %2665 = vmatpush.msra.mxu0 %v617
    %2666 = vmatpush.msra.mxu0 %v613
    %2667 = vmatpush.msra.mxu0 %v609
    %2668 = vmatpush.msra.mxu0 %v605
    %2669 = vmatpush.msra.mxu0 %v601
    %2670 = vmatpush.msra.mxu0 %v597
    %2671 = vmatpush.msra.mxu0 %v593
    %2672 = vmatpush.msra.mxu0 %v589
    %2673 = vmatpush.msra.mxu0 %v585
    %2674 = vmatmul.f32.gmra.mxu0 %v2464
    %v2675 = vpop.f32.mrf.mxu0
    %v2676 = vadd.f32 %v2656, %v2675
    %2677 = vdwg.mxu0
    %2678 = vmatpush.msra.mxu0 %v582
    %2679 = vmatpush.msra.mxu0 %v578
    %2680 = vmatpush.msra.mxu0 %v574
    %2681 = vmatpush.msra.mxu0 %v570
    %2682 = vmatpush.msra.mxu0 %v566
    %2683 = vmatpush.msra.mxu0 %v562
    %2684 = vmatpush.msra.mxu0 %v558
    %2685 = vmatpush.msra.mxu0 %v554
    %2686 = vmatpush.msra.mxu0 %v550
    %2687 = vmatpush.msra.mxu0 %v546
    %2688 = vmatpush.msra.mxu0 %v542
    %2689 = vmatpush.msra.mxu0 %v538
    %2690 = vmatpush.msra.mxu0 %v534
    %2691 = vmatpush.msra.mxu0 %v530
    %2692 = vmatpush.msra.mxu0 %v526
    %2693 = vmatpush.msra.mxu0 %v522
    %2694 = vmatmul.f32.gmra.mxu0 %v2637
    %v2695 = vpop.f32.mrf.mxu0
    %v2696 = vadd.f32 %v652, %v2695
    %2697 = vdwg.mxu0
    %2698 = vmatpush.msra.mxu0 %v646
    %2699 = vmatpush.msra.mxu0 %v642
    %2700 = vmatpush.msra.mxu0 %v638
    %2701 = vmatpush.msra.mxu0 %v634
    %2702 = vmatpush.msra.mxu0 %v630
    %2703 = vmatpush.msra.mxu0 %v626
    %2704 = vmatpush.msra.mxu0 %v622
    %2705 = vmatpush.msra.mxu0 %v618
    %2706 = vmatpush.msra.mxu0 %v614
    %2707 = vmatpush.msra.mxu0 %v610
    %2708 = vmatpush.msra.mxu0 %v606
    %2709 = vmatpush.msra.mxu0 %v602
    %2710 = vmatpush.msra.mxu0 %v598
    %2711 = vmatpush.msra.mxu0 %v594
    %2712 = vmatpush.msra.mxu0 %v590
    %2713 = vmatpush.msra.mxu0 %v586
    %2714 = vmatmul.f32.gmra.mxu0 %v2464
    %v2715 = vpop.f32.mrf.mxu0
    %v2716 = vadd.f32 %v2696, %v2715
    %2717 = vdwg.mxu0
    %2718 = vmatpush.msra.mxu0 %v583
    %2719 = vmatpush.msra.mxu0 %v579
    %2720 = vmatpush.msra.mxu0 %v575
    %2721 = vmatpush.msra.mxu0 %v571
    %2722 = vmatpush.msra.mxu0 %v567
    %2723 = vmatpush.msra.mxu0 %v563
    %2724 = vmatpush.msra.mxu0 %v559
    %2725 = vmatpush.msra.mxu0 %v555
    %2726 = vmatpush.msra.mxu0 %v551
    %2727 = vmatpush.msra.mxu0 %v547
    %2728 = vmatpush.msra.mxu0 %v543
    %2729 = vmatpush.msra.mxu0 %v539
    %2730 = vmatpush.msra.mxu0 %v535
    %2731 = vmatpush.msra.mxu0 %v531
    %2732 = vmatpush.msra.mxu0 %v527
    %2733 = vmatpush.msra.mxu0 %v523
    %2734 = vmatmul.f32.gmra.mxu0 %v2637
    %v2735 = vpop.f32.mrf.mxu0
    %v2736 = vadd.f32 %v653, %v2735
    %2737 = vdwg.mxu0
    %2738 = vmatpush.msra.mxu0 %v647
    %2739 = vmatpush.msra.mxu0 %v643
    %2740 = vmatpush.msra.mxu0 %v639
    %2741 = vmatpush.msra.mxu0 %v635
    %2742 = vmatpush.msra.mxu0 %v631
    %2743 = vmatpush.msra.mxu0 %v627
    %2744 = vmatpush.msra.mxu0 %v623
    %2745 = vmatpush.msra.mxu0 %v619
    %2746 = vmatpush.msra.mxu0 %v615
    %2747 = vmatpush.msra.mxu0 %v611
    %2748 = vmatpush.msra.mxu0 %v607
    %2749 = vmatpush.msra.mxu0 %v603
    %2750 = vmatpush.msra.mxu0 %v599
    %2751 = vmatpush.msra.mxu0 %v595
    %2752 = vmatpush.msra.mxu0 %v591
    %2753 = vmatpush.msra.mxu0 %v587
    %2754 = vmatmul.f32.gmra.mxu0 %v2464
    %v2755 = vpop.f32.mrf.mxu0
    %v2756 = vadd.f32 %v2736, %v2755
    %2757 = vdwg.mxu0
    %2758 = vmatpush.msra.mxu0 %v584
    %2759 = vmatpush.msra.mxu0 %v580
    %2760 = vmatpush.msra.mxu0 %v576
    %2761 = vmatpush.msra.mxu0 %v572
    %2762 = vmatpush.msra.mxu0 %v568
    %2763 = vmatpush.msra.mxu0 %v564
    %2764 = vmatpush.msra.mxu0 %v560
    %2765 = vmatpush.msra.mxu0 %v556
    %2766 = vmatpush.msra.mxu0 %v552
    %2767 = vmatpush.msra.mxu0 %v548
    %2768 = vmatpush.msra.mxu0 %v544
    %2769 = vmatpush.msra.mxu0 %v540
    %2770 = vmatpush.msra.mxu0 %v536
    %2771 = vmatpush.msra.mxu0 %v532
    %2772 = vmatpush.msra.mxu0 %v528
    %2773 = vmatpush.msra.mxu0 %v524
    %2774 = vmatmul.f32.gmra.mxu0 %v2637
    %v2775 = vpop.f32.mrf.mxu0
    %v2776 = vadd.f32 %v654, %v2775
    %2777 = vdwg.mxu0
    %2778 = vmatpush.msra.mxu0 %v648
    %2779 = vmatpush.msra.mxu0 %v644
    %2780 = vmatpush.msra.mxu0 %v640
    %2781 = vmatpush.msra.mxu0 %v636
    %2782 = vmatpush.msra.mxu0 %v632
    %2783 = vmatpush.msra.mxu0 %v628
    %2784 = vmatpush.msra.mxu0 %v624
    %2785 = vmatpush.msra.mxu0 %v620
    %2786 = vmatpush.msra.mxu0 %v616
    %2787 = vmatpush.msra.mxu0 %v612
    %2788 = vmatpush.msra.mxu0 %v608
    %2789 = vmatpush.msra.mxu0 %v604
    %2790 = vmatpush.msra.mxu0 %v600
    %2791 = vmatpush.msra.mxu0 %v596
    %2792 = vmatpush.msra.mxu0 %v592
    %2793 = vmatpush.msra.mxu0 %v588
    %2794 = vmatmul.f32.gmra.mxu0 %v2464
    %v2795 = vpop.f32.mrf.mxu0
    %v2796 = vadd.f32 %v2776, %v2795
    %2797 = vdwg.mxu0
    %v2798 = vsub.f32 0.0, %v2676
    %v2799 = vmul.f32 %v2798, 1.442695
    %v2800 = vpow.pop %v2799
    %v2801 = vadd.f32 %v2800, 1.0
    %v2802 = vrcp.pop %v2801
    %v2803 = vmul.f32 %v2801, %v2802
    %v2804 = vsub.f32 1.0, %v2803
    %v2805 = vmul.f32 %v2802, %v2804
    %v2806 = vadd.f32 %v2802, %v2805
    %vm2807 = vweird.f32 %v2801
    %vm2808 = vweird.f32 %v2802
    %vm2809 = vmor %vm2807, %vm2808
    %v2810 = vsel %vm2809, %v2802, %v2806
    %v2811 = vand.u32 2147483647, %v2801
    %vm2812 = vcmp.eq.f32.partialorder %v2811, 8.507059e+37
    %v2813 = vand.u32 %v2801, 2147483648
    %v2814 = vor.u32 1.1754944e-38, %v2813
    %v2815 = vsel %vm2812, %v2814, %v2810
    %v2816 = vmul.f32 1.0, %v2815
    %v2817 = vsub.f32 0.0, %v2716
    %v2818 = vmul.f32 %v2817, 1.442695
    %v2819 = vpow.pop %v2818
    %v2820 = vadd.f32 %v2819, 1.0
    %v2821 = vrcp.pop %v2820
    %v2822 = vmul.f32 %v2820, %v2821
    %v2823 = vsub.f32 1.0, %v2822
    %v2824 = vmul.f32 %v2821, %v2823
    %v2825 = vadd.f32 %v2821, %v2824
    %vm2826 = vweird.f32 %v2820
    %vm2827 = vweird.f32 %v2821
    %vm2828 = vmor %vm2826, %vm2827
    %v2829 = vsel %vm2828, %v2821, %v2825
    %v2830 = vand.u32 2147483647, %v2820
    %vm2831 = vcmp.eq.f32.partialorder %v2830, 8.507059e+37
    %v2832 = vand.u32 %v2820, 2147483648
    %v2833 = vor.u32 1.1754944e-38, %v2832
    %v2834 = vsel %vm2831, %v2833, %v2829
    %v2835 = vmul.f32 1.0, %v2834
    %v2836 = vtanh.pop %v2756
    %v2837 = vsub.f32 0.0, %v2796
    %v2838 = vmul.f32 %v2837, 1.442695
    %v2839 = vpow.pop %v2838
    %v2840 = vadd.f32 %v2839, 1.0
    %v2841 = vrcp.pop %v2840
    %v2842 = vmul.f32 %v2840, %v2841
    %v2843 = vsub.f32 1.0, %v2842
    %v2844 = vmul.f32 %v2841, %v2843
    %v2845 = vadd.f32 %v2841, %v2844
    %vm2846 = vweird.f32 %v2840
    %vm2847 = vweird.f32 %v2841
    %vm2848 = vmor %vm2846, %vm2847
    %v2849 = vsel %vm2848, %v2841, %v2845
    %v2850 = vand.u32 2147483647, %v2840
    %vm2851 = vcmp.eq.f32.partialorder %v2850, 8.507059e+37
    %v2852 = vand.u32 %v2840, 2147483648
    %v2853 = vor.u32 1.1754944e-38, %v2852
    %v2854 = vsel %vm2851, %v2853, %v2849
    %v2855 = vmul.f32 1.0, %v2854
    %v2856 = vmul.f32 %v2835, %v2462
    %v2857 = vmul.f32 %v2816, %v2836
    %v2858 = vadd.f32 %v2856, %v2857
    %v2859 = vtanh.pop %v2858
    %v2860 = vmul.f32 %v2855, %v2859
    %s2861 = scalar_lea.vmem %s1, 20
    %v2862 = vld [vmem:[%s2861] sm:$0xf]
    %2864 = vset.pattern.permute.xlu0 0
    %2865 = vperm.xlu0 %2864, %v2862
    %v2866 = vpop.permute.xlu0 %2865
    %v2868 = vmul.f32 %v2866, %v2860
    %v2869 = vadd.f32 %v2473, %v2868
    %s2870 = scalar_lea.vmem [#allocation2], 96
    %v2871 = vld [vmem:[%s2870] sm:$0xff]
    %v2872 = vld [vmem:[%s2870 + $0x8] sm:$0xff]
    %2873 = vmatpush.msra.mxu0 %v356
    %2874 = vmatpush.msra.mxu0 %v352
    %2875 = vmatpush.msra.mxu0 %v348
    %2876 = vmatpush.msra.mxu0 %v344
    %2877 = vmatpush.msra.mxu0 %v340
    %2878 = vmatpush.msra.mxu0 %v336
    %2879 = vmatpush.msra.mxu0 %v332
    %2880 = vmatpush.msra.mxu0 %v328
    %2881 = vmatpush.msra.mxu0 %v324
    %2882 = vmatpush.msra.mxu0 %v320
    %2883 = vmatpush.msra.mxu0 %v316
    %2884 = vmatpush.msra.mxu0 %v312
    %2885 = vmatpush.msra.mxu0 %v308
    %2886 = vmatpush.msra.mxu0 %v304
    %2887 = vmatpush.msra.mxu0 %v300
    %2888 = vmatpush.msra.mxu0 %v296
    %2889 = vmatmul.f32.gmra.mxu0 %v2637
    %v2890 = vpop.f32.mrf.mxu0
    %v2891 = vadd.f32 0.0, %v2890
    %2892 = vdwg.mxu0
    %2893 = vmatpush.msra.mxu0 %v357
    %2894 = vmatpush.msra.mxu0 %v353
    %2895 = vmatpush.msra.mxu0 %v349
    %2896 = vmatpush.msra.mxu0 %v345
    %2897 = vmatpush.msra.mxu0 %v341
    %2898 = vmatpush.msra.mxu0 %v337
    %2899 = vmatpush.msra.mxu0 %v333
    %2900 = vmatpush.msra.mxu0 %v329
    %2901 = vmatpush.msra.mxu0 %v325
    %2902 = vmatpush.msra.mxu0 %v321
    %2903 = vmatpush.msra.mxu0 %v317
    %2904 = vmatpush.msra.mxu0 %v313
    %2905 = vmatpush.msra.mxu0 %v309
    %2906 = vmatpush.msra.mxu0 %v305
    %2907 = vmatpush.msra.mxu0 %v301
    %2908 = vmatpush.msra.mxu0 %v297
    %2909 = vmatmul.f32.gmra.mxu0 %v2637
    %v2910 = vpop.f32.mrf.mxu0
    %v2911 = vadd.f32 0.0, %v2910
    %2912 = vdwg.mxu0
    %2913 = vmatpush.msra.mxu0 %v358
    %2914 = vmatpush.msra.mxu0 %v354
    %2915 = vmatpush.msra.mxu0 %v350
    %2916 = vmatpush.msra.mxu0 %v346
    %2917 = vmatpush.msra.mxu0 %v342
    %2918 = vmatpush.msra.mxu0 %v338
    %2919 = vmatpush.msra.mxu0 %v334
    %2920 = vmatpush.msra.mxu0 %v330
    %2921 = vmatpush.msra.mxu0 %v326
    %2922 = vmatpush.msra.mxu0 %v322
    %2923 = vmatpush.msra.mxu0 %v318
    %2924 = vmatpush.msra.mxu0 %v314
    %2925 = vmatpush.msra.mxu0 %v310
    %2926 = vmatpush.msra.mxu0 %v306
    %2927 = vmatpush.msra.mxu0 %v302
    %2928 = vmatpush.msra.mxu0 %v298
    %2929 = vmatmul.f32.gmra.mxu0 %v2637
    %v2930 = vpop.f32.mrf.mxu0
    %v2931 = vadd.f32 0.0, %v2930
    %2932 = vdwg.mxu0
    %2933 = vmatpush.msra.mxu0 %v359
    %2934 = vmatpush.msra.mxu0 %v355
    %2935 = vmatpush.msra.mxu0 %v351
    %2936 = vmatpush.msra.mxu0 %v347
    %2937 = vmatpush.msra.mxu0 %v343
    %2938 = vmatpush.msra.mxu0 %v339
    %2939 = vmatpush.msra.mxu0 %v335
    %2940 = vmatpush.msra.mxu0 %v331
    %2941 = vmatpush.msra.mxu0 %v327
    %2942 = vmatpush.msra.mxu0 %v323
    %2943 = vmatpush.msra.mxu0 %v319
    %2944 = vmatpush.msra.mxu0 %v315
    %2945 = vmatpush.msra.mxu0 %v311
    %2946 = vmatpush.msra.mxu0 %v307
    %2947 = vmatpush.msra.mxu0 %v303
    %2948 = vmatpush.msra.mxu0 %v299
    %2949 = vmatmul.f32.gmra.mxu0 %v2637
    %v2950 = vpop.f32.mrf.mxu0
    %v2951 = vadd.f32 0.0, %v2950
    %2952 = vdwg.mxu0
    %v2957 = vrot.slane %v2911, 4
    %v2958 = vrot.slane %v2951, 4
    %v2959 = vsel %vm245, %v2891, %v2957
    %v2960 = vsel %vm245, %v2931, %v2958
    %v2963 = vadd.f32 %v2871, %v2959
    %v2964 = vadd.f32 %v2872, %v2960
    %v2965 = vsub.f32 0.0, %v2963
    %v2966 = vmul.f32 %v2965, 1.442695
    %v2967 = vpow.pop %v2966
    %v2968 = vadd.f32 %v2967, 1.0
    %v2969 = vrcp.pop %v2968
    %v2970 = vmul.f32 %v2968, %v2969
    %v2971 = vsub.f32 1.0, %v2970
    %v2972 = vmul.f32 %v2969, %v2971
    %v2973 = vadd.f32 %v2969, %v2972
    %vm2974 = vweird.f32 %v2968
    %vm2975 = vweird.f32 %v2969
    %vm2976 = vmor %vm2974, %vm2975
    %v2977 = vsel %vm2976, %v2969, %v2973
    %v2978 = vand.u32 2147483647, %v2968
    %vm2979 = vcmp.eq.f32.partialorder %v2978, 8.507059e+37
    %v2980 = vand.u32 %v2968, 2147483648
    %v2981 = vor.u32 1.1754944e-38, %v2980
    %v2982 = vsel %vm2979, %v2981, %v2977
    %v2983 = vmul.f32 1.0, %v2982
    %v2985 = vrot.slane %v2963, 4
    %v2987 = vsub.f32 0.0, %v2985
    %v2988 = vmul.f32 %v2987, 1.442695
    %v2989 = vpow.pop %v2988
    %v2990 = vadd.f32 %v2989, 1.0
    %v2991 = vrcp.pop %v2990
    %v2992 = vmul.f32 %v2990, %v2991
    %v2993 = vsub.f32 1.0, %v2992
    %v2994 = vmul.f32 %v2991, %v2993
    %v2995 = vadd.f32 %v2991, %v2994
    %vm2996 = vweird.f32 %v2990
    %vm2997 = vweird.f32 %v2991
    %vm2998 = vmor %vm2996, %vm2997
    %v2999 = vsel %vm2998, %v2991, %v2995
    %v3000 = vand.u32 2147483647, %v2990
    %vm3001 = vcmp.eq.f32.partialorder %v3000, 8.507059e+37
    %v3002 = vand.u32 %v2990, 2147483648
    %v3003 = vor.u32 1.1754944e-38, %v3002
    %v3004 = vsel %vm3001, %v3003, %v2999
    %v3005 = vmul.f32 1.0, %v3004
    %v3006 = vtanh.pop %v2964
    %v3008 = vrot.slane %v2964, 4
    %v3010 = vsub.f32 0.0, %v3008
    %v3011 = vmul.f32 %v3010, 1.442695
    %v3012 = vpow.pop %v3011
    %v3013 = vadd.f32 %v3012, 1.0
    %v3014 = vrcp.pop %v3013
    %v3015 = vmul.f32 %v3013, %v3014
    %v3016 = vsub.f32 1.0, %v3015
    %v3017 = vmul.f32 %v3014, %v3016
    %v3018 = vadd.f32 %v3014, %v3017
    %vm3019 = vweird.f32 %v3013
    %vm3020 = vweird.f32 %v3014
    %vm3021 = vmor %vm3019, %vm3020
    %v3022 = vsel %vm3021, %v3014, %v3018
    %v3023 = vand.u32 2147483647, %v3013
    %vm3024 = vcmp.eq.f32.partialorder %v3023, 8.507059e+37
    %v3025 = vand.u32 %v3013, 2147483648
    %v3026 = vor.u32 1.1754944e-38, %v3025
    %v3027 = vsel %vm3024, %v3026, %v3022
    %v3028 = vmul.f32 1.0, %v3027
    %v3029 = vmul.f32 %v3005, %v2635
    %v3030 = vmul.f32 %v2983, %v3006
    %v3031 = vadd.f32 %v3029, %v3030
    %v3032 = vtanh.pop %v3031
    %v3033 = vmul.f32 %v3028, %v3032
    %3034 = vmatpush.msra.mxu0 %v581
    %3035 = vmatpush.msra.mxu0 %v577
    %3036 = vmatpush.msra.mxu0 %v573
    %3037 = vmatpush.msra.mxu0 %v569
    %3038 = vmatpush.msra.mxu0 %v565
    %3039 = vmatpush.msra.mxu0 %v561
    %3040 = vmatpush.msra.mxu0 %v557
    %3041 = vmatpush.msra.mxu0 %v553
    %3042 = vmatpush.msra.mxu0 %v549
    %3043 = vmatpush.msra.mxu0 %v545
    %3044 = vmatpush.msra.mxu0 %v541
    %3045 = vmatpush.msra.mxu0 %v537
    %3046 = vmatpush.msra.mxu0 %v533
    %3047 = vmatpush.msra.mxu0 %v529
    %3048 = vmatpush.msra.mxu0 %v525
    %3049 = vmatpush.msra.mxu0 %v521
    %3050 = vmatmul.f32.gmra.mxu0 %v3033
    %v3051 = vpop.f32.mrf.mxu0
    %v3052 = vadd.f32 %v651, %v3051
    %3053 = vdwg.mxu0
    %3054 = vmatpush.msra.mxu0 %v645
    %3055 = vmatpush.msra.mxu0 %v641
    %3056 = vmatpush.msra.mxu0 %v637
    %3057 = vmatpush.msra.mxu0 %v633
    %3058 = vmatpush.msra.mxu0 %v629
    %3059 = vmatpush.msra.mxu0 %v625
    %3060 = vmatpush.msra.mxu0 %v621
    %3061 = vmatpush.msra.mxu0 %v617
    %3062 = vmatpush.msra.mxu0 %v613
    %3063 = vmatpush.msra.mxu0 %v609
    %3064 = vmatpush.msra.mxu0 %v605
    %3065 = vmatpush.msra.mxu0 %v601
    %3066 = vmatpush.msra.mxu0 %v597
    %3067 = vmatpush.msra.mxu0 %v593
    %3068 = vmatpush.msra.mxu0 %v589
    %3069 = vmatpush.msra.mxu0 %v585
    %3070 = vmatmul.f32.gmra.mxu0 %v2860
    %v3071 = vpop.f32.mrf.mxu0
    %v3072 = vadd.f32 %v3052, %v3071
    %3073 = vdwg.mxu0
    %3074 = vmatpush.msra.mxu0 %v582
    %3075 = vmatpush.msra.mxu0 %v578
    %3076 = vmatpush.msra.mxu0 %v574
    %3077 = vmatpush.msra.mxu0 %v570
    %3078 = vmatpush.msra.mxu0 %v566
    %3079 = vmatpush.msra.mxu0 %v562
    %3080 = vmatpush.msra.mxu0 %v558
    %3081 = vmatpush.msra.mxu0 %v554
    %3082 = vmatpush.msra.mxu0 %v550
    %3083 = vmatpush.msra.mxu0 %v546
    %3084 = vmatpush.msra.mxu0 %v542
    %3085 = vmatpush.msra.mxu0 %v538
    %3086 = vmatpush.msra.mxu0 %v534
    %3087 = vmatpush.msra.mxu0 %v530
    %3088 = vmatpush.msra.mxu0 %v526
    %3089 = vmatpush.msra.mxu0 %v522
    %3090 = vmatmul.f32.gmra.mxu0 %v3033
    %v3091 = vpop.f32.mrf.mxu0
    %v3092 = vadd.f32 %v652, %v3091
    %3093 = vdwg.mxu0
    %3094 = vmatpush.msra.mxu0 %v646
    %3095 = vmatpush.msra.mxu0 %v642
    %3096 = vmatpush.msra.mxu0 %v638
    %3097 = vmatpush.msra.mxu0 %v634
    %3098 = vmatpush.msra.mxu0 %v630
    %3099 = vmatpush.msra.mxu0 %v626
    %3100 = vmatpush.msra.mxu0 %v622
    %3101 = vmatpush.msra.mxu0 %v618
    %3102 = vmatpush.msra.mxu0 %v614
    %3103 = vmatpush.msra.mxu0 %v610
    %3104 = vmatpush.msra.mxu0 %v606
    %3105 = vmatpush.msra.mxu0 %v602
    %3106 = vmatpush.msra.mxu0 %v598
    %3107 = vmatpush.msra.mxu0 %v594
    %3108 = vmatpush.msra.mxu0 %v590
    %3109 = vmatpush.msra.mxu0 %v586
    %3110 = vmatmul.f32.gmra.mxu0 %v2860
    %v3111 = vpop.f32.mrf.mxu0
    %v3112 = vadd.f32 %v3092, %v3111
    %3113 = vdwg.mxu0
    %3114 = vmatpush.msra.mxu0 %v583
    %3115 = vmatpush.msra.mxu0 %v579
    %3116 = vmatpush.msra.mxu0 %v575
    %3117 = vmatpush.msra.mxu0 %v571
    %3118 = vmatpush.msra.mxu0 %v567
    %3119 = vmatpush.msra.mxu0 %v563
    %3120 = vmatpush.msra.mxu0 %v559
    %3121 = vmatpush.msra.mxu0 %v555
    %3122 = vmatpush.msra.mxu0 %v551
    %3123 = vmatpush.msra.mxu0 %v547
    %3124 = vmatpush.msra.mxu0 %v543
    %3125 = vmatpush.msra.mxu0 %v539
    %3126 = vmatpush.msra.mxu0 %v535
    %3127 = vmatpush.msra.mxu0 %v531
    %3128 = vmatpush.msra.mxu0 %v527
    %3129 = vmatpush.msra.mxu0 %v523
    %3130 = vmatmul.f32.gmra.mxu0 %v3033
    %v3131 = vpop.f32.mrf.mxu0
    %v3132 = vadd.f32 %v653, %v3131
    %3133 = vdwg.mxu0
    %3134 = vmatpush.msra.mxu0 %v647
    %3135 = vmatpush.msra.mxu0 %v643
    %3136 = vmatpush.msra.mxu0 %v639
    %3137 = vmatpush.msra.mxu0 %v635
    %3138 = vmatpush.msra.mxu0 %v631
    %3139 = vmatpush.msra.mxu0 %v627
    %3140 = vmatpush.msra.mxu0 %v623
    %3141 = vmatpush.msra.mxu0 %v619
    %3142 = vmatpush.msra.mxu0 %v615
    %3143 = vmatpush.msra.mxu0 %v611
    %3144 = vmatpush.msra.mxu0 %v607
    %3145 = vmatpush.msra.mxu0 %v603
    %3146 = vmatpush.msra.mxu0 %v599
    %3147 = vmatpush.msra.mxu0 %v595
    %3148 = vmatpush.msra.mxu0 %v591
    %3149 = vmatpush.msra.mxu0 %v587
    %3150 = vmatmul.f32.gmra.mxu0 %v2860
    %v3151 = vpop.f32.mrf.mxu0
    %v3152 = vadd.f32 %v3132, %v3151
    %3153 = vdwg.mxu0
    %3154 = vmatpush.msra.mxu0 %v584
    %3155 = vmatpush.msra.mxu0 %v580
    %3156 = vmatpush.msra.mxu0 %v576
    %3157 = vmatpush.msra.mxu0 %v572
    %3158 = vmatpush.msra.mxu0 %v568
    %3159 = vmatpush.msra.mxu0 %v564
    %3160 = vmatpush.msra.mxu0 %v560
    %3161 = vmatpush.msra.mxu0 %v556
    %3162 = vmatpush.msra.mxu0 %v552
    %3163 = vmatpush.msra.mxu0 %v548
    %3164 = vmatpush.msra.mxu0 %v544
    %3165 = vmatpush.msra.mxu0 %v540
    %3166 = vmatpush.msra.mxu0 %v536
    %3167 = vmatpush.msra.mxu0 %v532
    %3168 = vmatpush.msra.mxu0 %v528
    %3169 = vmatpush.msra.mxu0 %v524
    %3170 = vmatmul.f32.gmra.mxu0 %v3033
    %v3171 = vpop.f32.mrf.mxu0
    %v3172 = vadd.f32 %v654, %v3171
    %3173 = vdwg.mxu0
    %3174 = vmatpush.msra.mxu0 %v648
    %3175 = vmatpush.msra.mxu0 %v644
    %3176 = vmatpush.msra.mxu0 %v640
    %3177 = vmatpush.msra.mxu0 %v636
    %3178 = vmatpush.msra.mxu0 %v632
    %3179 = vmatpush.msra.mxu0 %v628
    %3180 = vmatpush.msra.mxu0 %v624
    %3181 = vmatpush.msra.mxu0 %v620
    %3182 = vmatpush.msra.mxu0 %v616
    %3183 = vmatpush.msra.mxu0 %v612
    %3184 = vmatpush.msra.mxu0 %v608
    %3185 = vmatpush.msra.mxu0 %v604
    %3186 = vmatpush.msra.mxu0 %v600
    %3187 = vmatpush.msra.mxu0 %v596
    %3188 = vmatpush.msra.mxu0 %v592
    %3189 = vmatpush.msra.mxu0 %v588
    %3190 = vmatmul.f32.gmra.mxu0 %v2860
    %v3191 = vpop.f32.mrf.mxu0
    %v3192 = vadd.f32 %v3172, %v3191
    %3193 = vdwg.mxu0
    %v3194 = vsub.f32 0.0, %v3072
    %v3195 = vmul.f32 %v3194, 1.442695
    %v3196 = vpow.pop %v3195
    %v3197 = vadd.f32 %v3196, 1.0
    %v3198 = vrcp.pop %v3197
    %v3199 = vmul.f32 %v3197, %v3198
    %v3200 = vsub.f32 1.0, %v3199
    %v3201 = vmul.f32 %v3198, %v3200
    %v3202 = vadd.f32 %v3198, %v3201
    %vm3203 = vweird.f32 %v3197
    %vm3204 = vweird.f32 %v3198
    %vm3205 = vmor %vm3203, %vm3204
    %v3206 = vsel %vm3205, %v3198, %v3202
    %v3207 = vand.u32 2147483647, %v3197
    %vm3208 = vcmp.eq.f32.partialorder %v3207, 8.507059e+37
    %v3209 = vand.u32 %v3197, 2147483648
    %v3210 = vor.u32 1.1754944e-38, %v3209
    %v3211 = vsel %vm3208, %v3210, %v3206
    %v3212 = vmul.f32 1.0, %v3211
    %v3213 = vsub.f32 0.0, %v3112
    %v3214 = vmul.f32 %v3213, 1.442695
    %v3215 = vpow.pop %v3214
    %v3216 = vadd.f32 %v3215, 1.0
    %v3217 = vrcp.pop %v3216
    %v3218 = vmul.f32 %v3216, %v3217
    %v3219 = vsub.f32 1.0, %v3218
    %v3220 = vmul.f32 %v3217, %v3219
    %v3221 = vadd.f32 %v3217, %v3220
    %vm3222 = vweird.f32 %v3216
    %vm3223 = vweird.f32 %v3217
    %vm3224 = vmor %vm3222, %vm3223
    %v3225 = vsel %vm3224, %v3217, %v3221
    %v3226 = vand.u32 2147483647, %v3216
    %vm3227 = vcmp.eq.f32.partialorder %v3226, 8.507059e+37
    %v3228 = vand.u32 %v3216, 2147483648
    %v3229 = vor.u32 1.1754944e-38, %v3228
    %v3230 = vsel %vm3227, %v3229, %v3225
    %v3231 = vmul.f32 1.0, %v3230
    %v3232 = vtanh.pop %v3152
    %v3233 = vsub.f32 0.0, %v3192
    %v3234 = vmul.f32 %v3233, 1.442695
    %v3235 = vpow.pop %v3234
    %v3236 = vadd.f32 %v3235, 1.0
    %v3237 = vrcp.pop %v3236
    %v3238 = vmul.f32 %v3236, %v3237
    %v3239 = vsub.f32 1.0, %v3238
    %v3240 = vmul.f32 %v3237, %v3239
    %v3241 = vadd.f32 %v3237, %v3240
    %vm3242 = vweird.f32 %v3236
    %vm3243 = vweird.f32 %v3237
    %vm3244 = vmor %vm3242, %vm3243
    %v3245 = vsel %vm3244, %v3237, %v3241
    %v3246 = vand.u32 2147483647, %v3236
    %vm3247 = vcmp.eq.f32.partialorder %v3246, 8.507059e+37
    %v3248 = vand.u32 %v3236, 2147483648
    %v3249 = vor.u32 1.1754944e-38, %v3248
    %v3250 = vsel %vm3247, %v3249, %v3245
    %v3251 = vmul.f32 1.0, %v3250
    %v3252 = vmul.f32 %v3231, %v2858
    %v3253 = vmul.f32 %v3212, %v3232
    %v3254 = vadd.f32 %v3252, %v3253
    %v3255 = vtanh.pop %v3254
    %v3256 = vmul.f32 %v3251, %v3255
    %s3257 = scalar_lea.vmem %s1, 24
    %v3258 = vld [vmem:[%s3257] sm:$0xf]
    %3260 = vset.pattern.permute.xlu0 0
    %3261 = vperm.xlu0 %3260, %v3258
    %v3262 = vpop.permute.xlu0 %3261
    %v3264 = vmul.f32 %v3262, %v3256
    %v3265 = vadd.f32 %v2869, %v3264
    %s3266 = scalar_lea.vmem [#allocation2], 112
    %v3267 = vld [vmem:[%s3266] sm:$0xff]
    %v3268 = vld [vmem:[%s3266 + $0x8] sm:$0xff]
    %3269 = vmatpush.msra.mxu0 %v356
    %3270 = vmatpush.msra.mxu0 %v352
    %3271 = vmatpush.msra.mxu0 %v348
    %3272 = vmatpush.msra.mxu0 %v344
    %3273 = vmatpush.msra.mxu0 %v340
    %3274 = vmatpush.msra.mxu0 %v336
    %3275 = vmatpush.msra.mxu0 %v332
    %3276 = vmatpush.msra.mxu0 %v328
    %3277 = vmatpush.msra.mxu0 %v324
    %3278 = vmatpush.msra.mxu0 %v320
    %3279 = vmatpush.msra.mxu0 %v316
    %3280 = vmatpush.msra.mxu0 %v312
    %3281 = vmatpush.msra.mxu0 %v308
    %3282 = vmatpush.msra.mxu0 %v304
    %3283 = vmatpush.msra.mxu0 %v300
    %3284 = vmatpush.msra.mxu0 %v296
    %3285 = vmatmul.f32.gmra.mxu0 %v3033
    %v3286 = vpop.f32.mrf.mxu0
    %v3287 = vadd.f32 0.0, %v3286
    %3288 = vdwg.mxu0
    %3289 = vmatpush.msra.mxu0 %v357
    %3290 = vmatpush.msra.mxu0 %v353
    %3291 = vmatpush.msra.mxu0 %v349
    %3292 = vmatpush.msra.mxu0 %v345
    %3293 = vmatpush.msra.mxu0 %v341
    %3294 = vmatpush.msra.mxu0 %v337
    %3295 = vmatpush.msra.mxu0 %v333
    %3296 = vmatpush.msra.mxu0 %v329
    %3297 = vmatpush.msra.mxu0 %v325
    %3298 = vmatpush.msra.mxu0 %v321
    %3299 = vmatpush.msra.mxu0 %v317
    %3300 = vmatpush.msra.mxu0 %v313
    %3301 = vmatpush.msra.mxu0 %v309
    %3302 = vmatpush.msra.mxu0 %v305
    %3303 = vmatpush.msra.mxu0 %v301
    %3304 = vmatpush.msra.mxu0 %v297
    %3305 = vmatmul.f32.gmra.mxu0 %v3033
    %v3306 = vpop.f32.mrf.mxu0
    %v3307 = vadd.f32 0.0, %v3306
    %3308 = vdwg.mxu0
    %3309 = vmatpush.msra.mxu0 %v358
    %3310 = vmatpush.msra.mxu0 %v354
    %3311 = vmatpush.msra.mxu0 %v350
    %3312 = vmatpush.msra.mxu0 %v346
    %3313 = vmatpush.msra.mxu0 %v342
    %3314 = vmatpush.msra.mxu0 %v338
    %3315 = vmatpush.msra.mxu0 %v334
    %3316 = vmatpush.msra.mxu0 %v330
    %3317 = vmatpush.msra.mxu0 %v326
    %3318 = vmatpush.msra.mxu0 %v322
    %3319 = vmatpush.msra.mxu0 %v318
    %3320 = vmatpush.msra.mxu0 %v314
    %3321 = vmatpush.msra.mxu0 %v310
    %3322 = vmatpush.msra.mxu0 %v306
    %3323 = vmatpush.msra.mxu0 %v302
    %3324 = vmatpush.msra.mxu0 %v298
    %3325 = vmatmul.f32.gmra.mxu0 %v3033
    %v3326 = vpop.f32.mrf.mxu0
    %v3327 = vadd.f32 0.0, %v3326
    %3328 = vdwg.mxu0
    %3329 = vmatpush.msra.mxu0 %v359
    %3330 = vmatpush.msra.mxu0 %v355
    %3331 = vmatpush.msra.mxu0 %v351
    %3332 = vmatpush.msra.mxu0 %v347
    %3333 = vmatpush.msra.mxu0 %v343
    %3334 = vmatpush.msra.mxu0 %v339
    %3335 = vmatpush.msra.mxu0 %v335
    %3336 = vmatpush.msra.mxu0 %v331
    %3337 = vmatpush.msra.mxu0 %v327
    %3338 = vmatpush.msra.mxu0 %v323
    %3339 = vmatpush.msra.mxu0 %v319
    %3340 = vmatpush.msra.mxu0 %v315
    %3341 = vmatpush.msra.mxu0 %v311
    %3342 = vmatpush.msra.mxu0 %v307
    %3343 = vmatpush.msra.mxu0 %v303
    %3344 = vmatpush.msra.mxu0 %v299
    %3345 = vmatmul.f32.gmra.mxu0 %v3033
    %v3346 = vpop.f32.mrf.mxu0
    %v3347 = vadd.f32 0.0, %v3346
    %3348 = vdwg.mxu0
    %v3353 = vrot.slane %v3307, 4
    %v3354 = vrot.slane %v3347, 4
    %v3355 = vsel %vm245, %v3287, %v3353
    %v3356 = vsel %vm245, %v3327, %v3354
    %v3359 = vadd.f32 %v3267, %v3355
    %v3360 = vadd.f32 %v3268, %v3356
    %v3361 = vsub.f32 0.0, %v3359
    %v3362 = vmul.f32 %v3361, 1.442695
    %v3363 = vpow.pop %v3362
    %v3364 = vadd.f32 %v3363, 1.0
    %v3365 = vrcp.pop %v3364
    %v3366 = vmul.f32 %v3364, %v3365
    %v3367 = vsub.f32 1.0, %v3366
    %v3368 = vmul.f32 %v3365, %v3367
    %v3369 = vadd.f32 %v3365, %v3368
    %vm3370 = vweird.f32 %v3364
    %vm3371 = vweird.f32 %v3365
    %vm3372 = vmor %vm3370, %vm3371
    %v3373 = vsel %vm3372, %v3365, %v3369
    %v3374 = vand.u32 2147483647, %v3364
    %vm3375 = vcmp.eq.f32.partialorder %v3374, 8.507059e+37
    %v3376 = vand.u32 %v3364, 2147483648
    %v3377 = vor.u32 1.1754944e-38, %v3376
    %v3378 = vsel %vm3375, %v3377, %v3373
    %v3379 = vmul.f32 1.0, %v3378
    %v3381 = vrot.slane %v3359, 4
    %v3383 = vsub.f32 0.0, %v3381
    %v3384 = vmul.f32 %v3383, 1.442695
    %v3385 = vpow.pop %v3384
    %v3386 = vadd.f32 %v3385, 1.0
    %v3387 = vrcp.pop %v3386
    %v3388 = vmul.f32 %v3386, %v3387
    %v3389 = vsub.f32 1.0, %v3388
    %v3390 = vmul.f32 %v3387, %v3389
    %v3391 = vadd.f32 %v3387, %v3390
    %vm3392 = vweird.f32 %v3386
    %vm3393 = vweird.f32 %v3387
    %vm3394 = vmor %vm3392, %vm3393
    %v3395 = vsel %vm3394, %v3387, %v3391
    %v3396 = vand.u32 2147483647, %v3386
    %vm3397 = vcmp.eq.f32.partialorder %v3396, 8.507059e+37
    %v3398 = vand.u32 %v3386, 2147483648
    %v3399 = vor.u32 1.1754944e-38, %v3398
    %v3400 = vsel %vm3397, %v3399, %v3395
    %v3401 = vmul.f32 1.0, %v3400
    %v3402 = vtanh.pop %v3360
    %v3404 = vrot.slane %v3360, 4
    %v3406 = vsub.f32 0.0, %v3404
    %v3407 = vmul.f32 %v3406, 1.442695
    %v3408 = vpow.pop %v3407
    %v3409 = vadd.f32 %v3408, 1.0
    %v3410 = vrcp.pop %v3409
    %v3411 = vmul.f32 %v3409, %v3410
    %v3412 = vsub.f32 1.0, %v3411
    %v3413 = vmul.f32 %v3410, %v3412
    %v3414 = vadd.f32 %v3410, %v3413
    %vm3415 = vweird.f32 %v3409
    %vm3416 = vweird.f32 %v3410
    %vm3417 = vmor %vm3415, %vm3416
    %v3418 = vsel %vm3417, %v3410, %v3414
    %v3419 = vand.u32 2147483647, %v3409
    %vm3420 = vcmp.eq.f32.partialorder %v3419, 8.507059e+37
    %v3421 = vand.u32 %v3409, 2147483648
    %v3422 = vor.u32 1.1754944e-38, %v3421
    %v3423 = vsel %vm3420, %v3422, %v3418
    %v3424 = vmul.f32 1.0, %v3423
    %v3425 = vmul.f32 %v3401, %v3031
    %v3426 = vmul.f32 %v3379, %v3402
    %v3427 = vadd.f32 %v3425, %v3426
    %v3428 = vtanh.pop %v3427
    %v3429 = vmul.f32 %v3424, %v3428
    %3430 = vmatpush.msra.mxu0 %v581
    %3431 = vmatpush.msra.mxu0 %v577
    %3432 = vmatpush.msra.mxu0 %v573
    %3433 = vmatpush.msra.mxu0 %v569
    %3434 = vmatpush.msra.mxu0 %v565
    %3435 = vmatpush.msra.mxu0 %v561
    %3436 = vmatpush.msra.mxu0 %v557
    %3437 = vmatpush.msra.mxu0 %v553
    %3438 = vmatpush.msra.mxu0 %v549
    %3439 = vmatpush.msra.mxu0 %v545
    %3440 = vmatpush.msra.mxu0 %v541
    %3441 = vmatpush.msra.mxu0 %v537
    %3442 = vmatpush.msra.mxu0 %v533
    %3443 = vmatpush.msra.mxu0 %v529
    %3444 = vmatpush.msra.mxu0 %v525
    %3445 = vmatpush.msra.mxu0 %v521
    %3446 = vmatmul.f32.gmra.mxu0 %v3429
    %v3447 = vpop.f32.mrf.mxu0
    %v3448 = vadd.f32 %v651, %v3447
    %3449 = vdwg.mxu0
    %3450 = vmatpush.msra.mxu0 %v645
    %3451 = vmatpush.msra.mxu0 %v641
    %3452 = vmatpush.msra.mxu0 %v637
    %3453 = vmatpush.msra.mxu0 %v633
    %3454 = vmatpush.msra.mxu0 %v629
    %3455 = vmatpush.msra.mxu0 %v625
    %3456 = vmatpush.msra.mxu0 %v621
    %3457 = vmatpush.msra.mxu0 %v617
    %3458 = vmatpush.msra.mxu0 %v613
    %3459 = vmatpush.msra.mxu0 %v609
    %3460 = vmatpush.msra.mxu0 %v605
    %3461 = vmatpush.msra.mxu0 %v601
    %3462 = vmatpush.msra.mxu0 %v597
    %3463 = vmatpush.msra.mxu0 %v593
    %3464 = vmatpush.msra.mxu0 %v589
    %3465 = vmatpush.msra.mxu0 %v585
    %3466 = vmatmul.f32.gmra.mxu0 %v3256
    %v3467 = vpop.f32.mrf.mxu0
    %v3468 = vadd.f32 %v3448, %v3467
    %3469 = vdwg.mxu0
    %3470 = vmatpush.msra.mxu0 %v582
    %3471 = vmatpush.msra.mxu0 %v578
    %3472 = vmatpush.msra.mxu0 %v574
    %3473 = vmatpush.msra.mxu0 %v570
    %3474 = vmatpush.msra.mxu0 %v566
    %3475 = vmatpush.msra.mxu0 %v562
    %3476 = vmatpush.msra.mxu0 %v558
    %3477 = vmatpush.msra.mxu0 %v554
    %3478 = vmatpush.msra.mxu0 %v550
    %3479 = vmatpush.msra.mxu0 %v546
    %3480 = vmatpush.msra.mxu0 %v542
    %3481 = vmatpush.msra.mxu0 %v538
    %3482 = vmatpush.msra.mxu0 %v534
    %3483 = vmatpush.msra.mxu0 %v530
    %3484 = vmatpush.msra.mxu0 %v526
    %3485 = vmatpush.msra.mxu0 %v522
    %3486 = vmatmul.f32.gmra.mxu0 %v3429
    %v3487 = vpop.f32.mrf.mxu0
    %v3488 = vadd.f32 %v652, %v3487
    %3489 = vdwg.mxu0
    %3490 = vmatpush.msra.mxu0 %v646
    %3491 = vmatpush.msra.mxu0 %v642
    %3492 = vmatpush.msra.mxu0 %v638
    %3493 = vmatpush.msra.mxu0 %v634
    %3494 = vmatpush.msra.mxu0 %v630
    %3495 = vmatpush.msra.mxu0 %v626
    %3496 = vmatpush.msra.mxu0 %v622
    %3497 = vmatpush.msra.mxu0 %v618
    %3498 = vmatpush.msra.mxu0 %v614
    %3499 = vmatpush.msra.mxu0 %v610
    %3500 = vmatpush.msra.mxu0 %v606
    %3501 = vmatpush.msra.mxu0 %v602
    %3502 = vmatpush.msra.mxu0 %v598
    %3503 = vmatpush.msra.mxu0 %v594
    %3504 = vmatpush.msra.mxu0 %v590
    %3505 = vmatpush.msra.mxu0 %v586
    %3506 = vmatmul.f32.gmra.mxu0 %v3256
    %v3507 = vpop.f32.mrf.mxu0
    %v3508 = vadd.f32 %v3488, %v3507
    %3509 = vdwg.mxu0
    %3510 = vmatpush.msra.mxu0 %v583
    %3511 = vmatpush.msra.mxu0 %v579
    %3512 = vmatpush.msra.mxu0 %v575
    %3513 = vmatpush.msra.mxu0 %v571
    %3514 = vmatpush.msra.mxu0 %v567
    %3515 = vmatpush.msra.mxu0 %v563
    %3516 = vmatpush.msra.mxu0 %v559
    %3517 = vmatpush.msra.mxu0 %v555
    %3518 = vmatpush.msra.mxu0 %v551
    %3519 = vmatpush.msra.mxu0 %v547
    %3520 = vmatpush.msra.mxu0 %v543
    %3521 = vmatpush.msra.mxu0 %v539
    %3522 = vmatpush.msra.mxu0 %v535
    %3523 = vmatpush.msra.mxu0 %v531
    %3524 = vmatpush.msra.mxu0 %v527
    %3525 = vmatpush.msra.mxu0 %v523
    %3526 = vmatmul.f32.gmra.mxu0 %v3429
    %v3527 = vpop.f32.mrf.mxu0
    %v3528 = vadd.f32 %v653, %v3527
    %3529 = vdwg.mxu0
    %3530 = vmatpush.msra.mxu0 %v647
    %3531 = vmatpush.msra.mxu0 %v643
    %3532 = vmatpush.msra.mxu0 %v639
    %3533 = vmatpush.msra.mxu0 %v635
    %3534 = vmatpush.msra.mxu0 %v631
    %3535 = vmatpush.msra.mxu0 %v627
    %3536 = vmatpush.msra.mxu0 %v623
    %3537 = vmatpush.msra.mxu0 %v619
    %3538 = vmatpush.msra.mxu0 %v615
    %3539 = vmatpush.msra.mxu0 %v611
    %3540 = vmatpush.msra.mxu0 %v607
    %3541 = vmatpush.msra.mxu0 %v603
    %3542 = vmatpush.msra.mxu0 %v599
    %3543 = vmatpush.msra.mxu0 %v595
    %3544 = vmatpush.msra.mxu0 %v591
    %3545 = vmatpush.msra.mxu0 %v587
    %3546 = vmatmul.f32.gmra.mxu0 %v3256
    %v3547 = vpop.f32.mrf.mxu0
    %v3548 = vadd.f32 %v3528, %v3547
    %3549 = vdwg.mxu0
    %3550 = vmatpush.msra.mxu0 %v584
    %3551 = vmatpush.msra.mxu0 %v580
    %3552 = vmatpush.msra.mxu0 %v576
    %3553 = vmatpush.msra.mxu0 %v572
    %3554 = vmatpush.msra.mxu0 %v568
    %3555 = vmatpush.msra.mxu0 %v564
    %3556 = vmatpush.msra.mxu0 %v560
    %3557 = vmatpush.msra.mxu0 %v556
    %3558 = vmatpush.msra.mxu0 %v552
    %3559 = vmatpush.msra.mxu0 %v548
    %3560 = vmatpush.msra.mxu0 %v544
    %3561 = vmatpush.msra.mxu0 %v540
    %3562 = vmatpush.msra.mxu0 %v536
    %3563 = vmatpush.msra.mxu0 %v532
    %3564 = vmatpush.msra.mxu0 %v528
    %3565 = vmatpush.msra.mxu0 %v524
    %3566 = vmatmul.f32.gmra.mxu0 %v3429
    %v3567 = vpop.f32.mrf.mxu0
    %v3568 = vadd.f32 %v654, %v3567
    %3569 = vdwg.mxu0
    %3570 = vmatpush.msra.mxu0 %v648
    %3571 = vmatpush.msra.mxu0 %v644
    %3572 = vmatpush.msra.mxu0 %v640
    %3573 = vmatpush.msra.mxu0 %v636
    %3574 = vmatpush.msra.mxu0 %v632
    %3575 = vmatpush.msra.mxu0 %v628
    %3576 = vmatpush.msra.mxu0 %v624
    %3577 = vmatpush.msra.mxu0 %v620
    %3578 = vmatpush.msra.mxu0 %v616
    %3579 = vmatpush.msra.mxu0 %v612
    %3580 = vmatpush.msra.mxu0 %v608
    %3581 = vmatpush.msra.mxu0 %v604
    %3582 = vmatpush.msra.mxu0 %v600
    %3583 = vmatpush.msra.mxu0 %v596
    %3584 = vmatpush.msra.mxu0 %v592
    %3585 = vmatpush.msra.mxu0 %v588
    %3586 = vmatmul.f32.gmra.mxu0 %v3256
    %v3587 = vpop.f32.mrf.mxu0
    %v3588 = vadd.f32 %v3568, %v3587
    %3589 = vdwg.mxu0
    %v3590 = vsub.f32 0.0, %v3468
    %v3591 = vmul.f32 %v3590, 1.442695
    %v3592 = vpow.pop %v3591
    %v3593 = vadd.f32 %v3592, 1.0
    %v3594 = vrcp.pop %v3593
    %v3595 = vmul.f32 %v3593, %v3594
    %v3596 = vsub.f32 1.0, %v3595
    %v3597 = vmul.f32 %v3594, %v3596
    %v3598 = vadd.f32 %v3594, %v3597
    %vm3599 = vweird.f32 %v3593
    %vm3600 = vweird.f32 %v3594
    %vm3601 = vmor %vm3599, %vm3600
    %v3602 = vsel %vm3601, %v3594, %v3598
    %v3603 = vand.u32 2147483647, %v3593
    %vm3604 = vcmp.eq.f32.partialorder %v3603, 8.507059e+37
    %v3605 = vand.u32 %v3593, 2147483648
    %v3606 = vor.u32 1.1754944e-38, %v3605
    %v3607 = vsel %vm3604, %v3606, %v3602
    %v3608 = vmul.f32 1.0, %v3607
    %v3609 = vsub.f32 0.0, %v3508
    %v3610 = vmul.f32 %v3609, 1.442695
    %v3611 = vpow.pop %v3610
    %v3612 = vadd.f32 %v3611, 1.0
    %v3613 = vrcp.pop %v3612
    %v3614 = vmul.f32 %v3612, %v3613
    %v3615 = vsub.f32 1.0, %v3614
    %v3616 = vmul.f32 %v3613, %v3615
    %v3617 = vadd.f32 %v3613, %v3616
    %vm3618 = vweird.f32 %v3612
    %vm3619 = vweird.f32 %v3613
    %vm3620 = vmor %vm3618, %vm3619
    %v3621 = vsel %vm3620, %v3613, %v3617
    %v3622 = vand.u32 2147483647, %v3612
    %vm3623 = vcmp.eq.f32.partialorder %v3622, 8.507059e+37
    %v3624 = vand.u32 %v3612, 2147483648
    %v3625 = vor.u32 1.1754944e-38, %v3624
    %v3626 = vsel %vm3623, %v3625, %v3621
    %v3627 = vmul.f32 1.0, %v3626
    %v3628 = vtanh.pop %v3548
    %v3629 = vsub.f32 0.0, %v3588
    %v3630 = vmul.f32 %v3629, 1.442695
    %v3631 = vpow.pop %v3630
    %v3632 = vadd.f32 %v3631, 1.0
    %v3633 = vrcp.pop %v3632
    %v3634 = vmul.f32 %v3632, %v3633
    %v3635 = vsub.f32 1.0, %v3634
    %v3636 = vmul.f32 %v3633, %v3635
    %v3637 = vadd.f32 %v3633, %v3636
    %vm3638 = vweird.f32 %v3632
    %vm3639 = vweird.f32 %v3633
    %vm3640 = vmor %vm3638, %vm3639
    %v3641 = vsel %vm3640, %v3633, %v3637
    %v3642 = vand.u32 2147483647, %v3632
    %vm3643 = vcmp.eq.f32.partialorder %v3642, 8.507059e+37
    %v3644 = vand.u32 %v3632, 2147483648
    %v3645 = vor.u32 1.1754944e-38, %v3644
    %v3646 = vsel %vm3643, %v3645, %v3641
    %v3647 = vmul.f32 1.0, %v3646
    %v3648 = vmul.f32 %v3627, %v3254
    %v3649 = vmul.f32 %v3608, %v3628
    %v3650 = vadd.f32 %v3648, %v3649
    %v3651 = vtanh.pop %v3650
    %v3652 = vmul.f32 %v3647, %v3651
    %s3653 = scalar_lea.vmem %s1, 28
    %v3654 = vld [vmem:[%s3653] sm:$0xf]
    %3656 = vset.pattern.permute.xlu0 0
    %3657 = vperm.xlu0 %3656, %v3654
    %v3658 = vpop.permute.xlu0 %3657
    %v3660 = vmul.f32 %v3658, %v3652
    %v3661 = vadd.f32 %v3265, %v3660
    %v3662 = vld [vmem:[%s7] sm:$0xff]
    %v3663 = vld [vmem:[%s7 + $0x8] sm:$0xff]
    %v3664 = vld [vmem:[%s7 + $0x10] sm:$0xff]
    %v3665 = vld [vmem:[%s7 + $0x18] sm:$0xff]
    %v3666 = vld [vmem:[%s7 + $0x20] sm:$0xff]
    %v3667 = vld [vmem:[%s7 + $0x28] sm:$0xff]
    %v3668 = vld [vmem:[%s7 + $0x30] sm:$0xff]
    %v3669 = vld [vmem:[%s7 + $0x38] sm:$0xff]
    %v3670 = vld [vmem:[%s7 + $0x40] sm:$0xff]
    %v3671 = vld [vmem:[%s7 + $0x48] sm:$0xff]
    %v3672 = vld [vmem:[%s7 + $0x50] sm:$0xff]
    %v3673 = vld [vmem:[%s7 + $0x58] sm:$0xff]
    %v3674 = vld [vmem:[%s7 + $0x60] sm:$0xff]
    %v3675 = vld [vmem:[%s7 + $0x68] sm:$0xff]
    %v3676 = vld [vmem:[%s7 + $0x70] sm:$0xff]
    %v3677 = vld [vmem:[%s7 + $0x78] sm:$0xff]
    %v3678 = vld [vmem:[%s8] sm:$0x1]
    %v3680 = vperm.slane %v3678, 0
    %3682 = vmatpush.msra.mxu0 %v3677
    %3683 = vmatpush.msra.mxu0 %v3676
    %3684 = vmatpush.msra.mxu0 %v3675
    %3685 = vmatpush.msra.mxu0 %v3674
    %3686 = vmatpush.msra.mxu0 %v3673
    %3687 = vmatpush.msra.mxu0 %v3672
    %3688 = vmatpush.msra.mxu0 %v3671
    %3689 = vmatpush.msra.mxu0 %v3670
    %3690 = vmatpush.msra.mxu0 %v3669
    %3691 = vmatpush.msra.mxu0 %v3668
    %3692 = vmatpush.msra.mxu0 %v3667
    %3693 = vmatpush.msra.mxu0 %v3666
    %3694 = vmatpush.msra.mxu0 %v3665
    %3695 = vmatpush.msra.mxu0 %v3664
    %3696 = vmatpush.msra.mxu0 %v3663
    %3697 = vmatpush.msra.mxu0 %v3662
    %3698 = vmatmul.f32.gmra.mxu0 %v3661
    %v3699 = vpop.f32.mrf.mxu0
    %v3700 = vadd.f32 %v3680, %v3699
    %3701 = vdwg.mxu0
    %v3702 = vmax.f32 %v3700, 0.0
    %vm3703 = vcmask 519168
    %3704 = vst.msk [vmem:[#allocation8] sm:$0xf] %vm3703, %v3702
    // Predicated region
    $region46: #{tpu_custom_call.1} parent=1 // pred_check
      _
    $region47: #{tpu_custom_call.1} parent=1 // pred_check_branch
      %3706 = sbr.rel (0) target = $region49
    $region48: #{tpu_custom_call.1} parent=1 // pred_region
      %3708 = vsyncadd [#allocation5], 0
      %s3710 = sshll.u32 [#allocation8], 4
      %s3711 = int_to_ptr.vmem [resolvable:$true] %s3710
      %s3712 = sshll.u32 %s9, 4
      %s3713 = int_to_ptr.hbm [resolvable:$true] %s3712
      %3715 = dma.vmem_to_hbm [thread:$0]  %s3711, 64, %s3713, [#allocation5]
    $region49: #{tpu_custom_call.1} parent=1 // pred_fallthru
      _
    // Predicated region
    $region50: #{tpu_custom_call.1} parent=1 // pred_check
      _
    $region51: #{tpu_custom_call.1} parent=1 // pred_check_branch
      %3717 = sbr.rel (0) target = $region53
    $region52: #{tpu_custom_call.1} parent=1 // pred_region
      %3719 = dma.done [#allocation5], 64
    $region53: #{tpu_custom_call.1} parent=1 // pred_fallthru
      _
    %3720 = vsyncpa [#allocation4], 1
    %3721 = vsyncpa [#allocation7], 1
    %3722 = vsyncpa [#allocation5], 1

</llo_original>
